<compile_context>
chip_gen: v7x
topology: tpu7x:2x2x1
jax: 0.10.0
libtpu: 0.0.40
codegen_flags: <defaults>
</compile_context>

<pallas_src>
import functools
import math

import jax
import jax.numpy as jnp
from jax.experimental import pallas as pl
from jax.experimental.pallas import tpu as pltpu

EPS = 1e-6
NEG_INF = -1e30
MATMUL_DTYPE = jnp.bfloat16   # MXU operand dtype (f32 accumulation)


# ----------------------------- in-kernel helpers ----------------------------

def _ln_rows(x, a, b):
    """torch-style LayerNorm: unbiased std, divide by (std + eps). x: (M, D) f32."""
    d = x.shape[-1]
    mean = jnp.mean(x, axis=-1, keepdims=True)
    diff = x - mean
    var = jnp.sum(diff * diff, axis=-1, keepdims=True) * (1.0 / (d - 1))
    return a * diff / (jnp.sqrt(var) + EPS) + b


def _per_head_attention(q_all, k_all, v_all, mask_row, num_heads, mm_dtype):
    """q_all: (Sq, D) f32, k_all/v_all: (Sk, D) f32, mask_row: (1, Sk).
    Returns concatenated per-head context (Sq, D) in f32."""
    Sq, D = q_all.shape
    dk = D // num_heads
    scale = 1.0 / math.sqrt(dk)
    ctx = []
    for h in range(num_heads):
        sl = slice(h * dk, (h + 1) * dk)
        q = (q_all[:, sl] * scale).astype(mm_dtype)        # scale folded into Q
        k = k_all[:, sl].astype(mm_dtype)
        v = v_all[:, sl].astype(mm_dtype)
        # contract last dims directly: no explicit K transpose
        s = jax.lax.dot_general(q, k, (((1,), (1,)), ((), ())),
                                preferred_element_type=jnp.float32)   # (Sq, Sk)
        s = jnp.where(mask_row == 0, NEG_INF, s)           # masked_fill(mask==0,-1e30)
        s = s - jnp.max(s, axis=-1, keepdims=True)
        e = jnp.exp(s)
        p = e * pl.reciprocal(jnp.sum(e, axis=-1, keepdims=True), approx=True)
        ctx.append(jnp.dot(p.astype(mm_dtype), v,
                           preferred_element_type=jnp.float32))       # (Sq, dk)
    return jnp.concatenate(ctx, axis=-1)                   # (Sq, D)


# ------------------------------- fused kernels -------------------------------

def _self_attn_kernel(x_ref, m_ref, a_ref, b_ref, wqkv_ref, bqkv_ref,
                      wo_ref, bo_ref, o_ref, *, num_heads):
    """LN -> fused QKV proj -> per-head attention -> Wo proj -> +residual."""
    x = x_ref[0].astype(jnp.float32)                       # (S, D)
    D = x.shape[-1]
    h = _ln_rows(x, a_ref[...], b_ref[...])
    mm_dtype = wqkv_ref.dtype
    qkv = jnp.dot(h.astype(mm_dtype), wqkv_ref[...],
                  preferred_element_type=jnp.float32) + bqkv_ref[...]  # (S, 3D)
    q_all = qkv[:, 0 * D:1 * D]
    k_all = qkv[:, 1 * D:2 * D]
    v_all = qkv[:, 2 * D:3 * D]
    ctx = _per_head_attention(q_all, k_all, v_all, m_ref[0], num_heads, mm_dtype)
    out = jnp.dot(ctx.astype(mm_dtype), wo_ref[...],
                  preferred_element_type=jnp.float32) + bo_ref[...]
    o_ref[0] = (x + out).astype(o_ref.dtype)


def _cross_attn_kernel(x_ref, mem_ref, m_ref, a_ref, b_ref, wq_ref, bq_ref,
                       wkv_ref, bkv_ref, wo_ref, bo_ref, o_ref, *, num_heads):
    """LN(x) -> Q proj; memory -> fused KV proj; attention; Wo proj; +residual."""
    x = x_ref[0].astype(jnp.float32)                       # (Sq, D)
    D = x.shape[-1]
    h = _ln_rows(x, a_ref[...], b_ref[...])
    mm_dtype = wq_ref.dtype
    q_all = jnp.dot(h.astype(mm_dtype), wq_ref[...],
                    preferred_element_type=jnp.float32) + bq_ref[...]  # (Sq, D)
    mem = mem_ref[0].astype(mm_dtype)                      # (Sk, D)
    kv = jnp.dot(mem, wkv_ref[...],
                 preferred_element_type=jnp.float32) + bkv_ref[...]    # (Sk, 2D)
    k_all = kv[:, 0:D]
    v_all = kv[:, D:2 * D]
    ctx = _per_head_attention(q_all, k_all, v_all, m_ref[0], num_heads, mm_dtype)
    out = jnp.dot(ctx.astype(mm_dtype), wo_ref[...],
                  preferred_element_type=jnp.float32) + bo_ref[...]
    o_ref[0] = (x + out).astype(o_ref.dtype)


def _ff_kernel(x_ref, a_ref, b_ref, w1_ref, b1_ref, w2_ref, b2_ref, o_ref):
    """LN -> W1 + ReLU -> W2 -> +residual (rows-tiled)."""
    x = x_ref[...].astype(jnp.float32)                     # (TM, D)
    h = _ln_rows(x, a_ref[...], b_ref[...])
    mm_dtype = w1_ref.dtype
    u = jnp.dot(h.astype(mm_dtype), w1_ref[...],
                preferred_element_type=jnp.float32) + b1_ref[...]
    u = jnp.maximum(u, 0.0)
    y = jnp.dot(u.astype(mm_dtype), w2_ref[...],
                preferred_element_type=jnp.float32) + b2_ref[...]
    o_ref[...] = (x + y).astype(o_ref.dtype)


def _ln_kernel(x_ref, a_ref, b_ref, o_ref):
    x = x_ref[...].astype(jnp.float32)
    o_ref[...] = _ln_rows(x, a_ref[...], b_ref[...]).astype(o_ref.dtype)


# ------------------------------- host wrappers -------------------------------

def _row_tile(m):
    for t in (512, 256, 128):
        if m % t == 0:
            return t
    return m


def self_attn_sublayer(x, mask3, ln, p, num_heads):
    B, S, D = x.shape
    return pl.pallas_call(
        functools.partial(_self_attn_kernel, num_heads=num_heads),
        out_shape=jax.ShapeDtypeStruct((B, S, D), x.dtype),
        grid=(B,),
        in_specs=[
            pl.BlockSpec((1, S, D), lambda b: (b, 0, 0)),
            pl.BlockSpec((1, 1, S), lambda b: (b, 0, 0)),
            pl.BlockSpec((1, D), lambda b: (0, 0)),
            pl.BlockSpec((1, D), lambda b: (0, 0)),
            pl.BlockSpec((D, 3 * D), lambda b: (0, 0)),
            pl.BlockSpec((1, 3 * D), lambda b: (0, 0)),
            pl.BlockSpec((D, D), lambda b: (0, 0)),
            pl.BlockSpec((1, D), lambda b: (0, 0)),
        ],
        out_specs=pl.BlockSpec((1, S, D), lambda b: (b, 0, 0)),
        compiler_params=pltpu.CompilerParams(dimension_semantics=("parallel",)),
    )(x, mask3, ln["a"], ln["b"], p["wqkv"], p["bqkv"], p["wo"], p["bo"])


def cross_attn_sublayer(x, mem, mask3, ln, p, num_heads):
    B, Sq, D = x.shape
    Sk = mem.shape[1]
    return pl.pallas_call(
        functools.partial(_cross_attn_kernel, num_heads=num_heads),
        out_shape=jax.ShapeDtypeStruct((B, Sq, D), x.dtype),
        grid=(B,),
        in_specs=[
            pl.BlockSpec((1, Sq, D), lambda b: (b, 0, 0)),
            pl.BlockSpec((1, Sk, D), lambda b: (b, 0, 0)),
            pl.BlockSpec((1, 1, Sk), lambda b: (b, 0, 0)),
            pl.BlockSpec((1, D), lambda b: (0, 0)),
            pl.BlockSpec((1, D), lambda b: (0, 0)),
            pl.BlockSpec((D, D), lambda b: (0, 0)),
            pl.BlockSpec((1, D), lambda b: (0, 0)),
            pl.BlockSpec((D, 2 * D), lambda b: (0, 0)),
            pl.BlockSpec((1, 2 * D), lambda b: (0, 0)),
            pl.BlockSpec((D, D), lambda b: (0, 0)),
            pl.BlockSpec((1, D), lambda b: (0, 0)),
        ],
        out_specs=pl.BlockSpec((1, Sq, D), lambda b: (b, 0, 0)),
        compiler_params=pltpu.CompilerParams(dimension_semantics=("parallel",)),
    )(x, mem, mask3, ln["a"], ln["b"], p["wq"], p["bq"],
      p["wkv"], p["bkv"], p["wo"], p["bo"])


def ff_sublayer(x, ln, p):
    B, S, D = x.shape
    M = B * S
    TM = _row_tile(M)
    Dff = p["w1"].shape[1]
    y = pl.pallas_call(
        _ff_kernel,
        out_shape=jax.ShapeDtypeStruct((M, D), x.dtype),
        grid=(M // TM,),
        in_specs=[
            pl.BlockSpec((TM, D), lambda i: (i, 0)),
            pl.BlockSpec((1, D), lambda i: (0, 0)),
            pl.BlockSpec((1, D), lambda i: (0, 0)),
            pl.BlockSpec((D, Dff), lambda i: (0, 0)),
            pl.BlockSpec((1, Dff), lambda i: (0, 0)),
            pl.BlockSpec((Dff, D), lambda i: (0, 0)),
            pl.BlockSpec((1, D), lambda i: (0, 0)),
        ],
        out_specs=pl.BlockSpec((TM, D), lambda i: (i, 0)),
        compiler_params=pltpu.CompilerParams(dimension_semantics=("parallel",)),
    )(x.reshape(M, D), ln["a"], ln["b"], p["w1"], p["b1"], p["w2"], p["b2"])
    return y.reshape(B, S, D)


def layernorm(x, ln):
    B, S, D = x.shape
    M = B * S
    TM = _row_tile(M)
    y = pl.pallas_call(
        _ln_kernel,
        out_shape=jax.ShapeDtypeStruct((M, D), x.dtype),
        grid=(M // TM,),
        in_specs=[
            pl.BlockSpec((TM, D), lambda i: (i, 0)),
            pl.BlockSpec((1, D), lambda i: (0, 0)),
            pl.BlockSpec((1, D), lambda i: (0, 0)),
        ],
        out_specs=pl.BlockSpec((TM, D), lambda i: (i, 0)),
        compiler_params=pltpu.CompilerParams(dimension_semantics=("parallel",)),
    )(x.reshape(M, D), ln["a"], ln["b"])
    return y.reshape(B, S, D)


def transformer_forward(kp, src, src_mask, tgt, tgt_mask, num_heads):
    # mask.unsqueeze(1).unsqueeze(1) in torch -> per-batch key mask.
    B, Ss = src_mask.shape
    St = tgt_mask.shape[1]
    src_mask3 = src_mask.reshape(B, 1, Ss)
    tgt_mask3 = tgt_mask.reshape(B, 1, St)

    x = src
    for lp in kp["encoder"]["layers"]:
        x = self_attn_sublayer(x, src_mask3, lp["ln1"], lp["attn"], num_heads)
        x = ff_sublayer(x, lp["ln2"], lp["ff"])
    memory = layernorm(x, kp["encoder"]["norm"])

    y = tgt
    for lp in kp["decoder"]["layers"]:
        y = self_attn_sublayer(y, tgt_mask3, lp["ln0"], lp["self_attn"], num_heads)
        y = cross_attn_sublayer(y, memory, src_mask3, lp["ln1"], lp["src_attn"],
                                num_heads)
        y = ff_sublayer(y, lp["ln2"], lp["ff"])
    return layernorm(y, kp["decoder"]["norm"])


# --------------------------- parameter init / prep ---------------------------

def init_linear(key, din, dout):
    k1, k2 = jax.random.split(key)
    bound = 1.0 / math.sqrt(din)
    w = jax.random.uniform(k1, (din, dout), jnp.float32, -bound, bound)
    b = jax.random.uniform(k2, (dout,), jnp.float32, -bound, bound)
    return w, b


def init_mha(key, d_model):
    ks = jax.random.split(key, 4)
    wq, bq = init_linear(ks[0], d_model, d_model)
    wk, bk = init_linear(ks[1], d_model, d_model)
    wv, bv = init_linear(ks[2], d_model, d_model)
    wo, bo = init_linear(ks[3], d_model, d_model)
    return dict(wq=wq, bq=bq, wk=wk, bk=bk, wv=wv, bv=bv, wo=wo, bo=bo)


def init_ff(key, d_model, d_ff):
    k1, k2 = jax.random.split(key)
    w1, b1 = init_linear(k1, d_model, d_ff)
    w2, b2 = init_linear(k2, d_ff, d_model)
    return dict(w1=w1, b1=b1, w2=w2, b2=b2)


def init_ln(d):
    return dict(a=jnp.ones((d,), jnp.float32), b=jnp.zeros((d,), jnp.float32))


def init_transformer(key, d_model, d_ff, num_heads, n_enc, n_dec):
    keys = jax.random.split(key, n_enc + n_dec)
    enc_layers = []
    for i in range(n_enc):
        k1, k2 = jax.random.split(keys[i])
        enc_layers.append(dict(self_attn=init_mha(k1, d_model),
                               ff=init_ff(k2, d_model, d_ff),
                               norm1=init_ln(d_model), norm2=init_ln(d_model)))
    dec_layers = []
    for i in range(n_dec):
        k1, k2, k3 = jax.random.split(keys[n_enc + i], 3)
        dec_layers.append(dict(self_attn=init_mha(k1, d_model),
                               src_attn=init_mha(k2, d_model),
                               ff=init_ff(k3, d_model, d_ff),
                               norm0=init_ln(d_model), norm1=init_ln(d_model),
                               norm2=init_ln(d_model)))
    return dict(encoder=dict(layers=enc_layers, norm=init_ln(d_model)),
                decoder=dict(layers=dec_layers, norm=init_ln(d_model)))


def prepare_kernel_params(params, compute_dtype=MATMUL_DTYPE):
    """One-time prep: fuse QKV / KV weights, cast matmul weights to bf16,
    reshape biases / LN params to (1, N) f32 rows."""
    def row(v):
        return v.reshape(1, -1).astype(jnp.float32)

    def prep_ln(p):
        return dict(a=row(p["a"]), b=row(p["b"]))

    def prep_self(p):
        return dict(
            wqkv=jnp.concatenate([p["wq"], p["wk"], p["wv"]], axis=1).astype(compute_dtype),
            bqkv=row(jnp.concatenate([p["bq"], p["bk"], p["bv"]], axis=0)),
            wo=p["wo"].astype(compute_dtype), bo=row(p["bo"]))

    def prep_cross(p):
        return dict(
            wq=p["wq"].astype(compute_dtype), bq=row(p["bq"]),
            wkv=jnp.concatenate([p["wk"], p["wv"]], axis=1).astype(compute_dtype),
            bkv=row(jnp.concatenate([p["bk"], p["bv"]], axis=0)),
            wo=p["wo"].astype(compute_dtype), bo=row(p["bo"]))

    def prep_ff(p):
        return dict(w1=p["w1"].astype(compute_dtype), b1=row(p["b1"]),
                    w2=p["w2"].astype(compute_dtype), b2=row(p["b2"]))

    enc_layers = [dict(ln1=prep_ln(lp["norm1"]), attn=prep_self(lp["self_attn"]),
                       ln2=prep_ln(lp["norm2"]), ff=prep_ff(lp["ff"]))
                  for lp in params["encoder"]["layers"]]
    dec_layers = [dict(ln0=prep_ln(lp["norm0"]), self_attn=prep_self(lp["self_attn"]),
                       ln1=prep_ln(lp["norm1"]), src_attn=prep_cross(lp["src_attn"]),
                       ln2=prep_ln(lp["norm2"]), ff=prep_ff(lp["ff"]))
                  for lp in params["decoder"]["layers"]]
    return dict(encoder=dict(layers=enc_layers, norm=prep_ln(params["encoder"]["norm"])),
                decoder=dict(layers=dec_layers, norm=prep_ln(params["decoder"]["norm"])))


# ------------------------------ plain-JAX reference --------------------------

def _ref_ln(x, p):
    mean = x.mean(-1, keepdims=True)
    std = jnp.sqrt(((x - mean) ** 2).sum(-1, keepdims=True) / (x.shape[-1] - 1))
    return p["a"] * (x - mean) / (std + EPS) + p["b"]


def _ref_mha(p, xq, xk, xv, mask, num_heads):
    B, Sq, D = xq.shape
    Sk = xk.shape[1]
    dk = D // num_heads
    q = (xq @ p["wq"] + p["bq"]).reshape(B, Sq, num_heads, dk).transpose(0, 2, 1, 3)
    k = (xk @ p["wk"] + p["bk"]).reshape(B, Sk, num_heads, dk).transpose(0, 2, 1, 3)
    v = (xv @ p["wv"] + p["bv"]).reshape(B, Sk, num_heads, dk).transpose(0, 2, 1, 3)
    s = jnp.einsum("bhqd,bhkd->bhqk", q, k) / math.sqrt(dk)
    s = jnp.where(mask[:, None, None, :] == 0, NEG_INF, s)
    a = jax.nn.softmax(s, axis=-1)
    o = jnp.einsum("bhqk,bhkd->bhqd", a, v).transpose(0, 2, 1, 3).reshape(B, Sq, D)
    return o @ p["wo"] + p["bo"]


def _ref_ff(p, x):
    return jnp.maximum(x @ p["w1"] + p["b1"], 0.0) @ p["w2"] + p["b2"]


def reference_forward(params, src, src_mask, tgt, tgt_mask, num_heads):
    x = src
    for lp in params["encoder"]["layers"]:
        h = _ref_ln(x, lp["norm1"]); x = x + _ref_mha(lp["self_attn"], h, h, h, src_mask, num_heads)
        h = _ref_ln(x, lp["norm2"]); x = x + _ref_ff(lp["ff"], h)
    memory = _ref_ln(x, params["encoder"]["norm"])
    y = tgt
    for lp in params["decoder"]["layers"]:
        h = _ref_ln(y, lp["norm0"]); y = y + _ref_mha(lp["self_attn"], h, h, h, tgt_mask, num_heads)
        h = _ref_ln(y, lp["norm1"]); y = y + _ref_mha(lp["src_attn"], h, memory, memory, src_mask, num_heads)
        h = _ref_ln(y, lp["norm2"]); y = y + _ref_ff(lp["ff"], h)
    return _ref_ln(y, params["decoder"]["norm"])


# ----------------------------------- main ------------------------------------

if __name__ == "__main__":
    B, S_SRC, S_TGT = 2, 8, 8
    D_MODEL, D_FF, NUM_HEADS = 32, 64, 4
    N_ENC, N_DEC = 2, 2

    key = jax.random.PRNGKey(0)
    k_params, k_src, k_tgt = jax.random.split(key, 3)

    params = init_transformer(k_params, D_MODEL, D_FF, NUM_HEADS, N_ENC, N_DEC)
    kparams = prepare_kernel_params(params, MATMUL_DTYPE)

    src = jax.random.normal(k_src, (B, S_SRC, D_MODEL), jnp.float32)
    tgt = jax.random.normal(k_tgt, (B, S_TGT, D_MODEL), jnp.float32)
    src_mask = jnp.ones((B, S_SRC), jnp.float32).at[1, -2:].set(0.0)
    tgt_mask = jnp.ones((B, S_TGT), jnp.float32).at[0, -1:].set(0.0)

    fwd = jax.jit(functools.partial(transformer_forward, num_heads=NUM_HEADS))
    out = jax.block_until_ready(fwd(kparams, src, src_mask, tgt, tgt_mask))

    assert out.shape == (B, S_TGT, D_MODEL) and out.dtype == jnp.float32
    assert bool(jnp.all(jnp.isfinite(out)))

    # f32 reference; tolerance covers bf16 MXU operands (f32 accumulation,
    # f32 layernorm/softmax stats) — observed deviation is ~1e-2.
    ref = reference_forward(params, src, src_mask, tgt, tgt_mask, NUM_HEADS)
    max_err = float(jnp.max(jnp.abs(out - ref)))
    assert bool(jnp.allclose(out, ref, rtol=3e-2, atol=3e-2)), \
        f"mismatch vs reference (max abs err {max_err:.3e})"

    print("KERNEL_OK")
</pallas_src>

<mosaic_0001>
module attributes {stable_mosaic.version = 11 : i64} {
  func.func @_ln_kernel(%arg0: i32, %arg1: memref<16x32xf32, #tpu.memory_space<vmem>>, %arg2: memref<1x32xf32, #tpu.memory_space<vmem>>, %arg3: memref<1x32xf32, #tpu.memory_space<vmem>>, %arg4: memref<16x32xf32, #tpu.memory_space<vmem>>) attributes {dimension_semantics = [#tpu.dimension_semantics<parallel>], iteration_bounds = array<i64: 1>, scalar_prefetch = 0 : i64, scratch_operands = 0 : i64, tpu.core_type = #tpu.core_type<tc>, window_params = [{transform_indices = @transform_0, window_bounds = array<i64: 16, 32>}, {pipeline_mode = #tpu.pipeline_mode<synchronous>, transform_indices = @transform_1, window_bounds = array<i64: 1, 32>}, {pipeline_mode = #tpu.pipeline_mode<synchronous>, transform_indices = @transform_2, window_bounds = array<i64: 1, 32>}, {transform_indices = @transform_3, window_bounds = array<i64: 16, 32>}]} {
    %c0 = arith.constant 0 : index
    %c0_0 = arith.constant 0 : index
    %0 = vector.load %arg1[%c0, %c0_0] : memref<16x32xf32, #tpu.memory_space<vmem>>, vector<16x32xf32>
    %c0_1 = arith.constant 0 : index
    %c0_2 = arith.constant 0 : index
    %1 = vector.load %arg2[%c0_1, %c0_2] : memref<1x32xf32, #tpu.memory_space<vmem>>, vector<1x32xf32>
    %c0_3 = arith.constant 0 : index
    %c0_4 = arith.constant 0 : index
    %2 = vector.load %arg3[%c0_3, %c0_4] : memref<1x32xf32, #tpu.memory_space<vmem>>, vector<1x32xf32>
    %cst = arith.constant dense<0.000000e+00> : vector<16xf32>
    %3 = vector.multi_reduction <add>, %0, %cst [1] : vector<16x32xf32> to vector<16xf32>
    %4 = vector.shape_cast %3 : vector<16xf32> to vector<16x1xf32>
    %cst_5 = arith.constant 3.200000e+01 : f32
    %5 = vector.broadcast %cst_5 : f32 to vector<16x1xf32>
    %6 = arith.divf %4, %5 : vector<16x1xf32>
    %7 = vector.broadcast %6 : vector<16x1xf32> to vector<16x32xf32>
    %8 = arith.subf %0, %7 : vector<16x32xf32>
    %9 = arith.mulf %8, %8 : vector<16x32xf32>
    %cst_6 = arith.constant dense<0.000000e+00> : vector<16xf32>
    %10 = vector.multi_reduction <add>, %9, %cst_6 [1] : vector<16x32xf32> to vector<16xf32>
    %11 = vector.shape_cast %10 : vector<16xf32> to vector<16x1xf32>
    %cst_7 = arith.constant 0.0322580636 : f32
    %12 = vector.broadcast %cst_7 : f32 to vector<16x1xf32>
    %13 = arith.mulf %11, %12 : vector<16x1xf32>
    %14 = vector.broadcast %1 : vector<1x32xf32> to vector<16x32xf32>
    %15 = arith.mulf %14, %8 : vector<16x32xf32>
    %16 = math.sqrt %13 : vector<16x1xf32>
    %cst_8 = arith.constant 9.99999997E-7 : f32
    %17 = vector.broadcast %cst_8 : f32 to vector<16x1xf32>
    %18 = arith.addf %16, %17 : vector<16x1xf32>
    %19 = vector.broadcast %18 : vector<16x1xf32> to vector<16x32xf32>
    %20 = arith.divf %15, %19 : vector<16x32xf32>
    %21 = vector.broadcast %2 : vector<1x32xf32> to vector<16x32xf32>
    %22 = arith.addf %20, %21 : vector<16x32xf32>
    %c0_9 = arith.constant 0 : index
    %c0_10 = arith.constant 0 : index
    %23 = vector.load %arg4[%c0_9, %c0_10] : memref<16x32xf32, #tpu.memory_space<vmem>>, vector<16x32xf32>
    tpu.vector_store %arg4[%c0_9, %c0_10], %22 {strides = array<i32>} : memref<16x32xf32, #tpu.memory_space<vmem>>, vector<16x32xf32>,
    return
  }
  func.func @transform_0(%arg0: i32) -> (i32, i32) {
    %c0_i32 = arith.constant 0 : i32
    %c0_i32_0 = arith.constant 0 : i32
    return %arg0, %c0_i32 : i32, i32
  }
  func.func @transform_1(%arg0: i32) -> (i32, i32) {
    %c0_i32 = arith.constant 0 : i32
    %c0_i32_0 = arith.constant 0 : i32
    %c0_i32_1 = arith.constant 0 : i32
    return %c0_i32, %c0_i32_0 : i32, i32
  }
  func.func @transform_2(%arg0: i32) -> (i32, i32) {
    %c0_i32 = arith.constant 0 : i32
    %c0_i32_0 = arith.constant 0 : i32
    %c0_i32_1 = arith.constant 0 : i32
    return %c0_i32, %c0_i32_0 : i32, i32
  }
  func.func @transform_3(%arg0: i32) -> (i32, i32) {
    %c0_i32 = arith.constant 0 : i32
    %c0_i32_0 = arith.constant 0 : i32
    return %arg0, %c0_i32 : i32, i32
  }
}

module attributes {stable_mosaic.version = 11 : i64} {
  func.func @_self_attn_kernel(%arg0: i32, %arg1: memref<1x8x32xf32, #tpu.memory_space<vmem>>, %arg2: memref<1x1x8xf32, #tpu.memory_space<vmem>>, %arg3: memref<1x32xf32, #tpu.memory_space<vmem>>, %arg4: memref<1x32xf32, #tpu.memory_space<vmem>>, %arg5: memref<32x96xbf16, #tpu.memory_space<vmem>>, %arg6: memref<1x96xf32, #tpu.memory_space<vmem>>, %arg7: memref<32x32xbf16, #tpu.memory_space<vmem>>, %arg8: memref<1x32xf32, #tpu.memory_space<vmem>>, %arg9: memref<1x8x32xf32, #tpu.memory_space<vmem>>) attributes {dimension_semantics = [#tpu.dimension_semantics<parallel>], iteration_bounds = array<i64: 2>, scalar_prefetch = 0 : i64, scratch_operands = 0 : i64, tpu.core_type = #tpu.core_type<tc>, window_params = [{transform_indices = @transform_0, window_bounds = array<i64: 1, 8, 32>}, {transform_indices = @transform_1, window_bounds = array<i64: 1, 1, 8>}, {pipeline_mode = #tpu.pipeline_mode<synchronous>, transform_indices = @transform_2, window_bounds = array<i64: 1, 32>}, {pipeline_mode = #tpu.pipeline_mode<synchronous>, transform_indices = @transform_3, window_bounds = array<i64: 1, 32>}, {pipeline_mode = #tpu.pipeline_mode<synchronous>, transform_indices = @transform_4, window_bounds = array<i64: 32, 96>}, {pipeline_mode = #tpu.pipeline_mode<synchronous>, transform_indices = @transform_5, window_bounds = array<i64: 1, 96>}, {pipeline_mode = #tpu.pipeline_mode<synchronous>, transform_indices = @transform_6, window_bounds = array<i64: 32, 32>}, {pipeline_mode = #tpu.pipeline_mode<synchronous>, transform_indices = @transform_7, window_bounds = array<i64: 1, 32>}, {transform_indices = @transform_8, window_bounds = array<i64: 1, 8, 32>}]} {
    %c0 = arith.constant 0 : index
    %c0_0 = arith.constant 0 : index
    %c0_1 = arith.constant 0 : index
    %0 = vector.load %arg1[%c0, %c0_0, %c0_1] : memref<1x8x32xf32, #tpu.memory_space<vmem>>, vector<1x8x32xf32>
    %1 = vector.shape_cast %0 : vector<1x8x32xf32> to vector<8x32xf32>
    %c0_2 = arith.constant 0 : index
    %c0_3 = arith.constant 0 : index
    %2 = vector.load %arg3[%c0_2, %c0_3] : memref<1x32xf32, #tpu.memory_space<vmem>>, vector<1x32xf32>
    %c0_4 = arith.constant 0 : index
    %c0_5 = arith.constant 0 : index
    %3 = vector.load %arg4[%c0_4, %c0_5] : memref<1x32xf32, #tpu.memory_space<vmem>>, vector<1x32xf32>
    %cst = arith.constant dense<0.000000e+00> : vector<8xf32>
    %4 = vector.multi_reduction <add>, %1, %cst [1] : vector<8x32xf32> to vector<8xf32>
    %5 = vector.shape_cast %4 : vector<8xf32> to vector<8x1xf32>
    %cst_6 = arith.constant 3.200000e+01 : f32
    %6 = vector.broadcast %cst_6 : f32 to vector<8x1xf32>
    %7 = arith.divf %5, %6 : vector<8x1xf32>
    %8 = vector.broadcast %7 : vector<8x1xf32> to vector<8x32xf32>
    %9 = arith.subf %1, %8 : vector<8x32xf32>
    %10 = arith.mulf %9, %9 : vector<8x32xf32>
    %cst_7 = arith.constant dense<0.000000e+00> : vector<8xf32>
    %11 = vector.multi_reduction <add>, %10, %cst_7 [1] : vector<8x32xf32> to vector<8xf32>
    %12 = vector.shape_cast %11 : vector<8xf32> to vector<8x1xf32>
    %cst_8 = arith.constant 0.0322580636 : f32
    %13 = vector.broadcast %cst_8 : f32 to vector<8x1xf32>
    %14 = arith.mulf %12, %13 : vector<8x1xf32>
    %15 = vector.broadcast %2 : vector<1x32xf32> to vector<8x32xf32>
    %16 = arith.mulf %15, %9 : vector<8x32xf32>
    %17 = math.sqrt %14 : vector<8x1xf32>
    %cst_9 = arith.constant 9.99999997E-7 : f32
    %18 = vector.broadcast %cst_9 : f32 to vector<8x1xf32>
    %19 = arith.addf %17, %18 : vector<8x1xf32>
    %20 = vector.broadcast %19 : vector<8x1xf32> to vector<8x32xf32>
    %21 = arith.divf %16, %20 : vector<8x32xf32>
    %22 = vector.broadcast %3 : vector<1x32xf32> to vector<8x32xf32>
    %23 = arith.addf %21, %22 : vector<8x32xf32>
    %24 = arith.truncf %23 : vector<8x32xf32> to vector<8x32xbf16>
    %c0_10 = arith.constant 0 : index
    %c0_11 = arith.constant 0 : index
    %25 = vector.load %arg5[%c0_10, %c0_11] : memref<32x96xbf16, #tpu.memory_space<vmem>>, vector<32x96xbf16>
    %cst_12 = arith.constant dense<0.000000e+00> : vector<8x96xf32>
    %26 = tpu.matmul %24, %25, %cst_12 {dimension_numbers = #tpu.dot_dimension_numbers<[1], [0], [0], [1], [0, 0, 1, 1], [], []>} : vector<8x32xbf16>, vector<32x96xbf16>, vector<8x96xf32> -> vector<8x96xf32>
    %c0_13 = arith.constant 0 : index
    %c0_14 = arith.constant 0 : index
    %27 = vector.load %arg6[%c0_13, %c0_14] : memref<1x96xf32, #tpu.memory_space<vmem>>, vector<1x96xf32>
    %28 = vector.broadcast %27 : vector<1x96xf32> to vector<8x96xf32>
    %29 = arith.addf %26, %28 : vector<8x96xf32>
    %30 = vector.extract_strided_slice %29 {offsets = [0, 0], sizes = [8, 32], strides = [1, 1]} : vector<8x96xf32> to vector<8x32xf32>
    %31 = vector.extract_strided_slice %29 {offsets = [0, 32], sizes = [8, 32], strides = [1, 1]} : vector<8x96xf32> to vector<8x32xf32>
    %32 = vector.extract_strided_slice %29 {offsets = [0, 64], sizes = [8, 32], strides = [1, 1]} : vector<8x96xf32> to vector<8x32xf32>
    %c0_15 = arith.constant 0 : index
    %c0_16 = arith.constant 0 : index
    %c0_17 = arith.constant 0 : index
    %33 = vector.load %arg2[%c0_15, %c0_16, %c0_17] : memref<1x1x8xf32, #tpu.memory_space<vmem>>, vector<1x1x8xf32>
    %34 = vector.shape_cast %33 : vector<1x1x8xf32> to vector<1x8xf32>
    %35 = vector.extract_strided_slice %30 {offsets = [0, 0], sizes = [8, 8], strides = [1, 1]} : vector<8x32xf32> to vector<8x8xf32>
    %cst_18 = arith.constant 0.353553385 : f32
    %36 = vector.broadcast %cst_18 : f32 to vector<8x8xf32>
    %37 = arith.mulf %35, %36 : vector<8x8xf32>
    %38 = arith.truncf %37 : vector<8x8xf32> to vector<8x8xbf16>
    %39 = vector.extract_strided_slice %31 {offsets = [0, 0], sizes = [8, 8], strides = [1, 1]} : vector<8x32xf32> to vector<8x8xf32>
    %40 = arith.truncf %39 : vector<8x8xf32> to vector<8x8xbf16>
    %41 = vector.extract_strided_slice %32 {offsets = [0, 0], sizes = [8, 8], strides = [1, 1]} : vector<8x32xf32> to vector<8x8xf32>
    %42 = arith.truncf %41 : vector<8x8xf32> to vector<8x8xbf16>
    %cst_19 = arith.constant dense<0.000000e+00> : vector<8x8xf32>
    %43 = tpu.matmul %38, %40, %cst_19 {dimension_numbers = #tpu.dot_dimension_numbers<[1], [1], [0], [0], [0, 0, 1, 0], [], []>} : vector<8x8xbf16>, vector<8x8xbf16>, vector<8x8xf32> -> vector<8x8xf32>
    %cst_20 = arith.constant 0.000000e+00 : f32
    %44 = vector.broadcast %cst_20 : f32 to vector<1x8xf32>
    %45 = arith.cmpf oeq, %34, %44 : vector<1x8xf32>
    %cst_21 = arith.constant -1.000000e+30 : f32
    %46 = vector.shape_cast %45 : vector<1x8xi1> to vector<1x8xi1>
    %47 = vector.broadcast %46 : vector<1x8xi1> to vector<8x8xi1>
    %48 = vector.broadcast %cst_21 : f32 to vector<8x8xf32>
    %49 = arith.select %47, %48, %43 : vector<8x8xi1>, vector<8x8xf32>
    %cst_22 = arith.constant dense<0xFF800000> : vector<8xf32>
    %50 = vector.multi_reduction <maximumf>, %49, %cst_22 [1] : vector<8x8xf32> to vector<8xf32>
    %51 = vector.shape_cast %50 : vector<8xf32> to vector<8x1xf32>
    %52 = vector.broadcast %51 : vector<8x1xf32> to vector<8x8xf32>
    %53 = arith.subf %49, %52 : vector<8x8xf32>
    %54 = math.exp %53 : vector<8x8xf32>
    %cst_23 = arith.constant dense<0.000000e+00> : vector<8xf32>
    %55 = vector.multi_reduction <add>, %54, %cst_23 [1] : vector<8x8xf32> to vector<8xf32>
    %56 = vector.shape_cast %55 : vector<8xf32> to vector<8x1xf32>
    %57 = tpu.reciprocal %56 {approx = true} : vector<8x1xf32> -> vector<8x1xf32>
    %58 = vector.broadcast %57 : vector<8x1xf32> to vector<8x8xf32>
    %59 = arith.mulf %54, %58 : vector<8x8xf32>
    %60 = arith.truncf %59 : vector<8x8xf32> to vector<8x8xbf16>
    %cst_24 = arith.constant dense<0.000000e+00> : vector<8x8xf32>
    %61 = tpu.matmul %60, %42, %cst_24 {dimension_numbers = #tpu.dot_dimension_numbers<[1], [0], [0], [1], [0, 0, 1, 1], [], []>} : vector<8x8xbf16>, vector<8x8xbf16>, vector<8x8xf32> -> vector<8x8xf32>
    %62 = vector.extract_strided_slice %30 {offsets = [0, 8], sizes = [8, 8], strides = [1, 1]} : vector<8x32xf32> to vector<8x8xf32>
    %cst_25 = arith.constant 0.353553385 : f32
    %63 = vector.broadcast %cst_25 : f32 to vector<8x8xf32>
    %64 = arith.mulf %62, %63 : vector<8x8xf32>
    %65 = arith.truncf %64 : vector<8x8xf32> to vector<8x8xbf16>
    %66 = vector.extract_strided_slice %31 {offsets = [0, 8], sizes = [8, 8], strides = [1, 1]} : vector<8x32xf32> to vector<8x8xf32>
    %67 = arith.truncf %66 : vector<8x8xf32> to vector<8x8xbf16>
    %68 = vector.extract_strided_slice %32 {offsets = [0, 8], sizes = [8, 8], strides = [1, 1]} : vector<8x32xf32> to vector<8x8xf32>
    %69 = arith.truncf %68 : vector<8x8xf32> to vector<8x8xbf16>
    %cst_26 = arith.constant dense<0.000000e+00> : vector<8x8xf32>
    %70 = tpu.matmul %65, %67, %cst_26 {dimension_numbers = #tpu.dot_dimension_numbers<[1], [1], [0], [0], [0, 0, 1, 0], [], []>} : vector<8x8xbf16>, vector<8x8xbf16>, vector<8x8xf32> -> vector<8x8xf32>
    %cst_27 = arith.constant 0.000000e+00 : f32
    %71 = vector.broadcast %cst_27 : f32 to vector<1x8xf32>
    %72 = arith.cmpf oeq, %34, %71 : vector<1x8xf32>
    %cst_28 = arith.constant -1.000000e+30 : f32
    %73 = vector.shape_cast %72 : vector<1x8xi1> to vector<1x8xi1>
    %74 = vector.broadcast %73 : vector<1x8xi1> to vector<8x8xi1>
    %75 = vector.broadcast %cst_28 : f32 to vector<8x8xf32>
    %76 = arith.select %74, %75, %70 : vector<8x8xi1>, vector<8x8xf32>
    %cst_29 = arith.constant dense<0xFF800000> : vector<8xf32>
    %77 = vector.multi_reduction <maximumf>, %76, %cst_29 [1] : vector<8x8xf32> to vector<8xf32>
    %78 = vector.shape_cast %77 : vector<8xf32> to vector<8x1xf32>
    %79 = vector.broadcast %78 : vector<8x1xf32> to vector<8x8xf32>
    %80 = arith.subf %76, %79 : vector<8x8xf32>
    %81 = math.exp %80 : vector<8x8xf32>
    %cst_30 = arith.constant dense<0.000000e+00> : vector<8xf32>
    %82 = vector.multi_reduction <add>, %81, %cst_30 [1] : vector<8x8xf32> to vector<8xf32>
    %83 = vector.shape_cast %82 : vector<8xf32> to vector<8x1xf32>
    %84 = tpu.reciprocal %83 {approx = true} : vector<8x1xf32> -> vector<8x1xf32>
    %85 = vector.broadcast %84 : vector<8x1xf32> to vector<8x8xf32>
    %86 = arith.mulf %81, %85 : vector<8x8xf32>
    %87 = arith.truncf %86 : vector<8x8xf32> to vector<8x8xbf16>
    %cst_31 = arith.constant dense<0.000000e+00> : vector<8x8xf32>
    %88 = tpu.matmul %87, %69, %cst_31 {dimension_numbers = #tpu.dot_dimension_numbers<[1], [0], [0], [1], [0, 0, 1, 1], [], []>} : vector<8x8xbf16>, vector<8x8xbf16>, vector<8x8xf32> -> vector<8x8xf32>
    %89 = vector.extract_strided_slice %30 {offsets = [0, 16], sizes = [8, 8], strides = [1, 1]} : vector<8x32xf32> to vector<8x8xf32>
    %cst_32 = arith.constant 0.353553385 : f32
    %90 = vector.broadcast %cst_32 : f32 to vector<8x8xf32>
    %91 = arith.mulf %89, %90 : vector<8x8xf32>
    %92 = arith.truncf %91 : vector<8x8xf32> to vector<8x8xbf16>
    %93 = vector.extract_strided_slice %31 {offsets = [0, 16], sizes = [8, 8], strides = [1, 1]} : vector<8x32xf32> to vector<8x8xf32>
    %94 = arith.truncf %93 : vector<8x8xf32> to vector<8x8xbf16>
    %95 = vector.extract_strided_slice %32 {offsets = [0, 16], sizes = [8, 8], strides = [1, 1]} : vector<8x32xf32> to vector<8x8xf32>
    %96 = arith.truncf %95 : vector<8x8xf32> to vector<8x8xbf16>
    %cst_33 = arith.constant dense<0.000000e+00> : vector<8x8xf32>
    %97 = tpu.matmul %92, %94, %cst_33 {dimension_numbers = #tpu.dot_dimension_numbers<[1], [1], [0], [0], [0, 0, 1, 0], [], []>} : vector<8x8xbf16>, vector<8x8xbf16>, vector<8x8xf32> -> vector<8x8xf32>
    %cst_34 = arith.constant 0.000000e+00 : f32
    %98 = vector.broadcast %cst_34 : f32 to vector<1x8xf32>
    %99 = arith.cmpf oeq, %34, %98 : vector<1x8xf32>
    %cst_35 = arith.constant -1.000000e+30 : f32
    %100 = vector.shape_cast %99 : vector<1x8xi1> to vector<1x8xi1>
    %101 = vector.broadcast %100 : vector<1x8xi1> to vector<8x8xi1>
    %102 = vector.broadcast %cst_35 : f32 to vector<8x8xf32>
    %103 = arith.select %101, %102, %97 : vector<8x8xi1>, vector<8x8xf32>
    %cst_36 = arith.constant dense<0xFF800000> : vector<8xf32>
    %104 = vector.multi_reduction <maximumf>, %103, %cst_36 [1] : vector<8x8xf32> to vector<8xf32>
    %105 = vector.shape_cast %104 : vector<8xf32> to vector<8x1xf32>
    %106 = vector.broadcast %105 : vector<8x1xf32> to vector<8x8xf32>
    %107 = arith.subf %103, %106 : vector<8x8xf32>
    %108 = math.exp %107 : vector<8x8xf32>
    %cst_37 = arith.constant dense<0.000000e+00> : vector<8xf32>
    %109 = vector.multi_reduction <add>, %108, %cst_37 [1] : vector<8x8xf32> to vector<8xf32>
    %110 = vector.shape_cast %109 : vector<8xf32> to vector<8x1xf32>
    %111 = tpu.reciprocal %110 {approx = true} : vector<8x1xf32> -> vector<8x1xf32>
    %112 = vector.broadcast %111 : vector<8x1xf32> to vector<8x8xf32>
    %113 = arith.mulf %108, %112 : vector<8x8xf32>
    %114 = arith.truncf %113 : vector<8x8xf32> to vector<8x8xbf16>
    %cst_38 = arith.constant dense<0.000000e+00> : vector<8x8xf32>
    %115 = tpu.matmul %114, %96, %cst_38 {dimension_numbers = #tpu.dot_dimension_numbers<[1], [0], [0], [1], [0, 0, 1, 1], [], []>} : vector<8x8xbf16>, vector<8x8xbf16>, vector<8x8xf32> -> vector<8x8xf32>
    %116 = vector.extract_strided_slice %30 {offsets = [0, 24], sizes = [8, 8], strides = [1, 1]} : vector<8x32xf32> to vector<8x8xf32>
    %cst_39 = arith.constant 0.353553385 : f32
    %117 = vector.broadcast %cst_39 : f32 to vector<8x8xf32>
    %118 = arith.mulf %116, %117 : vector<8x8xf32>
    %119 = arith.truncf %118 : vector<8x8xf32> to vector<8x8xbf16>
    %120 = vector.extract_strided_slice %31 {offsets = [0, 24], sizes = [8, 8], strides = [1, 1]} : vector<8x32xf32> to vector<8x8xf32>
    %121 = arith.truncf %120 : vector<8x8xf32> to vector<8x8xbf16>
    %122 = vector.extract_strided_slice %32 {offsets = [0, 24], sizes = [8, 8], strides = [1, 1]} : vector<8x32xf32> to vector<8x8xf32>
    %123 = arith.truncf %122 : vector<8x8xf32> to vector<8x8xbf16>
    %cst_40 = arith.constant dense<0.000000e+00> : vector<8x8xf32>
    %124 = tpu.matmul %119, %121, %cst_40 {dimension_numbers = #tpu.dot_dimension_numbers<[1], [1], [0], [0], [0, 0, 1, 0], [], []>} : vector<8x8xbf16>, vector<8x8xbf16>, vector<8x8xf32> -> vector<8x8xf32>
    %cst_41 = arith.constant 0.000000e+00 : f32
    %125 = vector.broadcast %cst_41 : f32 to vector<1x8xf32>
    %126 = arith.cmpf oeq, %34, %125 : vector<1x8xf32>
    %cst_42 = arith.constant -1.000000e+30 : f32
    %127 = vector.shape_cast %126 : vector<1x8xi1> to vector<1x8xi1>
    %128 = vector.broadcast %127 : vector<1x8xi1> to vector<8x8xi1>
    %129 = vector.broadcast %cst_42 : f32 to vector<8x8xf32>
    %130 = arith.select %128, %129, %124 : vector<8x8xi1>, vector<8x8xf32>
    %cst_43 = arith.constant dense<0xFF800000> : vector<8xf32>
    %131 = vector.multi_reduction <maximumf>, %130, %cst_43 [1] : vector<8x8xf32> to vector<8xf32>
    %132 = vector.shape_cast %131 : vector<8xf32> to vector<8x1xf32>
    %133 = vector.broadcast %132 : vector<8x1xf32> to vector<8x8xf32>
    %134 = arith.subf %130, %133 : vector<8x8xf32>
    %135 = math.exp %134 : vector<8x8xf32>
    %cst_44 = arith.constant dense<0.000000e+00> : vector<8xf32>
    %136 = vector.multi_reduction <add>, %135, %cst_44 [1] : vector<8x8xf32> to vector<8xf32>
    %137 = vector.shape_cast %136 : vector<8xf32> to vector<8x1xf32>
    %138 = tpu.reciprocal %137 {approx = true} : vector<8x1xf32> -> vector<8x1xf32>
    %139 = vector.broadcast %138 : vector<8x1xf32> to vector<8x8xf32>
    %140 = arith.mulf %135, %139 : vector<8x8xf32>
    %141 = arith.truncf %140 : vector<8x8xf32> to vector<8x8xbf16>
    %cst_45 = arith.constant dense<0.000000e+00> : vector<8x8xf32>
    %142 = tpu.matmul %141, %123, %cst_45 {dimension_numbers = #tpu.dot_dimension_numbers<[1], [0], [0], [1], [0, 0, 1, 1], [], []>} : vector<8x8xbf16>, vector<8x8xbf16>, vector<8x8xf32> -> vector<8x8xf32>
    %143 = tpu.concatenate %61, %88, %115, %142 in 1 : vector<8x8xf32>, vector<8x8xf32>, vector<8x8xf32>, vector<8x8xf32> -> vector<8x32xf32>
    %144 = arith.truncf %143 : vector<8x32xf32> to vector<8x32xbf16>
    %c0_46 = arith.constant 0 : index
    %c0_47 = arith.constant 0 : index
    %145 = vector.load %arg7[%c0_46, %c0_47] : memref<32x32xbf16, #tpu.memory_space<vmem>>, vector<32x32xbf16>
    %cst_48 = arith.constant dense<0.000000e+00> : vector<8x32xf32>
    %146 = tpu.matmul %144, %145, %cst_48 {dimension_numbers = #tpu.dot_dimension_numbers<[1], [0], [0], [1], [0, 0, 1, 1], [], []>} : vector<8x32xbf16>, vector<32x32xbf16>, vector<8x32xf32> -> vector<8x32xf32>
    %c0_49 = arith.constant 0 : index
    %c0_50 = arith.constant 0 : index
    %147 = vector.load %arg8[%c0_49, %c0_50] : memref<1x32xf32, #tpu.memory_space<vmem>>, vector<1x32xf32>
    %148 = vector.broadcast %147 : vector<1x32xf32> to vector<8x32xf32>
    %149 = arith.addf %146, %148 : vector<8x32xf32>
    %150 = arith.addf %1, %149 : vector<8x32xf32>
    %c0_51 = arith.constant 0 : index
    %c0_52 = arith.constant 0 : index
    %c0_53 = arith.constant 0 : index
    %151 = vector.load %arg9[%c0_51, %c0_52, %c0_53] : memref<1x8x32xf32, #tpu.memory_space<vmem>>, vector<1x8x32xf32>
    %152 = vector.shape_cast %151 : vector<1x8x32xf32> to vector<8x32xf32>
    %153 = vector.shape_cast %150 : vector<8x32xf32> to vector<1x8x32xf32>
    tpu.vector_store %arg9[%c0_51, %c0_52, %c0_53], %153 {strides = array<i32>} : memref<1x8x32xf32, #tpu.memory_space<vmem>>, vector<1x8x32xf32>,
    return
  }
  func.func @transform_0(%arg0: i32) -> (i32, i32, i32) {
    %c0_i32 = arith.constant 0 : i32
    %c0_i32_0 = arith.constant 0 : i32
    %c0_i32_1 = arith.constant 0 : i32
    return %arg0, %c0_i32, %c0_i32_0 : i32, i32, i32
  }
  func.func @transform_1(%arg0: i32) -> (i32, i32, i32) {
    %c0_i32 = arith.constant 0 : i32
    %c0_i32_0 = arith.constant 0 : i32
    %c0_i32_1 = arith.constant 0 : i32
    return %arg0, %c0_i32, %c0_i32_0 : i32, i32, i32
  }
  func.func @transform_2(%arg0: i32) -> (i32, i32) {
    %c0_i32 = arith.constant 0 : i32
    %c0_i32_0 = arith.constant 0 : i32
    %c0_i32_1 = arith.constant 0 : i32
    return %c0_i32, %c0_i32_0 : i32, i32
  }
  func.func @transform_3(%arg0: i32) -> (i32, i32) {
    %c0_i32 = arith.constant 0 : i32
    %c0_i32_0 = arith.constant 0 : i32
    %c0_i32_1 = arith.constant 0 : i32
    return %c0_i32, %c0_i32_0 : i32, i32
  }
  func.func @transform_4(%arg0: i32) -> (i32, i32) {
    %c0_i32 = arith.constant 0 : i32
    %c0_i32_0 = arith.constant 0 : i32
    %c0_i32_1 = arith.constant 0 : i32
    return %c0_i32, %c0_i32_0 : i32, i32
  }
  func.func @transform_5(%arg0: i32) -> (i32, i32) {
    %c0_i32 = arith.constant 0 : i32
    %c0_i32_0 = arith.constant 0 : i32
    %c0_i32_1 = arith.constant 0 : i32
    return %c0_i32, %c0_i32_0 : i32, i32
  }
  func.func @transform_6(%arg0: i32) -> (i32, i32) {
    %c0_i32 = arith.constant 0 : i32
    %c0_i32_0 = arith.constant 0 : i32
    %c0_i32_1 = arith.constant 0 : i32
    return %c0_i32, %c0_i32_0 : i32, i32
  }
  func.func @transform_7(%arg0: i32) -> (i32, i32) {
    %c0_i32 = arith.constant 0 : i32
    %c0_i32_0 = arith.constant 0 : i32
    %c0_i32_1 = arith.constant 0 : i32
    return %c0_i32, %c0_i32_0 : i32, i32
  }
  func.func @transform_8(%arg0: i32) -> (i32, i32, i32) {
    %c0_i32 = arith.constant 0 : i32
    %c0_i32_0 = arith.constant 0 : i32
    %c0_i32_1 = arith.constant 0 : i32
    return %arg0, %c0_i32, %c0_i32_0 : i32, i32, i32
  }
}

module attributes {stable_mosaic.version = 11 : i64} {
  func.func @_ff_kernel(%arg0: i32, %arg1: memref<16x32xf32, #tpu.memory_space<vmem>>, %arg2: memref<1x32xf32, #tpu.memory_space<vmem>>, %arg3: memref<1x32xf32, #tpu.memory_space<vmem>>, %arg4: memref<32x64xbf16, #tpu.memory_space<vmem>>, %arg5: memref<1x64xf32, #tpu.memory_space<vmem>>, %arg6: memref<64x32xbf16, #tpu.memory_space<vmem>>, %arg7: memref<1x32xf32, #tpu.memory_space<vmem>>, %arg8: memref<16x32xf32, #tpu.memory_space<vmem>>) attributes {dimension_semantics = [#tpu.dimension_semantics<parallel>], iteration_bounds = array<i64: 1>, scalar_prefetch = 0 : i64, scratch_operands = 0 : i64, tpu.core_type = #tpu.core_type<tc>, window_params = [{transform_indices = @transform_0, window_bounds = array<i64: 16, 32>}, {pipeline_mode = #tpu.pipeline_mode<synchronous>, transform_indices = @transform_1, window_bounds = array<i64: 1, 32>}, {pipeline_mode = #tpu.pipeline_mode<synchronous>, transform_indices = @transform_2, window_bounds = array<i64: 1, 32>}, {pipeline_mode = #tpu.pipeline_mode<synchronous>, transform_indices = @transform_3, window_bounds = array<i64: 32, 64>}, {pipeline_mode = #tpu.pipeline_mode<synchronous>, transform_indices = @transform_4, window_bounds = array<i64: 1, 64>}, {pipeline_mode = #tpu.pipeline_mode<synchronous>, transform_indices = @transform_5, window_bounds = array<i64: 64, 32>}, {pipeline_mode = #tpu.pipeline_mode<synchronous>, transform_indices = @transform_6, window_bounds = array<i64: 1, 32>}, {transform_indices = @transform_7, window_bounds = array<i64: 16, 32>}]} {
    %c0 = arith.constant 0 : index
    %c0_0 = arith.constant 0 : index
    %0 = vector.load %arg1[%c0, %c0_0] : memref<16x32xf32, #tpu.memory_space<vmem>>, vector<16x32xf32>
    %c0_1 = arith.constant 0 : index
    %c0_2 = arith.constant 0 : index
    %1 = vector.load %arg2[%c0_1, %c0_2] : memref<1x32xf32, #tpu.memory_space<vmem>>, vector<1x32xf32>
    %c0_3 = arith.constant 0 : index
    %c0_4 = arith.constant 0 : index
    %2 = vector.load %arg3[%c0_3, %c0_4] : memref<1x32xf32, #tpu.memory_space<vmem>>, vector<1x32xf32>
    %cst = arith.constant dense<0.000000e+00> : vector<16xf32>
    %3 = vector.multi_reduction <add>, %0, %cst [1] : vector<16x32xf32> to vector<16xf32>
    %4 = vector.shape_cast %3 : vector<16xf32> to vector<16x1xf32>
    %cst_5 = arith.constant 3.200000e+01 : f32
    %5 = vector.broadcast %cst_5 : f32 to vector<16x1xf32>
    %6 = arith.divf %4, %5 : vector<16x1xf32>
    %7 = vector.broadcast %6 : vector<16x1xf32> to vector<16x32xf32>
    %8 = arith.subf %0, %7 : vector<16x32xf32>
    %9 = arith.mulf %8, %8 : vector<16x32xf32>
    %cst_6 = arith.constant dense<0.000000e+00> : vector<16xf32>
    %10 = vector.multi_reduction <add>, %9, %cst_6 [1] : vector<16x32xf32> to vector<16xf32>
    %11 = vector.shape_cast %10 : vector<16xf32> to vector<16x1xf32>
    %cst_7 = arith.constant 0.0322580636 : f32
    %12 = vector.broadcast %cst_7 : f32 to vector<16x1xf32>
    %13 = arith.mulf %11, %12 : vector<16x1xf32>
    %14 = vector.broadcast %1 : vector<1x32xf32> to vector<16x32xf32>
    %15 = arith.mulf %14, %8 : vector<16x32xf32>
    %16 = math.sqrt %13 : vector<16x1xf32>
    %cst_8 = arith.constant 9.99999997E-7 : f32
    %17 = vector.broadcast %cst_8 : f32 to vector<16x1xf32>
    %18 = arith.addf %16, %17 : vector<16x1xf32>
    %19 = vector.broadcast %18 : vector<16x1xf32> to vector<16x32xf32>
    %20 = arith.divf %15, %19 : vector<16x32xf32>
    %21 = vector.broadcast %2 : vector<1x32xf32> to vector<16x32xf32>
    %22 = arith.addf %20, %21 : vector<16x32xf32>
    %23 = arith.truncf %22 : vector<16x32xf32> to vector<16x32xbf16>
    %c0_9 = arith.constant 0 : index
    %c0_10 = arith.constant 0 : index
    %24 = vector.load %arg4[%c0_9, %c0_10] : memref<32x64xbf16, #tpu.memory_space<vmem>>, vector<32x64xbf16>
    %cst_11 = arith.constant dense<0.000000e+00> : vector<16x64xf32>
    %25 = tpu.matmul %23, %24, %cst_11 {dimension_numbers = #tpu.dot_dimension_numbers<[1], [0], [0], [1], [0, 0, 1, 1], [], []>} : vector<16x32xbf16>, vector<32x64xbf16>, vector<16x64xf32> -> vector<16x64xf32>
    %c0_12 = arith.constant 0 : index
    %c0_13 = arith.constant 0 : index
    %26 = vector.load %arg5[%c0_12, %c0_13] : memref<1x64xf32, #tpu.memory_space<vmem>>, vector<1x64xf32>
    %27 = vector.broadcast %26 : vector<1x64xf32> to vector<16x64xf32>
    %28 = arith.addf %25, %27 : vector<16x64xf32>
    %cst_14 = arith.constant 0.000000e+00 : f32
    %29 = vector.broadcast %cst_14 : f32 to vector<16x64xf32>
    %30 = arith.maximumf %28, %29 : vector<16x64xf32>
    %31 = arith.truncf %30 : vector<16x64xf32> to vector<16x64xbf16>
    %c0_15 = arith.constant 0 : index
    %c0_16 = arith.constant 0 : index
    %32 = vector.load %arg6[%c0_15, %c0_16] : memref<64x32xbf16, #tpu.memory_space<vmem>>, vector<64x32xbf16>
    %cst_17 = arith.constant dense<0.000000e+00> : vector<16x32xf32>
    %33 = tpu.matmul %31, %32, %cst_17 {dimension_numbers = #tpu.dot_dimension_numbers<[1], [0], [0], [1], [0, 0, 1, 1], [], []>} : vector<16x64xbf16>, vector<64x32xbf16>, vector<16x32xf32> -> vector<16x32xf32>
    %c0_18 = arith.constant 0 : index
    %c0_19 = arith.constant 0 : index
    %34 = vector.load %arg7[%c0_18, %c0_19] : memref<1x32xf32, #tpu.memory_space<vmem>>, vector<1x32xf32>
    %35 = vector.broadcast %34 : vector<1x32xf32> to vector<16x32xf32>
    %36 = arith.addf %33, %35 : vector<16x32xf32>
    %37 = arith.addf %0, %36 : vector<16x32xf32>
    %c0_20 = arith.constant 0 : index
    %c0_21 = arith.constant 0 : index
    %38 = vector.load %arg8[%c0_20, %c0_21] : memref<16x32xf32, #tpu.memory_space<vmem>>, vector<16x32xf32>
    tpu.vector_store %arg8[%c0_20, %c0_21], %37 {strides = array<i32>} : memref<16x32xf32, #tpu.memory_space<vmem>>, vector<16x32xf32>,
    return
  }
  func.func @transform_0(%arg0: i32) -> (i32, i32) {
    %c0_i32 = arith.constant 0 : i32
    %c0_i32_0 = arith.constant 0 : i32
    return %arg0, %c0_i32 : i32, i32
  }
  func.func @transform_1(%arg0: i32) -> (i32, i32) {
    %c0_i32 = arith.constant 0 : i32
    %c0_i32_0 = arith.constant 0 : i32
    %c0_i32_1 = arith.constant 0 : i32
    return %c0_i32, %c0_i32_0 : i32, i32
  }
  func.func @transform_2(%arg0: i32) -> (i32, i32) {
    %c0_i32 = arith.constant 0 : i32
    %c0_i32_0 = arith.constant 0 : i32
    %c0_i32_1 = arith.constant 0 : i32
    return %c0_i32, %c0_i32_0 : i32, i32
  }
  func.func @transform_3(%arg0: i32) -> (i32, i32) {
    %c0_i32 = arith.constant 0 : i32
    %c0_i32_0 = arith.constant 0 : i32
    %c0_i32_1 = arith.constant 0 : i32
    return %c0_i32, %c0_i32_0 : i32, i32
  }
  func.func @transform_4(%arg0: i32) -> (i32, i32) {
    %c0_i32 = arith.constant 0 : i32
    %c0_i32_0 = arith.constant 0 : i32
    %c0_i32_1 = arith.constant 0 : i32
    return %c0_i32, %c0_i32_0 : i32, i32
  }
  func.func @transform_5(%arg0: i32) -> (i32, i32) {
    %c0_i32 = arith.constant 0 : i32
    %c0_i32_0 = arith.constant 0 : i32
    %c0_i32_1 = arith.constant 0 : i32
    return %c0_i32, %c0_i32_0 : i32, i32
  }
  func.func @transform_6(%arg0: i32) -> (i32, i32) {
    %c0_i32 = arith.constant 0 : i32
    %c0_i32_0 = arith.constant 0 : i32
    %c0_i32_1 = arith.constant 0 : i32
    return %c0_i32, %c0_i32_0 : i32, i32
  }
  func.func @transform_7(%arg0: i32) -> (i32, i32) {
    %c0_i32 = arith.constant 0 : i32
    %c0_i32_0 = arith.constant 0 : i32
    return %arg0, %c0_i32 : i32, i32
  }
}

module attributes {stable_mosaic.version = 11 : i64} {
  func.func @_cross_attn_kernel(%arg0: i32, %arg1: memref<1x8x32xf32, #tpu.memory_space<vmem>>, %arg2: memref<1x8x32xf32, #tpu.memory_space<vmem>>, %arg3: memref<1x1x8xf32, #tpu.memory_space<vmem>>, %arg4: memref<1x32xf32, #tpu.memory_space<vmem>>, %arg5: memref<1x32xf32, #tpu.memory_space<vmem>>, %arg6: memref<32x32xbf16, #tpu.memory_space<vmem>>, %arg7: memref<1x32xf32, #tpu.memory_space<vmem>>, %arg8: memref<32x64xbf16, #tpu.memory_space<vmem>>, %arg9: memref<1x64xf32, #tpu.memory_space<vmem>>, %arg10: memref<32x32xbf16, #tpu.memory_space<vmem>>, %arg11: memref<1x32xf32, #tpu.memory_space<vmem>>, %arg12: memref<1x8x32xf32, #tpu.memory_space<vmem>>) attributes {dimension_semantics = [#tpu.dimension_semantics<parallel>], iteration_bounds = array<i64: 2>, scalar_prefetch = 0 : i64, scratch_operands = 0 : i64, tpu.core_type = #tpu.core_type<tc>, window_params = [{transform_indices = @transform_0, window_bounds = array<i64: 1, 8, 32>}, {transform_indices = @transform_1, window_bounds = array<i64: 1, 8, 32>}, {transform_indices = @transform_2, window_bounds = array<i64: 1, 1, 8>}, {pipeline_mode = #tpu.pipeline_mode<synchronous>, transform_indices = @transform_3, window_bounds = array<i64: 1, 32>}, {pipeline_mode = #tpu.pipeline_mode<synchronous>, transform_indices = @transform_4, window_bounds = array<i64: 1, 32>}, {pipeline_mode = #tpu.pipeline_mode<synchronous>, transform_indices = @transform_5, window_bounds = array<i64: 32, 32>}, {pipeline_mode = #tpu.pipeline_mode<synchronous>, transform_indices = @transform_6, window_bounds = array<i64: 1, 32>}, {pipeline_mode = #tpu.pipeline_mode<synchronous>, transform_indices = @transform_7, window_bounds = array<i64: 32, 64>}, {pipeline_mode = #tpu.pipeline_mode<synchronous>, transform_indices = @transform_8, window_bounds = array<i64: 1, 64>}, {pipeline_mode = #tpu.pipeline_mode<synchronous>, transform_indices = @transform_9, window_bounds = array<i64: 32, 32>}, {pipeline_mode = #tpu.pipeline_mode<synchronous>, transform_indices = @transform_10, window_bounds = array<i64: 1, 32>}, {transform_indices = @transform_11, window_bounds = array<i64: 1, 8, 32>}]} {
    %c0 = arith.constant 0 : index
    %c0_0 = arith.constant 0 : index
    %c0_1 = arith.constant 0 : index
    %0 = vector.load %arg1[%c0, %c0_0, %c0_1] : memref<1x8x32xf32, #tpu.memory_space<vmem>>, vector<1x8x32xf32>
    %1 = vector.shape_cast %0 : vector<1x8x32xf32> to vector<8x32xf32>
    %c0_2 = arith.constant 0 : index
    %c0_3 = arith.constant 0 : index
    %2 = vector.load %arg4[%c0_2, %c0_3] : memref<1x32xf32, #tpu.memory_space<vmem>>, vector<1x32xf32>
    %c0_4 = arith.constant 0 : index
    %c0_5 = arith.constant 0 : index
    %3 = vector.load %arg5[%c0_4, %c0_5] : memref<1x32xf32, #tpu.memory_space<vmem>>, vector<1x32xf32>
    %cst = arith.constant dense<0.000000e+00> : vector<8xf32>
    %4 = vector.multi_reduction <add>, %1, %cst [1] : vector<8x32xf32> to vector<8xf32>
    %5 = vector.shape_cast %4 : vector<8xf32> to vector<8x1xf32>
    %cst_6 = arith.constant 3.200000e+01 : f32
    %6 = vector.broadcast %cst_6 : f32 to vector<8x1xf32>
    %7 = arith.divf %5, %6 : vector<8x1xf32>
    %8 = vector.broadcast %7 : vector<8x1xf32> to vector<8x32xf32>
    %9 = arith.subf %1, %8 : vector<8x32xf32>
    %10 = arith.mulf %9, %9 : vector<8x32xf32>
    %cst_7 = arith.constant dense<0.000000e+00> : vector<8xf32>
    %11 = vector.multi_reduction <add>, %10, %cst_7 [1] : vector<8x32xf32> to vector<8xf32>
    %12 = vector.shape_cast %11 : vector<8xf32> to vector<8x1xf32>
    %cst_8 = arith.constant 0.0322580636 : f32
    %13 = vector.broadcast %cst_8 : f32 to vector<8x1xf32>
    %14 = arith.mulf %12, %13 : vector<8x1xf32>
    %15 = vector.broadcast %2 : vector<1x32xf32> to vector<8x32xf32>
    %16 = arith.mulf %15, %9 : vector<8x32xf32>
    %17 = math.sqrt %14 : vector<8x1xf32>
    %cst_9 = arith.constant 9.99999997E-7 : f32
    %18 = vector.broadcast %cst_9 : f32 to vector<8x1xf32>
    %19 = arith.addf %17, %18 : vector<8x1xf32>
    %20 = vector.broadcast %19 : vector<8x1xf32> to vector<8x32xf32>
    %21 = arith.divf %16, %20 : vector<8x32xf32>
    %22 = vector.broadcast %3 : vector<1x32xf32> to vector<8x32xf32>
    %23 = arith.addf %21, %22 : vector<8x32xf32>
    %24 = arith.truncf %23 : vector<8x32xf32> to vector<8x32xbf16>
    %c0_10 = arith.constant 0 : index
    %c0_11 = arith.constant 0 : index
    %25 = vector.load %arg6[%c0_10, %c0_11] : memref<32x32xbf16, #tpu.memory_space<vmem>>, vector<32x32xbf16>
    %cst_12 = arith.constant dense<0.000000e+00> : vector<8x32xf32>
    %26 = tpu.matmul %24, %25, %cst_12 {dimension_numbers = #tpu.dot_dimension_numbers<[1], [0], [0], [1], [0, 0, 1, 1], [], []>} : vector<8x32xbf16>, vector<32x32xbf16>, vector<8x32xf32> -> vector<8x32xf32>
    %c0_13 = arith.constant 0 : index
    %c0_14 = arith.constant 0 : index
    %27 = vector.load %arg7[%c0_13, %c0_14] : memref<1x32xf32, #tpu.memory_space<vmem>>, vector<1x32xf32>
    %28 = vector.broadcast %27 : vector<1x32xf32> to vector<8x32xf32>
    %29 = arith.addf %26, %28 : vector<8x32xf32>
    %c0_15 = arith.constant 0 : index
    %c0_16 = arith.constant 0 : index
    %c0_17 = arith.constant 0 : index
    %30 = vector.load %arg2[%c0_15, %c0_16, %c0_17] : memref<1x8x32xf32, #tpu.memory_space<vmem>>, vector<1x8x32xf32>
    %31 = vector.shape_cast %30 : vector<1x8x32xf32> to vector<8x32xf32>
    %32 = arith.truncf %31 : vector<8x32xf32> to vector<8x32xbf16>
    %c0_18 = arith.constant 0 : index
    %c0_19 = arith.constant 0 : index
    %33 = vector.load %arg8[%c0_18, %c0_19] : memref<32x64xbf16, #tpu.memory_space<vmem>>, vector<32x64xbf16>
    %cst_20 = arith.constant dense<0.000000e+00> : vector<8x64xf32>
    %34 = tpu.matmul %32, %33, %cst_20 {dimension_numbers = #tpu.dot_dimension_numbers<[1], [0], [0], [1], [0, 0, 1, 1], [], []>} : vector<8x32xbf16>, vector<32x64xbf16>, vector<8x64xf32> -> vector<8x64xf32>
    %c0_21 = arith.constant 0 : index
    %c0_22 = arith.constant 0 : index
    %35 = vector.load %arg9[%c0_21, %c0_22] : memref<1x64xf32, #tpu.memory_space<vmem>>, vector<1x64xf32>
    %36 = vector.broadcast %35 : vector<1x64xf32> to vector<8x64xf32>
    %37 = arith.addf %34, %36 : vector<8x64xf32>
    %38 = vector.extract_strided_slice %37 {offsets = [0, 0], sizes = [8, 32], strides = [1, 1]} : vector<8x64xf32> to vector<8x32xf32>
    %39 = vector.extract_strided_slice %37 {offsets = [0, 32], sizes = [8, 32], strides = [1, 1]} : vector<8x64xf32> to vector<8x32xf32>
    %c0_23 = arith.constant 0 : index
    %c0_24 = arith.constant 0 : index
    %c0_25 = arith.constant 0 : index
    %40 = vector.load %arg3[%c0_23, %c0_24, %c0_25] : memref<1x1x8xf32, #tpu.memory_space<vmem>>, vector<1x1x8xf32>
    %41 = vector.shape_cast %40 : vector<1x1x8xf32> to vector<1x8xf32>
    %42 = vector.extract_strided_slice %29 {offsets = [0, 0], sizes = [8, 8], strides = [1, 1]} : vector<8x32xf32> to vector<8x8xf32>
    %cst_26 = arith.constant 0.353553385 : f32
    %43 = vector.broadcast %cst_26 : f32 to vector<8x8xf32>
    %44 = arith.mulf %42, %43 : vector<8x8xf32>
    %45 = arith.truncf %44 : vector<8x8xf32> to vector<8x8xbf16>
    %46 = vector.extract_strided_slice %38 {offsets = [0, 0], sizes = [8, 8], strides = [1, 1]} : vector<8x32xf32> to vector<8x8xf32>
    %47 = arith.truncf %46 : vector<8x8xf32> to vector<8x8xbf16>
    %48 = vector.extract_strided_slice %39 {offsets = [0, 0], sizes = [8, 8], strides = [1, 1]} : vector<8x32xf32> to vector<8x8xf32>
    %49 = arith.truncf %48 : vector<8x8xf32> to vector<8x8xbf16>
    %cst_27 = arith.constant dense<0.000000e+00> : vector<8x8xf32>
    %50 = tpu.matmul %45, %47, %cst_27 {dimension_numbers = #tpu.dot_dimension_numbers<[1], [1], [0], [0], [0, 0, 1, 0], [], []>} : vector<8x8xbf16>, vector<8x8xbf16>, vector<8x8xf32> -> vector<8x8xf32>
    %cst_28 = arith.constant 0.000000e+00 : f32
    %51 = vector.broadcast %cst_28 : f32 to vector<1x8xf32>
    %52 = arith.cmpf oeq, %41, %51 : vector<1x8xf32>
    %cst_29 = arith.constant -1.000000e+30 : f32
    %53 = vector.shape_cast %52 : vector<1x8xi1> to vector<1x8xi1>
    %54 = vector.broadcast %53 : vector<1x8xi1> to vector<8x8xi1>
    %55 = vector.broadcast %cst_29 : f32 to vector<8x8xf32>
    %56 = arith.select %54, %55, %50 : vector<8x8xi1>, vector<8x8xf32>
    %cst_30 = arith.constant dense<0xFF800000> : vector<8xf32>
    %57 = vector.multi_reduction <maximumf>, %56, %cst_30 [1] : vector<8x8xf32> to vector<8xf32>
    %58 = vector.shape_cast %57 : vector<8xf32> to vector<8x1xf32>
    %59 = vector.broadcast %58 : vector<8x1xf32> to vector<8x8xf32>
    %60 = arith.subf %56, %59 : vector<8x8xf32>
    %61 = math.exp %60 : vector<8x8xf32>
    %cst_31 = arith.constant dense<0.000000e+00> : vector<8xf32>
    %62 = vector.multi_reduction <add>, %61, %cst_31 [1] : vector<8x8xf32> to vector<8xf32>
    %63 = vector.shape_cast %62 : vector<8xf32> to vector<8x1xf32>
    %64 = tpu.reciprocal %63 {approx = true} : vector<8x1xf32> -> vector<8x1xf32>
    %65 = vector.broadcast %64 : vector<8x1xf32> to vector<8x8xf32>
    %66 = arith.mulf %61, %65 : vector<8x8xf32>
    %67 = arith.truncf %66 : vector<8x8xf32> to vector<8x8xbf16>
    %cst_32 = arith.constant dense<0.000000e+00> : vector<8x8xf32>
    %68 = tpu.matmul %67, %49, %cst_32 {dimension_numbers = #tpu.dot_dimension_numbers<[1], [0], [0], [1], [0, 0, 1, 1], [], []>} : vector<8x8xbf16>, vector<8x8xbf16>, vector<8x8xf32> -> vector<8x8xf32>
    %69 = vector.extract_strided_slice %29 {offsets = [0, 8], sizes = [8, 8], strides = [1, 1]} : vector<8x32xf32> to vector<8x8xf32>
    %cst_33 = arith.constant 0.353553385 : f32
    %70 = vector.broadcast %cst_33 : f32 to vector<8x8xf32>
    %71 = arith.mulf %69, %70 : vector<8x8xf32>
    %72 = arith.truncf %71 : vector<8x8xf32> to vector<8x8xbf16>
    %73 = vector.extract_strided_slice %38 {offsets = [0, 8], sizes = [8, 8], strides = [1, 1]} : vector<8x32xf32> to vector<8x8xf32>
    %74 = arith.truncf %73 : vector<8x8xf32> to vector<8x8xbf16>
    %75 = vector.extract_strided_slice %39 {offsets = [0, 8], sizes = [8, 8], strides = [1, 1]} : vector<8x32xf32> to vector<8x8xf32>
    %76 = arith.truncf %75 : vector<8x8xf32> to vector<8x8xbf16>
    %cst_34 = arith.constant dense<0.000000e+00> : vector<8x8xf32>
    %77 = tpu.matmul %72, %74, %cst_34 {dimension_numbers = #tpu.dot_dimension_numbers<[1], [1], [0], [0], [0, 0, 1, 0], [], []>} : vector<8x8xbf16>, vector<8x8xbf16>, vector<8x8xf32> -> vector<8x8xf32>
    %cst_35 = arith.constant 0.000000e+00 : f32
    %78 = vector.broadcast %cst_35 : f32 to vector<1x8xf32>
    %79 = arith.cmpf oeq, %41, %78 : vector<1x8xf32>
    %cst_36 = arith.constant -1.000000e+30 : f32
    %80 = vector.shape_cast %79 : vector<1x8xi1> to vector<1x8xi1>
    %81 = vector.broadcast %80 : vector<1x8xi1> to vector<8x8xi1>
    %82 = vector.broadcast %cst_36 : f32 to vector<8x8xf32>
    %83 = arith.select %81, %82, %77 : vector<8x8xi1>, vector<8x8xf32>
    %cst_37 = arith.constant dense<0xFF800000> : vector<8xf32>
    %84 = vector.multi_reduction <maximumf>, %83, %cst_37 [1] : vector<8x8xf32> to vector<8xf32>
    %85 = vector.shape_cast %84 : vector<8xf32> to vector<8x1xf32>
    %86 = vector.broadcast %85 : vector<8x1xf32> to vector<8x8xf32>
    %87 = arith.subf %83, %86 : vector<8x8xf32>
    %88 = math.exp %87 : vector<8x8xf32>
    %cst_38 = arith.constant dense<0.000000e+00> : vector<8xf32>
    %89 = vector.multi_reduction <add>, %88, %cst_38 [1] : vector<8x8xf32> to vector<8xf32>
    %90 = vector.shape_cast %89 : vector<8xf32> to vector<8x1xf32>
    %91 = tpu.reciprocal %90 {approx = true} : vector<8x1xf32> -> vector<8x1xf32>
    %92 = vector.broadcast %91 : vector<8x1xf32> to vector<8x8xf32>
    %93 = arith.mulf %88, %92 : vector<8x8xf32>
    %94 = arith.truncf %93 : vector<8x8xf32> to vector<8x8xbf16>
    %cst_39 = arith.constant dense<0.000000e+00> : vector<8x8xf32>
    %95 = tpu.matmul %94, %76, %cst_39 {dimension_numbers = #tpu.dot_dimension_numbers<[1], [0], [0], [1], [0, 0, 1, 1], [], []>} : vector<8x8xbf16>, vector<8x8xbf16>, vector<8x8xf32> -> vector<8x8xf32>
    %96 = vector.extract_strided_slice %29 {offsets = [0, 16], sizes = [8, 8], strides = [1, 1]} : vector<8x32xf32> to vector<8x8xf32>
    %cst_40 = arith.constant 0.353553385 : f32
    %97 = vector.broadcast %cst_40 : f32 to vector<8x8xf32>
    %98 = arith.mulf %96, %97 : vector<8x8xf32>
    %99 = arith.truncf %98 : vector<8x8xf32> to vector<8x8xbf16>
    %100 = vector.extract_strided_slice %38 {offsets = [0, 16], sizes = [8, 8], strides = [1, 1]} : vector<8x32xf32> to vector<8x8xf32>
    %101 = arith.truncf %100 : vector<8x8xf32> to vector<8x8xbf16>
    %102 = vector.extract_strided_slice %39 {offsets = [0, 16], sizes = [8, 8], strides = [1, 1]} : vector<8x32xf32> to vector<8x8xf32>
    %103 = arith.truncf %102 : vector<8x8xf32> to vector<8x8xbf16>
    %cst_41 = arith.constant dense<0.000000e+00> : vector<8x8xf32>
    %104 = tpu.matmul %99, %101, %cst_41 {dimension_numbers = #tpu.dot_dimension_numbers<[1], [1], [0], [0], [0, 0, 1, 0], [], []>} : vector<8x8xbf16>, vector<8x8xbf16>, vector<8x8xf32> -> vector<8x8xf32>
    %cst_42 = arith.constant 0.000000e+00 : f32
    %105 = vector.broadcast %cst_42 : f32 to vector<1x8xf32>
    %106 = arith.cmpf oeq, %41, %105 : vector<1x8xf32>
    %cst_43 = arith.constant -1.000000e+30 : f32
    %107 = vector.shape_cast %106 : vector<1x8xi1> to vector<1x8xi1>
    %108 = vector.broadcast %107 : vector<1x8xi1> to vector<8x8xi1>
    %109 = vector.broadcast %cst_43 : f32 to vector<8x8xf32>
    %110 = arith.select %108, %109, %104 : vector<8x8xi1>, vector<8x8xf32>
    %cst_44 = arith.constant dense<0xFF800000> : vector<8xf32>
    %111 = vector.multi_reduction <maximumf>, %110, %cst_44 [1] : vector<8x8xf32> to vector<8xf32>
    %112 = vector.shape_cast %111 : vector<8xf32> to vector<8x1xf32>
    %113 = vector.broadcast %112 : vector<8x1xf32> to vector<8x8xf32>
    %114 = arith.subf %110, %113 : vector<8x8xf32>
    %115 = math.exp %114 : vector<8x8xf32>
    %cst_45 = arith.constant dense<0.000000e+00> : vector<8xf32>
    %116 = vector.multi_reduction <add>, %115, %cst_45 [1] : vector<8x8xf32> to vector<8xf32>
    %117 = vector.shape_cast %116 : vector<8xf32> to vector<8x1xf32>
    %118 = tpu.reciprocal %117 {approx = true} : vector<8x1xf32> -> vector<8x1xf32>
    %119 = vector.broadcast %118 : vector<8x1xf32> to vector<8x8xf32>
    %120 = arith.mulf %115, %119 : vector<8x8xf32>
    %121 = arith.truncf %120 : vector<8x8xf32> to vector<8x8xbf16>
    %cst_46 = arith.constant dense<0.000000e+00> : vector<8x8xf32>
    %122 = tpu.matmul %121, %103, %cst_46 {dimension_numbers = #tpu.dot_dimension_numbers<[1], [0], [0], [1], [0, 0, 1, 1], [], []>} : vector<8x8xbf16>, vector<8x8xbf16>, vector<8x8xf32> -> vector<8x8xf32>
    %123 = vector.extract_strided_slice %29 {offsets = [0, 24], sizes = [8, 8], strides = [1, 1]} : vector<8x32xf32> to vector<8x8xf32>
    %cst_47 = arith.constant 0.353553385 : f32
    %124 = vector.broadcast %cst_47 : f32 to vector<8x8xf32>
    %125 = arith.mulf %123, %124 : vector<8x8xf32>
    %126 = arith.truncf %125 : vector<8x8xf32> to vector<8x8xbf16>
    %127 = vector.extract_strided_slice %38 {offsets = [0, 24], sizes = [8, 8], strides = [1, 1]} : vector<8x32xf32> to vector<8x8xf32>
    %128 = arith.truncf %127 : vector<8x8xf32> to vector<8x8xbf16>
    %129 = vector.extract_strided_slice %39 {offsets = [0, 24], sizes = [8, 8], strides = [1, 1]} : vector<8x32xf32> to vector<8x8xf32>
    %130 = arith.truncf %129 : vector<8x8xf32> to vector<8x8xbf16>
    %cst_48 = arith.constant dense<0.000000e+00> : vector<8x8xf32>
    %131 = tpu.matmul %126, %128, %cst_48 {dimension_numbers = #tpu.dot_dimension_numbers<[1], [1], [0], [0], [0, 0, 1, 0], [], []>} : vector<8x8xbf16>, vector<8x8xbf16>, vector<8x8xf32> -> vector<8x8xf32>
    %cst_49 = arith.constant 0.000000e+00 : f32
    %132 = vector.broadcast %cst_49 : f32 to vector<1x8xf32>
    %133 = arith.cmpf oeq, %41, %132 : vector<1x8xf32>
    %cst_50 = arith.constant -1.000000e+30 : f32
    %134 = vector.shape_cast %133 : vector<1x8xi1> to vector<1x8xi1>
    %135 = vector.broadcast %134 : vector<1x8xi1> to vector<8x8xi1>
    %136 = vector.broadcast %cst_50 : f32 to vector<8x8xf32>
    %137 = arith.select %135, %136, %131 : vector<8x8xi1>, vector<8x8xf32>
    %cst_51 = arith.constant dense<0xFF800000> : vector<8xf32>
    %138 = vector.multi_reduction <maximumf>, %137, %cst_51 [1] : vector<8x8xf32> to vector<8xf32>
    %139 = vector.shape_cast %138 : vector<8xf32> to vector<8x1xf32>
    %140 = vector.broadcast %139 : vector<8x1xf32> to vector<8x8xf32>
    %141 = arith.subf %137, %140 : vector<8x8xf32>
    %142 = math.exp %141 : vector<8x8xf32>
    %cst_52 = arith.constant dense<0.000000e+00> : vector<8xf32>
    %143 = vector.multi_reduction <add>, %142, %cst_52 [1] : vector<8x8xf32> to vector<8xf32>
    %144 = vector.shape_cast %143 : vector<8xf32> to vector<8x1xf32>
    %145 = tpu.reciprocal %144 {approx = true} : vector<8x1xf32> -> vector<8x1xf32>
    %146 = vector.broadcast %145 : vector<8x1xf32> to vector<8x8xf32>
    %147 = arith.mulf %142, %146 : vector<8x8xf32>
    %148 = arith.truncf %147 : vector<8x8xf32> to vector<8x8xbf16>
    %cst_53 = arith.constant dense<0.000000e+00> : vector<8x8xf32>
    %149 = tpu.matmul %148, %130, %cst_53 {dimension_numbers = #tpu.dot_dimension_numbers<[1], [0], [0], [1], [0, 0, 1, 1], [], []>} : vector<8x8xbf16>, vector<8x8xbf16>, vector<8x8xf32> -> vector<8x8xf32>
    %150 = tpu.concatenate %68, %95, %122, %149 in 1 : vector<8x8xf32>, vector<8x8xf32>, vector<8x8xf32>, vector<8x8xf32> -> vector<8x32xf32>
    %151 = arith.truncf %150 : vector<8x32xf32> to vector<8x32xbf16>
    %c0_54 = arith.constant 0 : index
    %c0_55 = arith.constant 0 : index
    %152 = vector.load %arg10[%c0_54, %c0_55] : memref<32x32xbf16, #tpu.memory_space<vmem>>, vector<32x32xbf16>
    %cst_56 = arith.constant dense<0.000000e+00> : vector<8x32xf32>
    %153 = tpu.matmul %151, %152, %cst_56 {dimension_numbers = #tpu.dot_dimension_numbers<[1], [0], [0], [1], [0, 0, 1, 1], [], []>} : vector<8x32xbf16>, vector<32x32xbf16>, vector<8x32xf32> -> vector<8x32xf32>
    %c0_57 = arith.constant 0 : index
    %c0_58 = arith.constant 0 : index
    %154 = vector.load %arg11[%c0_57, %c0_58] : memref<1x32xf32, #tpu.memory_space<vmem>>, vector<1x32xf32>
    %155 = vector.broadcast %154 : vector<1x32xf32> to vector<8x32xf32>
    %156 = arith.addf %153, %155 : vector<8x32xf32>
    %157 = arith.addf %1, %156 : vector<8x32xf32>
    %c0_59 = arith.constant 0 : index
    %c0_60 = arith.constant 0 : index
    %c0_61 = arith.constant 0 : index
    %158 = vector.load %arg12[%c0_59, %c0_60, %c0_61] : memref<1x8x32xf32, #tpu.memory_space<vmem>>, vector<1x8x32xf32>
    %159 = vector.shape_cast %158 : vector<1x8x32xf32> to vector<8x32xf32>
    %160 = vector.shape_cast %157 : vector<8x32xf32> to vector<1x8x32xf32>
    tpu.vector_store %arg12[%c0_59, %c0_60, %c0_61], %160 {strides = array<i32>} : memref<1x8x32xf32, #tpu.memory_space<vmem>>, vector<1x8x32xf32>,
    return
  }
  func.func @transform_0(%arg0: i32) -> (i32, i32, i32) {
    %c0_i32 = arith.constant 0 : i32
    %c0_i32_0 = arith.constant 0 : i32
    %c0_i32_1 = arith.constant 0 : i32
    return %arg0, %c0_i32, %c0_i32_0 : i32, i32, i32
  }
  func.func @transform_1(%arg0: i32) -> (i32, i32, i32) {
    %c0_i32 = arith.constant 0 : i32
    %c0_i32_0 = arith.constant 0 : i32
    %c0_i32_1 = arith.constant 0 : i32
    return %arg0, %c0_i32, %c0_i32_0 : i32, i32, i32
  }
  func.func @transform_2(%arg0: i32) -> (i32, i32, i32) {
    %c0_i32 = arith.constant 0 : i32
    %c0_i32_0 = arith.constant 0 : i32
    %c0_i32_1 = arith.constant 0 : i32
    return %arg0, %c0_i32, %c0_i32_0 : i32, i32, i32
  }
  func.func @transform_3(%arg0: i32) -> (i32, i32) {
    %c0_i32 = arith.constant 0 : i32
    %c0_i32_0 = arith.constant 0 : i32
    %c0_i32_1 = arith.constant 0 : i32
    return %c0_i32, %c0_i32_0 : i32, i32
  }
  func.func @transform_4(%arg0: i32) -> (i32, i32) {
    %c0_i32 = arith.constant 0 : i32
    %c0_i32_0 = arith.constant 0 : i32
    %c0_i32_1 = arith.constant 0 : i32
    return %c0_i32, %c0_i32_0 : i32, i32
  }
  func.func @transform_5(%arg0: i32) -> (i32, i32) {
    %c0_i32 = arith.constant 0 : i32
    %c0_i32_0 = arith.constant 0 : i32
    %c0_i32_1 = arith.constant 0 : i32
    return %c0_i32, %c0_i32_0 : i32, i32
  }
  func.func @transform_6(%arg0: i32) -> (i32, i32) {
    %c0_i32 = arith.constant 0 : i32
    %c0_i32_0 = arith.constant 0 : i32
    %c0_i32_1 = arith.constant 0 : i32
    return %c0_i32, %c0_i32_0 : i32, i32
  }
  func.func @transform_7(%arg0: i32) -> (i32, i32) {
    %c0_i32 = arith.constant 0 : i32
    %c0_i32_0 = arith.constant 0 : i32
    %c0_i32_1 = arith.constant 0 : i32
    return %c0_i32, %c0_i32_0 : i32, i32
  }
  func.func @transform_8(%arg0: i32) -> (i32, i32) {
    %c0_i32 = arith.constant 0 : i32
    %c0_i32_0 = arith.constant 0 : i32
    %c0_i32_1 = arith.constant 0 : i32
    return %c0_i32, %c0_i32_0 : i32, i32
  }
  func.func @transform_9(%arg0: i32) -> (i32, i32) {
    %c0_i32 = arith.constant 0 : i32
    %c0_i32_0 = arith.constant 0 : i32
    %c0_i32_1 = arith.constant 0 : i32
    return %c0_i32, %c0_i32_0 : i32, i32
  }
  func.func @transform_10(%arg0: i32) -> (i32, i32) {
    %c0_i32 = arith.constant 0 : i32
    %c0_i32_0 = arith.constant 0 : i32
    %c0_i32_1 = arith.constant 0 : i32
    return %c0_i32, %c0_i32_0 : i32, i32
  }
  func.func @transform_11(%arg0: i32) -> (i32, i32, i32) {
    %c0_i32 = arith.constant 0 : i32
    %c0_i32_0 = arith.constant 0 : i32
    %c0_i32_1 = arith.constant 0 : i32
    return %arg0, %c0_i32, %c0_i32_0 : i32, i32, i32
  }
}

module attributes {stable_mosaic.version = 11 : i64} {
  func.func @_ln_kernel(%arg0: i32, %arg1: memref<16x32xf32, #tpu.memory_space<vmem>>, %arg2: memref<1x32xf32, #tpu.memory_space<vmem>>, %arg3: memref<1x32xf32, #tpu.memory_space<vmem>>, %arg4: memref<16x32xf32, #tpu.memory_space<vmem>>) attributes {dimension_semantics = [#tpu.dimension_semantics<parallel>], iteration_bounds = array<i64: 1>, scalar_prefetch = 0 : i64, scratch_operands = 0 : i64, tpu.core_type = #tpu.core_type<tc>, window_params = [{transform_indices = @transform_0, window_bounds = array<i64: 16, 32>}, {pipeline_mode = #tpu.pipeline_mode<synchronous>, transform_indices = @transform_1, window_bounds = array<i64: 1, 32>}, {pipeline_mode = #tpu.pipeline_mode<synchronous>, transform_indices = @transform_2, window_bounds = array<i64: 1, 32>}, {transform_indices = @transform_3, window_bounds = array<i64: 16, 32>}]} {
    %c0 = arith.constant 0 : index
    %c0_0 = arith.constant 0 : index
    %0 = vector.load %arg1[%c0, %c0_0] : memref<16x32xf32, #tpu.memory_space<vmem>>, vector<16x32xf32>
    %c0_1 = arith.constant 0 : index
    %c0_2 = arith.constant 0 : index
    %1 = vector.load %arg2[%c0_1, %c0_2] : memref<1x32xf32, #tpu.memory_space<vmem>>, vector<1x32xf32>
    %c0_3 = arith.constant 0 : index
    %c0_4 = arith.constant 0 : index
    %2 = vector.load %arg3[%c0_3, %c0_4] : memref<1x32xf32, #tpu.memory_space<vmem>>, vector<1x32xf32>
    %cst = arith.constant dense<0.000000e+00> : vector<16xf32>
    %3 = vector.multi_reduction <add>, %0, %cst [1] : vector<16x32xf32> to vector<16xf32>
    %4 = vector.shape_cast %3 : vector<16xf32> to vector<16x1xf32>
    %cst_5 = arith.constant 3.200000e+01 : f32
    %5 = vector.broadcast %cst_5 : f32 to vector<16x1xf32>
    %6 = arith.divf %4, %5 : vector<16x1xf32>
    %7 = vector.broadcast %6 : vector<16x1xf32> to vector<16x32xf32>
    %8 = arith.subf %0, %7 : vector<16x32xf32>
    %9 = arith.mulf %8, %8 : vector<16x32xf32>
    %cst_6 = arith.constant dense<0.000000e+00> : vector<16xf32>
    %10 = vector.multi_reduction <add>, %9, %cst_6 [1] : vector<16x32xf32> to vector<16xf32>
    %11 = vector.shape_cast %10 : vector<16xf32> to vector<16x1xf32>
    %cst_7 = arith.constant 0.0322580636 : f32
    %12 = vector.broadcast %cst_7 : f32 to vector<16x1xf32>
    %13 = arith.mulf %11, %12 : vector<16x1xf32>
    %14 = vector.broadcast %1 : vector<1x32xf32> to vector<16x32xf32>
    %15 = arith.mulf %14, %8 : vector<16x32xf32>
    %16 = math.sqrt %13 : vector<16x1xf32>
    %cst_8 = arith.constant 9.99999997E-7 : f32
    %17 = vector.broadcast %cst_8 : f32 to vector<16x1xf32>
    %18 = arith.addf %16, %17 : vector<16x1xf32>
    %19 = vector.broadcast %18 : vector<16x1xf32> to vector<16x32xf32>
    %20 = arith.divf %15, %19 : vector<16x32xf32>
    %21 = vector.broadcast %2 : vector<1x32xf32> to vector<16x32xf32>
    %22 = arith.addf %20, %21 : vector<16x32xf32>
    %c0_9 = arith.constant 0 : index
    %c0_10 = arith.constant 0 : index
    %23 = vector.load %arg4[%c0_9, %c0_10] : memref<16x32xf32, #tpu.memory_space<vmem>>, vector<16x32xf32>
    tpu.vector_store %arg4[%c0_9, %c0_10], %22 {strides = array<i32>} : memref<16x32xf32, #tpu.memory_space<vmem>>, vector<16x32xf32>,
    return
  }
  func.func @transform_0(%arg0: i32) -> (i32, i32) {
    %c0_i32 = arith.constant 0 : i32
    %c0_i32_0 = arith.constant 0 : i32
    return %arg0, %c0_i32 : i32, i32
  }
  func.func @transform_1(%arg0: i32) -> (i32, i32) {
    %c0_i32 = arith.constant 0 : i32
    %c0_i32_0 = arith.constant 0 : i32
    %c0_i32_1 = arith.constant 0 : i32
    return %c0_i32, %c0_i32_0 : i32, i32
  }
  func.func @transform_2(%arg0: i32) -> (i32, i32) {
    %c0_i32 = arith.constant 0 : i32
    %c0_i32_0 = arith.constant 0 : i32
    %c0_i32_1 = arith.constant 0 : i32
    return %c0_i32, %c0_i32_0 : i32, i32
  }
  func.func @transform_3(%arg0: i32) -> (i32, i32) {
    %c0_i32 = arith.constant 0 : i32
    %c0_i32_0 = arith.constant 0 : i32
    return %arg0, %c0_i32 : i32, i32
  }
}

</mosaic_0001>

<llo_original>
// kernel: transformer_forward.16
$region0: #{transformer_forward.16}
  #allocation0 [shape = 'u32[]', space=smem, size = 0x4, offset = 0x4, fixed_abs, tag = 'smem constant byte address 0x4 - core index']
  #allocation1 [shape = 'u32[144,128]{1,0:T(1,128)}', space=vmem, size = 0x12000, scoped, tag = 'internal scratch']
  %s0 = inlined_call_operand.vmem [shape: f32[16,32], index: 0, kind: input, shape index: {}]
  %s1 = inlined_call_operand.vmem [shape: f32[1,32], index: 1, kind: input, shape index: {}]
  %s2 = inlined_call_operand.vmem [shape: f32[1,32], index: 2, kind: input, shape index: {}]
  %s3 = inlined_call_operand.vmem [shape: f32[16,32], index: 3, kind: output, shape index: {}]
  %s4 = sld [smem:[#allocation0]]
  $region22: #{transformer_forward.16} parent=0
    _
  %s6 = ssub.s32 1, %s4
  %s7 = scalar_select 0, %s6, %s4
  // Predicated region
  $region2: #{transformer_forward.16} parent=0 // pred_check
    _
  $region3: #{transformer_forward.16} parent=0 // pred_check_branch
    %9 = sbr.rel (0) target = $region5
  $region4: #{transformer_forward.16} parent=0 // pred_region
    _
  $region5: #{transformer_forward.16} parent=0 // pred_fallthru
    _
  // Predicated region
  $region6: #{transformer_forward.16} parent=0 // pred_check
    _
  $region7: #{transformer_forward.16} parent=0 // pred_check_branch
    %11 = sbr.rel (0) target = $region9
  $region8: #{transformer_forward.16} parent=0 // pred_region
    _
  $region9: #{transformer_forward.16} parent=0 // pred_fallthru
    _
  // Predicated region
  $region10: #{transformer_forward.16} parent=0 // pred_check
    _
  $region11: #{transformer_forward.16} parent=0 // pred_check_branch
    %13 = sbr.rel (0) target = $region13
  $region12: #{transformer_forward.16} parent=0 // pred_region
    _
  $region13: #{transformer_forward.16} parent=0 // pred_fallthru
    _
  %v14 = vld [vmem:[%s0] sm:$0xff]
  %v15 = vld [vmem:[%s0 + $0x8] sm:$0xff]
  %v16 = vld [vmem:[%s1] sm:$0x1]
  %v17 = vld [vmem:[%s2] sm:$0x1]
  %vm18 = vcmask 261120
  %v19 = vsel %vm18, %v14, 0.0
  %20 = vadd.xlane.f32.xlu0 %v19
  %v21 = vpop.xlane.xlu0 %20
  %v22 = vsel %vm18, %v15, 0.0
  %23 = vadd.xlane.f32.xlu0 %v22
  %v24 = vpop.xlane.xlu0 %23
  %v25 = vrcp.pop 32.0
  %v26 = vmul.f32 %v21, %v25
  %v27 = vmul.f32 %v24, %v25
  %v28 = vsub.f32 %v14, %v26
  %v29 = vsub.f32 %v15, %v27
  %v30 = vmul.f32 %v28, %v28
  %v31 = vmul.f32 %v29, %v29
  %v32 = vsel %vm18, %v30, 0.0
  %33 = vadd.xlane.f32.xlu0 %v32
  %v34 = vpop.xlane.xlu0 %33
  %v35 = vsel %vm18, %v31, 0.0
  %36 = vadd.xlane.f32.xlu0 %v35
  %v37 = vpop.xlane.xlu0 %36
  %v38 = vmul.f32 %v34, 0.032258064
  %v39 = vmul.f32 %v37, 0.032258064
  %v41 = vlaneseq
  %v42 = vshrl.u32 %v41, 7
  %v43 = vsub.s32 0, %v42
  %v44 = vrot.slane %v16, %v43
  %v46 = vmul.f32 %v44, %v28
  %v47 = vmul.f32 %v44, %v29
  %v48 = vrsqrt.pop %v38
  %v49 = vmul.f32 %v38, %v48
  %vm50 = vcmp.eq.f32.partialorder %v38, inf
  %v51 = vsel %vm50, %v38, %v49
  %vm52 = vcmp.eq.f32.partialorder %v38, 0.0
  %v53 = vand.u32 %v38, 2147483648
  %v54 = vsel %vm52, %v53, %v51
  %v55 = vrsqrt.pop %v39
  %v56 = vmul.f32 %v39, %v55
  %vm57 = vcmp.eq.f32.partialorder %v39, inf
  %v58 = vsel %vm57, %v39, %v56
  %vm59 = vcmp.eq.f32.partialorder %v39, 0.0
  %v60 = vand.u32 %v39, 2147483648
  %v61 = vsel %vm59, %v60, %v58
  %v62 = vadd.f32 %v54, 1e-06
  %v63 = vadd.f32 %v61, 1e-06
  %v64 = vrcp.pop %v62
  %v65 = vmul.f32 %v46, %v64
  %v66 = vrcp.pop %v63
  %v67 = vmul.f32 %v47, %v66
  %v69 = vlaneseq
  %v70 = vshrl.u32 %v69, 7
  %v71 = vsub.s32 0, %v70
  %v72 = vrot.slane %v17, %v71
  %v74 = vadd.f32 %v65, %v72
  %v75 = vadd.f32 %v67, %v72
  %76 = vst.msk [vmem:[%s3] sm:$0xff] %vm18, %v74
  %77 = vst.msk [vmem:[%s3 + $0x8] sm:$0xff] %vm18, %v75
  // Predicated region
  $region14: #{transformer_forward.16} parent=0 // pred_check
    _
  $region15: #{transformer_forward.16} parent=0 // pred_check_branch
    %79 = sbr.rel (0) target = $region17
  $region16: #{transformer_forward.16} parent=0 // pred_region
    _
  $region17: #{transformer_forward.16} parent=0 // pred_fallthru
    _
  // Predicated region
  $region18: #{transformer_forward.16} parent=0 // pred_check
    _
  $region19: #{transformer_forward.16} parent=0 // pred_check_branch
    %81 = sbr.rel (0) target = $region21
  $region20: #{transformer_forward.16} parent=0 // pred_region
    _
  $region21: #{transformer_forward.16} parent=0 // pred_fallthru
    _

// kernel: transformer_forward.13
$region0: #{transformer_forward.13}
  #allocation0 [shape = 'u32[]', space=smem, size = 0x4, offset = 0x4, fixed_abs, tag = 'smem constant byte address 0x4 - core index']
  #allocation1 [shape = 'u32[144,128]{1,0:T(1,128)}', space=vmem, size = 0x12000, scoped, tag = 'internal scratch']
  %s0 = inlined_call_operand.vmem [shape: f32[16,32], index: 0, kind: input, shape index: {}]
  %s1 = inlined_call_operand.vmem [shape: f32[1,32], index: 1, kind: input, shape index: {}]
  %s2 = inlined_call_operand.vmem [shape: f32[1,32], index: 2, kind: input, shape index: {}]
  %s3 = inlined_call_operand.vmem [shape: bf16[32,64], index: 3, kind: input, shape index: {}]
  %s4 = inlined_call_operand.vmem [shape: f32[1,64], index: 4, kind: input, shape index: {}]
  %s5 = inlined_call_operand.vmem [shape: bf16[64,32], index: 5, kind: input, shape index: {}]
  %s6 = inlined_call_operand.vmem [shape: f32[1,32], index: 6, kind: input, shape index: {}]
  %s7 = inlined_call_operand.vmem [shape: f32[16,32], index: 7, kind: output, shape index: {}]
  %s8 = sld [smem:[#allocation0]]
  $region38: #{transformer_forward.13} parent=0
    _
  %s10 = ssub.s32 1, %s8
  %s11 = scalar_select 0, %s10, %s8
  // Predicated region
  $region2: #{transformer_forward.13} parent=0 // pred_check
    _
  $region3: #{transformer_forward.13} parent=0 // pred_check_branch
    %13 = sbr.rel (0) target = $region5
  $region4: #{transformer_forward.13} parent=0 // pred_region
    _
  $region5: #{transformer_forward.13} parent=0 // pred_fallthru
    _
  // Predicated region
  $region6: #{transformer_forward.13} parent=0 // pred_check
    _
  $region7: #{transformer_forward.13} parent=0 // pred_check_branch
    %15 = sbr.rel (0) target = $region9
  $region8: #{transformer_forward.13} parent=0 // pred_region
    _
  $region9: #{transformer_forward.13} parent=0 // pred_fallthru
    _
  // Predicated region
  $region10: #{transformer_forward.13} parent=0 // pred_check
    _
  $region11: #{transformer_forward.13} parent=0 // pred_check_branch
    %17 = sbr.rel (0) target = $region13
  $region12: #{transformer_forward.13} parent=0 // pred_region
    _
  $region13: #{transformer_forward.13} parent=0 // pred_fallthru
    _
  // Predicated region
  $region14: #{transformer_forward.13} parent=0 // pred_check
    _
  $region15: #{transformer_forward.13} parent=0 // pred_check_branch
    %19 = sbr.rel (0) target = $region17
  $region16: #{transformer_forward.13} parent=0 // pred_region
    _
  $region17: #{transformer_forward.13} parent=0 // pred_fallthru
    _
  // Predicated region
  $region18: #{transformer_forward.13} parent=0 // pred_check
    _
  $region19: #{transformer_forward.13} parent=0 // pred_check_branch
    %21 = sbr.rel (0) target = $region21
  $region20: #{transformer_forward.13} parent=0 // pred_region
    _
  $region21: #{transformer_forward.13} parent=0 // pred_fallthru
    _
  // Predicated region
  $region22: #{transformer_forward.13} parent=0 // pred_check
    _
  $region23: #{transformer_forward.13} parent=0 // pred_check_branch
    %23 = sbr.rel (0) target = $region25
  $region24: #{transformer_forward.13} parent=0 // pred_region
    _
  $region25: #{transformer_forward.13} parent=0 // pred_fallthru
    _
  // Predicated region
  $region26: #{transformer_forward.13} parent=0 // pred_check
    _
  $region27: #{transformer_forward.13} parent=0 // pred_check_branch
    %25 = sbr.rel (0) target = $region29
  $region28: #{transformer_forward.13} parent=0 // pred_region
    _
  $region29: #{transformer_forward.13} parent=0 // pred_fallthru
    _
  %v27 = vld [vmem:[%s0] sm:$0xff]
  %v28 = vld [vmem:[%s0 + $0x8] sm:$0xff]
  %v29 = vld [vmem:[%s1] sm:$0x1]
  %v30 = vld [vmem:[%s2] sm:$0x1]
  %vm31 = vcmask 261120
  %v32 = vsel %vm31, %v27, 0.0
  %33 = vadd.xlane.f32.xlu0 %v32
  %v34 = vpop.xlane.xlu0 %33
  %v35 = vsel %vm31, %v28, 0.0
  %36 = vadd.xlane.f32.xlu0 %v35
  %v37 = vpop.xlane.xlu0 %36
  %v38 = vrcp.pop 32.0
  %v39 = vmul.f32 %v34, %v38
  %v40 = vmul.f32 %v37, %v38
  %v41 = vsub.f32 %v27, %v39
  %v42 = vsub.f32 %v28, %v40
  %v43 = vmul.f32 %v41, %v41
  %v44 = vmul.f32 %v42, %v42
  %v45 = vsel %vm31, %v43, 0.0
  %46 = vadd.xlane.f32.xlu0 %v45
  %v47 = vpop.xlane.xlu0 %46
  %v48 = vsel %vm31, %v44, 0.0
  %49 = vadd.xlane.f32.xlu0 %v48
  %v50 = vpop.xlane.xlu0 %49
  %v51 = vmul.f32 %v47, 0.032258064
  %v52 = vmul.f32 %v50, 0.032258064
  %v54 = vlaneseq
  %v55 = vshrl.u32 %v54, 7
  %v56 = vsub.s32 0, %v55
  %v57 = vrot.slane %v29, %v56
  %v59 = vmul.f32 %v57, %v41
  %v60 = vmul.f32 %v57, %v42
  %v61 = vrsqrt.pop %v51
  %v62 = vmul.f32 %v51, %v61
  %vm63 = vcmp.eq.f32.partialorder %v51, inf
  %v64 = vsel %vm63, %v51, %v62
  %vm65 = vcmp.eq.f32.partialorder %v51, 0.0
  %v66 = vand.u32 %v51, 2147483648
  %v67 = vsel %vm65, %v66, %v64
  %v68 = vrsqrt.pop %v52
  %v69 = vmul.f32 %v52, %v68
  %vm70 = vcmp.eq.f32.partialorder %v52, inf
  %v71 = vsel %vm70, %v52, %v69
  %vm72 = vcmp.eq.f32.partialorder %v52, 0.0
  %v73 = vand.u32 %v52, 2147483648
  %v74 = vsel %vm72, %v73, %v71
  %v75 = vadd.f32 %v67, 1e-06
  %v76 = vadd.f32 %v74, 1e-06
  %v77 = vrcp.pop %v75
  %v78 = vmul.f32 %v59, %v77
  %v79 = vrcp.pop %v76
  %v80 = vmul.f32 %v60, %v79
  %v82 = vlaneseq
  %v83 = vshrl.u32 %v82, 7
  %v84 = vsub.s32 0, %v83
  %v85 = vrot.slane %v30, %v84
  %v87 = vadd.f32 %v78, %v85
  %v88 = vadd.f32 %v80, %v85
  %v89 = vpack.c.bf16 %v88, %v87
  %v90 = vld [vmem:[%s3] sm:$0xf]
  %v91 = vld [vmem:[%s3 + $0x4] sm:$0xf]
  %v92 = vld [vmem:[%s3 + $0x8] sm:$0xf]
  %v93 = vld [vmem:[%s3 + $0xc] sm:$0xf]
  %v94 = vld [vmem:[%s4] sm:$0x1]
  %v96 = vlaneseq
  %v97 = vshrl.u32 %v96, 7
  %v98 = vsub.s32 0, %v97
  %v99 = vrot.slane %v94, %v98
  %v105 = vunpack.c.l.b16 %v90
  %v106 = vunpack.c.l.b16 %v91
  %v107 = vunpack.c.l.b16 %v92
  %v108 = vunpack.c.l.b16 %v93
  %v109 = vpack.c.b16 %v106, %v105
  %v110 = vpack.c.b16 %v108, %v107
  %v114 = vsel %vm31, %v89, 0
  %116 = vmatprep.subr.bf16.mxu0 0
  %117 = vmatpush1.bf16.msra.mxu0 %v109
  %118 = vmatprep.subr.bf16.mxu0 0
  %119 = vmatpush1.bf16.msra.mxu0 %v110
  %120 = vmatprep.subr.bf16.mxu0 0
  %121 = vmatpush1.bf16.msra.mxu0 0
  %122 = vmatprep.subr.bf16.mxu0 0
  %123 = vmatpush1.bf16.msra.mxu0 0
  %124 = vmatprep.subr.bf16.mxu0 0
  %125 = vmatpush1.bf16.msra.mxu0 0
  %126 = vmatprep.subr.bf16.mxu0 0
  %127 = vmatpush1.bf16.msra.mxu0 0
  %128 = vmatprep.subr.bf16.mxu0 0
  %129 = vmatpush1.bf16.msra.mxu0 0
  %130 = vmatprep.subr.bf16.mxu0 0
  %131 = vmatpush1.bf16.msra.mxu0 0
  %132 = vmatprep.subr.bf16.mxu0 0
  %133 = vmatpush1.bf16.msra.mxu0 0
  %134 = vmatprep.subr.bf16.mxu0 0
  %135 = vmatpush1.bf16.msra.mxu0 0
  %136 = vmatprep.subr.bf16.mxu0 0
  %137 = vmatpush1.bf16.msra.mxu0 0
  %138 = vmatprep.subr.bf16.mxu0 0
  %139 = vmatpush1.bf16.msra.mxu0 0
  %140 = vmatprep.subr.bf16.mxu0 0
  %141 = vmatpush1.bf16.msra.mxu0 0
  %142 = vmatprep.subr.bf16.mxu0 0
  %143 = vmatpush1.bf16.msra.mxu0 0
  %144 = vmatprep.subr.bf16.mxu0 0
  %145 = vmatpush1.bf16.msra.mxu0 0
  %146 = vmatprep.subr.bf16.mxu0 0
  %147 = vmatpush1.bf16.msra.mxu0 0
  %148 = vmatprep.mubr.bf16.mxu0 0
  %149 = vmatmul.mubr.bf16.gmra.mrb[0].mxu0 %v114
  %v150 = vpop.f32.mrb[0].mxu0
  %v151 = vadd.f32 %v99, %v150
  %v152 = vpop.f32.mrb[0].mxu0
  %v153 = vpop.f32.mrb[0].mxu0
  %v154 = vadd.f32 %v99, %v153
  %v155 = vpop.f32.mrb[0].mxu0
  %156 = vdwg.mxu0
  %v157 = vmax.f32 %v151, 0.0
  %v158 = vmax.f32 %v154, 0.0
  %v159 = vpack.c.bf16 %v158, %v157
  %v160 = vld [vmem:[%s5] sm:$0xf]
  %v161 = vld [vmem:[%s5 + $0x4] sm:$0xf]
  %v162 = vld [vmem:[%s5 + $0x8] sm:$0xf]
  %v163 = vld [vmem:[%s5 + $0xc] sm:$0xf]
  %v164 = vld [vmem:[%s5 + $0x10] sm:$0xf]
  %v165 = vld [vmem:[%s5 + $0x14] sm:$0xf]
  %v166 = vld [vmem:[%s5 + $0x18] sm:$0xf]
  %v167 = vld [vmem:[%s5 + $0x1c] sm:$0xf]
  %v168 = vld [vmem:[%s6] sm:$0x1]
  %v170 = vlaneseq
  %v171 = vshrl.u32 %v170, 7
  %v172 = vsub.s32 0, %v171
  %v173 = vrot.slane %v168, %v172
  %v183 = vunpack.c.l.b16 %v160
  %v184 = vunpack.c.l.b16 %v161
  %v185 = vunpack.c.l.b16 %v162
  %v186 = vunpack.c.l.b16 %v163
  %v187 = vunpack.c.l.b16 %v164
  %v188 = vunpack.c.l.b16 %v165
  %v189 = vunpack.c.l.b16 %v166
  %v190 = vunpack.c.l.b16 %v167
  %v191 = vpack.c.b16 %v184, %v183
  %v192 = vpack.c.b16 %v186, %v185
  %v193 = vpack.c.b16 %v188, %v187
  %v194 = vpack.c.b16 %v190, %v189
  %vm199 = vcmask 523264
  %v201 = vsel %vm199, %v159, 0
  %203 = vmatprep.subr.bf16.mxu0 0
  %204 = vmatpush1.bf16.msra.mxu0 %v191
  %205 = vmatprep.subr.bf16.mxu0 0
  %206 = vmatpush1.bf16.msra.mxu0 %v192
  %207 = vmatprep.subr.bf16.mxu0 0
  %208 = vmatpush1.bf16.msra.mxu0 %v193
  %209 = vmatprep.subr.bf16.mxu0 0
  %210 = vmatpush1.bf16.msra.mxu0 %v194
  %211 = vmatprep.subr.bf16.mxu0 0
  %212 = vmatpush1.bf16.msra.mxu0 0
  %213 = vmatprep.subr.bf16.mxu0 0
  %214 = vmatpush1.bf16.msra.mxu0 0
  %215 = vmatprep.subr.bf16.mxu0 0
  %216 = vmatpush1.bf16.msra.mxu0 0
  %217 = vmatprep.subr.bf16.mxu0 0
  %218 = vmatpush1.bf16.msra.mxu0 0
  %219 = vmatprep.subr.bf16.mxu0 0
  %220 = vmatpush1.bf16.msra.mxu0 0
  %221 = vmatprep.subr.bf16.mxu0 0
  %222 = vmatpush1.bf16.msra.mxu0 0
  %223 = vmatprep.subr.bf16.mxu0 0
  %224 = vmatpush1.bf16.msra.mxu0 0
  %225 = vmatprep.subr.bf16.mxu0 0
  %226 = vmatpush1.bf16.msra.mxu0 0
  %227 = vmatprep.subr.bf16.mxu0 0
  %228 = vmatpush1.bf16.msra.mxu0 0
  %229 = vmatprep.subr.bf16.mxu0 0
  %230 = vmatpush1.bf16.msra.mxu0 0
  %231 = vmatprep.subr.bf16.mxu0 0
  %232 = vmatpush1.bf16.msra.mxu0 0
  %233 = vmatprep.subr.bf16.mxu0 0
  %234 = vmatpush1.bf16.msra.mxu0 0
  %235 = vmatprep.mubr.bf16.mxu0 0
  %236 = vmatmul.mubr.bf16.gmra.mrb[0].mxu0 %v201
  %v237 = vpop.f32.mrb[0].mxu0
  %v238 = vadd.f32 %v173, %v237
  %v239 = vpop.f32.mrb[0].mxu0
  %v240 = vpop.f32.mrb[0].mxu0
  %v241 = vadd.f32 %v173, %v240
  %v242 = vpop.f32.mrb[0].mxu0
  %243 = vdwg.mxu0
  %v244 = vadd.f32 %v27, %v238
  %v245 = vadd.f32 %v28, %v241
  %246 = vst.msk [vmem:[%s7] sm:$0xff] %vm31, %v244
  %247 = vst.msk [vmem:[%s7 + $0x8] sm:$0xff] %vm31, %v245
  // Predicated region
  $region30: #{transformer_forward.13} parent=0 // pred_check
    _
  $region31: #{transformer_forward.13} parent=0 // pred_check_branch
    %249 = sbr.rel (0) target = $region33
  $region32: #{transformer_forward.13} parent=0 // pred_region
    _
  $region33: #{transformer_forward.13} parent=0 // pred_fallthru
    _
  // Predicated region
  $region34: #{transformer_forward.13} parent=0 // pred_check
    _
  $region35: #{transformer_forward.13} parent=0 // pred_check_branch
    %251 = sbr.rel (0) target = $region37
  $region36: #{transformer_forward.13} parent=0 // pred_region
    _
  $region37: #{transformer_forward.13} parent=0 // pred_fallthru
    _

// kernel: transformer_forward.12
$region0: #{transformer_forward.12}
  #allocation0 [shape = 'u32[]', space=smem, size = 0x4, offset = 0x4, fixed_abs, tag = 'smem constant byte address 0x4 - core index']
  #allocation1 [shape = 'u32[144,128]{1,0:T(1,128)}', space=vmem, size = 0x12000, scoped, tag = 'internal scratch']
  %s0 = inlined_call_operand.vmem [shape: f32[2,8,32], index: 0, kind: input, shape index: {}]
  %s1 = inlined_call_operand.vmem [shape: f32[2,1,8], index: 1, kind: input, shape index: {}]
  %s2 = inlined_call_operand.vmem [shape: f32[1,32], index: 2, kind: input, shape index: {}]
  %s3 = inlined_call_operand.vmem [shape: f32[1,32], index: 3, kind: input, shape index: {}]
  %s4 = inlined_call_operand.vmem [shape: bf16[32,96], index: 4, kind: input, shape index: {}]
  %s5 = inlined_call_operand.vmem [shape: f32[1,96], index: 5, kind: input, shape index: {}]
  %s6 = inlined_call_operand.vmem [shape: bf16[32,32], index: 6, kind: input, shape index: {}]
  %s7 = inlined_call_operand.vmem [shape: f32[1,32], index: 7, kind: input, shape index: {}]
  %s8 = inlined_call_operand.vmem [shape: f32[2,8,32], index: 8, kind: output, shape index: {}]
  %s9 = sld [smem:[#allocation0]]
  $region65: #{transformer_forward.12} parent=0
    _
  %s11 = ssub.s32 1, %s9
  %s12 = scalar_select 0, %s11, %s9
  loop: start=0, step=1, limit=4
  $region2: #{transformer_forward.12} parent=0 // loop_pre_header
    _
  $region3: #{transformer_forward.12} parent=0 // loop_header
    %s14 = sphi 0, %s18
    %p15 = scmp.ge.s32.totalorder %s14, 4
    %s24 = sphi 0, %s26
    %s27 = sphi 0, %s24
    %s28 = sphi 0, %s27
    %s44 = sphi 0, %s28
    %s50 = sphi 0, %s52
    %s53 = sphi 0, %s50
    %s54 = sphi 0, %s53
    %s70 = sphi 0, %s54
    %s74 = sphi 0, %s74
    %s76 = sphi 0, %s74
    %s77 = sphi 0, %s76
    %s91 = sphi 0, %s77
    %s95 = sphi 0, %s95
    %s97 = sphi 0, %s95
    %s98 = sphi 0, %s97
    %s112 = sphi 0, %s98
    %s116 = sphi 0, %s116
    %s118 = sphi 0, %s116
    %s119 = sphi 0, %s118
    %s133 = sphi 0, %s119
    %s137 = sphi 0, %s137
    %s139 = sphi 0, %s137
    %s140 = sphi 0, %s139
    %s154 = sphi 0, %s140
    %s158 = sphi 0, %s158
    %s160 = sphi 0, %s158
    %s161 = sphi 0, %s160
    %s175 = sphi 0, %s161
    %s179 = sphi 0, %s179
    %s181 = sphi 0, %s179
    %s182 = sphi 0, %s181
    %s196 = sphi 0, %s182
    %s202 = sphi 0, %s204
    %s205 = sphi 0, %s202
    %s206 = sphi 0, %s205
    %s222 = sphi 0, %s206
  $region4: #{transformer_forward.12} parent=0 // loop_header_branch
    %17 = sbr.rel (%p15) target = $region8
  $region5: #{transformer_forward.12} parent=0 // loop_body
    %s19 = ssub.s32 %s14, 1
    %s20 = ssub.s32 %s14, 2
    %s21 = sadd.s32 %s14, 1
    %s22 = ssub.s32 %s14, %s21
    %p23 = scmp.eq.s32.totalorder %s22, 0
    %s25 = sadd.s32 %s24, 1
    %s26 = scalar_select %p23, %s24, %s25
    %p29 = pneg %p23
    %p30 = scmp.eq.s32.totalorder %s14, 1
    %p31 = por %p29, %p30
    %p32 = scmp.ne.s32.totalorder %s24, %s27
    %p33 = scmp.eq.s32.totalorder %s14, 0
    %p34 = por %p32, %p33
    %p35 = scmp.ne.s32.totalorder %s24, %s27
    %p36 = scmp.eq.s32.totalorder %s19, 1
    %p37 = por %p35, %p36
    %p38 = scmp.ne.s32.totalorder %s27, %s28
    %p39 = scmp.eq.s32.totalorder %s19, 0
    %p40 = por %p38, %p39
    %p41 = scmp.ne.s32.totalorder %s27, %s28
    %p42 = scmp.eq.s32.totalorder %s20, 1
    %p43 = por %p41, %p42
    %p45 = scmp.ne.s32.totalorder %s28, %s44
    %p46 = scmp.eq.s32.totalorder %s20, 0
    %p47 = por %p45, %p46
    %s48 = ssub.s32 %s14, %s21
    %p49 = scmp.eq.s32.totalorder %s48, 0
    %s51 = sadd.s32 %s50, 1
    %s52 = scalar_select %p49, %s50, %s51
    %p55 = pneg %p49
    %p56 = scmp.eq.s32.totalorder %s14, 1
    %p57 = por %p55, %p56
    %p58 = scmp.ne.s32.totalorder %s50, %s53
    %p59 = scmp.eq.s32.totalorder %s14, 0
    %p60 = por %p58, %p59
    %p61 = scmp.ne.s32.totalorder %s50, %s53
    %p62 = scmp.eq.s32.totalorder %s19, 1
    %p63 = por %p61, %p62
    %p64 = scmp.ne.s32.totalorder %s53, %s54
    %p65 = scmp.eq.s32.totalorder %s19, 0
    %p66 = por %p64, %p65
    %p67 = scmp.ne.s32.totalorder %s53, %s54
    %p68 = scmp.eq.s32.totalorder %s20, 1
    %p69 = por %p67, %p68
    %p71 = scmp.ne.s32.totalorder %s54, %s70
    %p72 = scmp.eq.s32.totalorder %s20, 0
    %p73 = por %p71, %p72
    %s75 = sadd.s32 %s74, 1
    %p78 = scmp.eq.s32.totalorder %s14, 1
    %p79 = scmp.ne.s32.totalorder %s74, %s76
    %p80 = scmp.eq.s32.totalorder %s14, 0
    %p81 = por %p79, %p80
    %p82 = scmp.ne.s32.totalorder %s74, %s76
    %p83 = scmp.eq.s32.totalorder %s19, 1
    %p84 = por %p82, %p83
    %p85 = scmp.ne.s32.totalorder %s76, %s77
    %p86 = scmp.eq.s32.totalorder %s19, 0
    %p87 = por %p85, %p86
    %p88 = scmp.ne.s32.totalorder %s76, %s77
    %p89 = scmp.eq.s32.totalorder %s20, 1
    %p90 = por %p88, %p89
    %p92 = scmp.ne.s32.totalorder %s77, %s91
    %p93 = scmp.eq.s32.totalorder %s20, 0
    %p94 = por %p92, %p93
    %s96 = sadd.s32 %s95, 1
    %p99 = scmp.eq.s32.totalorder %s14, 1
    %p100 = scmp.ne.s32.totalorder %s95, %s97
    %p101 = scmp.eq.s32.totalorder %s14, 0
    %p102 = por %p100, %p101
    %p103 = scmp.ne.s32.totalorder %s95, %s97
    %p104 = scmp.eq.s32.totalorder %s19, 1
    %p105 = por %p103, %p104
    %p106 = scmp.ne.s32.totalorder %s97, %s98
    %p107 = scmp.eq.s32.totalorder %s19, 0
    %p108 = por %p106, %p107
    %p109 = scmp.ne.s32.totalorder %s97, %s98
    %p110 = scmp.eq.s32.totalorder %s20, 1
    %p111 = por %p109, %p110
    %p113 = scmp.ne.s32.totalorder %s98, %s112
    %p114 = scmp.eq.s32.totalorder %s20, 0
    %p115 = por %p113, %p114
    %s117 = sadd.s32 %s116, 1
    %p120 = scmp.eq.s32.totalorder %s14, 1
    %p121 = scmp.ne.s32.totalorder %s116, %s118
    %p122 = scmp.eq.s32.totalorder %s14, 0
    %p123 = por %p121, %p122
    %p124 = scmp.ne.s32.totalorder %s116, %s118
    %p125 = scmp.eq.s32.totalorder %s19, 1
    %p126 = por %p124, %p125
    %p127 = scmp.ne.s32.totalorder %s118, %s119
    %p128 = scmp.eq.s32.totalorder %s19, 0
    %p129 = por %p127, %p128
    %p130 = scmp.ne.s32.totalorder %s118, %s119
    %p131 = scmp.eq.s32.totalorder %s20, 1
    %p132 = por %p130, %p131
    %p134 = scmp.ne.s32.totalorder %s119, %s133
    %p135 = scmp.eq.s32.totalorder %s20, 0
    %p136 = por %p134, %p135
    %s138 = sadd.s32 %s137, 1
    %p141 = scmp.eq.s32.totalorder %s14, 1
    %p142 = scmp.ne.s32.totalorder %s137, %s139
    %p143 = scmp.eq.s32.totalorder %s14, 0
    %p144 = por %p142, %p143
    %p145 = scmp.ne.s32.totalorder %s137, %s139
    %p146 = scmp.eq.s32.totalorder %s19, 1
    %p147 = por %p145, %p146
    %p148 = scmp.ne.s32.totalorder %s139, %s140
    %p149 = scmp.eq.s32.totalorder %s19, 0
    %p150 = por %p148, %p149
    %p151 = scmp.ne.s32.totalorder %s139, %s140
    %p152 = scmp.eq.s32.totalorder %s20, 1
    %p153 = por %p151, %p152
    %p155 = scmp.ne.s32.totalorder %s140, %s154
    %p156 = scmp.eq.s32.totalorder %s20, 0
    %p157 = por %p155, %p156
    %s159 = sadd.s32 %s158, 1
    %p162 = scmp.eq.s32.totalorder %s14, 1
    %p163 = scmp.ne.s32.totalorder %s158, %s160
    %p164 = scmp.eq.s32.totalorder %s14, 0
    %p165 = por %p163, %p164
    %p166 = scmp.ne.s32.totalorder %s158, %s160
    %p167 = scmp.eq.s32.totalorder %s19, 1
    %p168 = por %p166, %p167
    %p169 = scmp.ne.s32.totalorder %s160, %s161
    %p170 = scmp.eq.s32.totalorder %s19, 0
    %p171 = por %p169, %p170
    %p172 = scmp.ne.s32.totalorder %s160, %s161
    %p173 = scmp.eq.s32.totalorder %s20, 1
    %p174 = por %p172, %p173
    %p176 = scmp.ne.s32.totalorder %s161, %s175
    %p177 = scmp.eq.s32.totalorder %s20, 0
    %p178 = por %p176, %p177
    %s180 = sadd.s32 %s179, 1
    %p183 = scmp.eq.s32.totalorder %s14, 1
    %p184 = scmp.ne.s32.totalorder %s179, %s181
    %p185 = scmp.eq.s32.totalorder %s14, 0
    %p186 = por %p184, %p185
    %p187 = scmp.ne.s32.totalorder %s179, %s181
    %p188 = scmp.eq.s32.totalorder %s19, 1
    %p189 = por %p187, %p188
    %p190 = scmp.ne.s32.totalorder %s181, %s182
    %p191 = scmp.eq.s32.totalorder %s19, 0
    %p192 = por %p190, %p191
    %p193 = scmp.ne.s32.totalorder %s181, %s182
    %p194 = scmp.eq.s32.totalorder %s20, 1
    %p195 = por %p193, %p194
    %p197 = scmp.ne.s32.totalorder %s182, %s196
    %p198 = scmp.eq.s32.totalorder %s20, 0
    %p199 = por %p197, %p198
    %s200 = ssub.s32 %s14, %s21
    %p201 = scmp.eq.s32.totalorder %s200, 0
    %s203 = sadd.s32 %s202, 1
    %s204 = scalar_select %p201, %s202, %s203
    %p207 = pneg %p201
    %p208 = scmp.eq.s32.totalorder %s14, 1
    %p209 = por %p207, %p208
    %p210 = scmp.ne.s32.totalorder %s202, %s205
    %p211 = scmp.eq.s32.totalorder %s14, 0
    %p212 = por %p210, %p211
    %p213 = scmp.ne.s32.totalorder %s202, %s205
    %p214 = scmp.eq.s32.totalorder %s19, 1
    %p215 = por %p213, %p214
    %p216 = scmp.ne.s32.totalorder %s205, %s206
    %p217 = scmp.eq.s32.totalorder %s19, 0
    %p218 = por %p216, %p217
    %p219 = scmp.ne.s32.totalorder %s205, %s206
    %p220 = scmp.eq.s32.totalorder %s20, 1
    %p221 = por %p219, %p220
    %p223 = scmp.ne.s32.totalorder %s206, %s222
    %p224 = scmp.eq.s32.totalorder %s20, 0
    %p225 = por %p223, %p224
    %p226 = scmp.le.s32.totalorder 1, %s14
    %p227 = scmp.lt.s32.totalorder %s14, 3
    %p228 = pnand %p226, %p227
    %p229 = pneg %p228
    // Predicated region
    $region9: #{transformer_forward.12} parent=5 // pred_check
      _
    $region10: #{transformer_forward.12} parent=5 // pred_check_branch
      %231 = sbr.rel (%p228) target = $region12
    $region11: #{transformer_forward.12} parent=5 // pred_region
      %s232 = ssub.s32 %s14, 1
      // Predicated region
      $region13: #{transformer_forward.12} parent=11 // pred_check
        %p233 = pneg %p87
      $region14: #{transformer_forward.12} parent=11 // pred_check_branch
        %235 = sbr.rel (%p233) target = $region16
      $region15: #{transformer_forward.12} parent=11 // pred_region
        _
      $region16: #{transformer_forward.12} parent=11 // pred_fallthru
        _
      // Predicated region
      $region17: #{transformer_forward.12} parent=11 // pred_check
        %p236 = pneg %p108
      $region18: #{transformer_forward.12} parent=11 // pred_check_branch
        %238 = sbr.rel (%p236) target = $region20
      $region19: #{transformer_forward.12} parent=11 // pred_region
        _
      $region20: #{transformer_forward.12} parent=11 // pred_fallthru
        _
      // Predicated region
      $region21: #{transformer_forward.12} parent=11 // pred_check
        %p239 = pneg %p129
      $region22: #{transformer_forward.12} parent=11 // pred_check_branch
        %241 = sbr.rel (%p239) target = $region24
      $region23: #{transformer_forward.12} parent=11 // pred_region
        _
      $region24: #{transformer_forward.12} parent=11 // pred_fallthru
        _
      // Predicated region
      $region25: #{transformer_forward.12} parent=11 // pred_check
        %p242 = pneg %p150
      $region26: #{transformer_forward.12} parent=11 // pred_check_branch
        %244 = sbr.rel (%p242) target = $region28
      $region27: #{transformer_forward.12} parent=11 // pred_region
        _
      $region28: #{transformer_forward.12} parent=11 // pred_fallthru
        _
      // Predicated region
      $region29: #{transformer_forward.12} parent=11 // pred_check
        %p245 = pneg %p171
      $region30: #{transformer_forward.12} parent=11 // pred_check_branch
        %247 = sbr.rel (%p245) target = $region32
      $region31: #{transformer_forward.12} parent=11 // pred_region
        _
      $region32: #{transformer_forward.12} parent=11 // pred_fallthru
        _
      // Predicated region
      $region33: #{transformer_forward.12} parent=11 // pred_check
        %p248 = pneg %p192
      $region34: #{transformer_forward.12} parent=11 // pred_check_branch
        %250 = sbr.rel (%p248) target = $region36
      $region35: #{transformer_forward.12} parent=11 // pred_region
        _
      $region36: #{transformer_forward.12} parent=11 // pred_fallthru
        _
    $region12: #{transformer_forward.12} parent=5 // pred_fallthru
      _
    %p251 = scmp.lt.s32.totalorder %s14, 2
    // Predicated region
    $region37: #{transformer_forward.12} parent=5 // pred_check
      %p252 = pneg %p251
    $region38: #{transformer_forward.12} parent=5 // pred_check_branch
      %254 = sbr.rel (%p252) target = $region40
    $region39: #{transformer_forward.12} parent=5 // pred_region
      // Predicated region
      $region41: #{transformer_forward.12} parent=39 // pred_check
        %p255 = pneg %p34
      $region42: #{transformer_forward.12} parent=39 // pred_check_branch
        %257 = sbr.rel (%p255) target = $region44
      $region43: #{transformer_forward.12} parent=39 // pred_region
        %p258 = scmp.lt.s32.totalorder %s14, 1
        %s259 = scalar_select %p258, %s14, 1
        %s260 = smul.addr %s259, 8
        %s261 = scalar_lea.vmem %s0, %s260
      $region44: #{transformer_forward.12} parent=39 // pred_fallthru
        _
      // Predicated region
      $region45: #{transformer_forward.12} parent=39 // pred_check
        %p262 = pneg %p60
      $region46: #{transformer_forward.12} parent=39 // pred_check_branch
        %264 = sbr.rel (%p262) target = $region48
      $region47: #{transformer_forward.12} parent=39 // pred_region
        %p265 = scmp.lt.s32.totalorder %s14, 1
        %s266 = scalar_select %p265, %s14, 1
        %s267 = scalar_lea.vmem %s1, %s266
      $region48: #{transformer_forward.12} parent=39 // pred_fallthru
        _
    $region40: #{transformer_forward.12} parent=5 // pred_fallthru
      _
    %p268 = scmp.le.s32.totalorder 1, %s14
    %p269 = scmp.lt.s32.totalorder %s14, 3
    %p270 = pnand %p268, %p269
    %p271 = pneg %p270
    // Predicated region
    $region49: #{transformer_forward.12} parent=5 // pred_check
      _
    $region50: #{transformer_forward.12} parent=5 // pred_check_branch
      %273 = sbr.rel (%p270) target = $region52
    $region51: #{transformer_forward.12} parent=5 // pred_region
      %s274 = ssub.s32 %s14, 1
      %p275 = scmp.lt.s32.totalorder %s19, 1
      %s276 = scalar_select %p275, %s19, 1
      %s277 = smul.addr %s276, 8
      %s278 = scalar_lea.vmem %s0, %s277
      %p279 = pneg %p40
      %p280 = pneg %p37
      %p281 = scmp.lt.s32.totalorder %s19, 1
      %s282 = scalar_select %p281, %s19, 1
      %s283 = scalar_lea.vmem %s1, %s282
      %p284 = pneg %p66
      %p285 = pneg %p63
      %p286 = pneg %p87
      %p287 = pneg %p84
      %p288 = pneg %p108
      %p289 = pneg %p105
      %p290 = pneg %p129
      %p291 = pneg %p126
      %p292 = pneg %p150
      %p293 = pneg %p147
      %p294 = pneg %p171
      %p295 = pneg %p168
      %p296 = pneg %p192
      %p297 = pneg %p189
      %p298 = pneg %p218
      %p299 = pneg %p215
      %p300 = scmp.lt.s32.totalorder %s19, 1
      %s301 = scalar_select %p300, %s19, 1
      %s302 = smul.addr %s301, 8
      %s303 = scalar_lea.vmem %s8, %s302
      %p304 = scmp.lt.s32.totalorder %s19, 1
      %s305 = scalar_select %p304, %s19, 1
      %s306 = smul.addr %s305, 8
      %s307 = scalar_lea.vmem %s0, %s306
      %p308 = scmp.lt.s32.totalorder %s19, 1
      %s309 = scalar_select %p308, %s19, 1
      %s310 = scalar_lea.vmem %s1, %s309
      %p311 = scmp.lt.s32.totalorder %s19, 1
      %s312 = scalar_select %p311, %s19, 1
      %s313 = smul.addr %s312, 8
      %s314 = scalar_lea.vmem %s8, %s313
      %v316 = vld [vmem:[%s307] sm:$0xff]
      %v317 = vld [vmem:[%s2] sm:$0x1]
      %v318 = vld [vmem:[%s3] sm:$0x1]
      %vm319 = vcmask 261120
      %v320 = vsel %vm319, %v316, 0.0
      %321 = vadd.xlane.f32.xlu0 %v320
      %v322 = vpop.xlane.xlu0 %321
      %v323 = vrcp.pop 32.0
      %v324 = vmul.f32 %v322, %v323
      %v325 = vsub.f32 %v316, %v324
      %v326 = vmul.f32 %v325, %v325
      %v327 = vsel %vm319, %v326, 0.0
      %328 = vadd.xlane.f32.xlu0 %v327
      %v329 = vpop.xlane.xlu0 %328
      %v330 = vmul.f32 %v329, 0.032258064
      %v332 = vlaneseq
      %v333 = vshrl.u32 %v332, 7
      %v334 = vsub.s32 0, %v333
      %v335 = vrot.slane %v317, %v334
      %v337 = vmul.f32 %v335, %v325
      %v338 = vrsqrt.pop %v330
      %v339 = vmul.f32 %v330, %v338
      %vm340 = vcmp.eq.f32.partialorder %v330, inf
      %v341 = vsel %vm340, %v330, %v339
      %vm342 = vcmp.eq.f32.partialorder %v330, 0.0
      %v343 = vand.u32 %v330, 2147483648
      %v344 = vsel %vm342, %v343, %v341
      %v345 = vadd.f32 %v344, 1e-06
      %v346 = vrcp.pop %v345
      %v347 = vmul.f32 %v337, %v346
      %v349 = vlaneseq
      %v350 = vshrl.u32 %v349, 7
      %v351 = vsub.s32 0, %v350
      %v352 = vrot.slane %v318, %v351
      %v354 = vadd.f32 %v347, %v352
      %v355 = vpack.c.bf16 %v354, %v354
      %v356 = vld [vmem:[%s4] sm:$0xf]
      %v357 = vld [vmem:[%s4 + $0x4] sm:$0xf]
      %v358 = vld [vmem:[%s4 + $0x8] sm:$0xf]
      %v359 = vld [vmem:[%s4 + $0xc] sm:$0xf]
      %v360 = vld [vmem:[%s5] sm:$0x1]
      %v362 = vlaneseq
      %v363 = vshrl.u32 %v362, 7
      %v364 = vsub.s32 0, %v363
      %v365 = vrot.slane %v360, %v364
      %v371 = vunpack.c.l.b16 %v356
      %v372 = vunpack.c.l.b16 %v357
      %v373 = vunpack.c.l.b16 %v358
      %v374 = vunpack.c.l.b16 %v359
      %v375 = vpack.c.b16 %v372, %v371
      %v376 = vpack.c.b16 %v374, %v373
      %v380 = vsel %vm319, %v355, 0
      %382 = vmatprep.subr.bf16.mxu0 0
      %383 = vmatpush1.bf16.msra.mxu0 %v375
      %384 = vmatprep.subr.bf16.mxu0 0
      %385 = vmatpush1.bf16.msra.mxu0 %v376
      %386 = vmatprep.subr.bf16.mxu0 0
      %387 = vmatpush1.bf16.msra.mxu0 0
      %388 = vmatprep.subr.bf16.mxu0 0
      %389 = vmatpush1.bf16.msra.mxu0 0
      %390 = vmatprep.subr.bf16.mxu0 0
      %391 = vmatpush1.bf16.msra.mxu0 0
      %392 = vmatprep.subr.bf16.mxu0 0
      %393 = vmatpush1.bf16.msra.mxu0 0
      %394 = vmatprep.subr.bf16.mxu0 0
      %395 = vmatpush1.bf16.msra.mxu0 0
      %396 = vmatprep.subr.bf16.mxu0 0
      %397 = vmatpush1.bf16.msra.mxu0 0
      %398 = vmatprep.subr.bf16.mxu0 0
      %399 = vmatpush1.bf16.msra.mxu0 0
      %400 = vmatprep.subr.bf16.mxu0 0
      %401 = vmatpush1.bf16.msra.mxu0 0
      %402 = vmatprep.subr.bf16.mxu0 0
      %403 = vmatpush1.bf16.msra.mxu0 0
      %404 = vmatprep.subr.bf16.mxu0 0
      %405 = vmatpush1.bf16.msra.mxu0 0
      %406 = vmatprep.subr.bf16.mxu0 0
      %407 = vmatpush1.bf16.msra.mxu0 0
      %408 = vmatprep.subr.bf16.mxu0 0
      %409 = vmatpush1.bf16.msra.mxu0 0
      %410 = vmatprep.subr.bf16.mxu0 0
      %411 = vmatpush1.bf16.msra.mxu0 0
      %412 = vmatprep.subr.bf16.mxu0 0
      %413 = vmatpush1.bf16.msra.mxu0 0
      %414 = vmatprep.mubr.bf16.mxu0 0
      %415 = vmatmul.mubr.bf16.gmra.mrb[0].mxu0 %v380
      %v416 = vpop.f32.mrb[0].mxu0
      %v417 = vadd.f32 %v365, %v416
      %v418 = vpop.f32.mrb[0].mxu0
      %v419 = vpop.f32.mrb[0].mxu0
      %v420 = vpop.f32.mrb[0].mxu0
      %421 = vdwg.mxu0
      %v422 = vld [vmem:[%s310] sm:$0x1]
      %v423 = vmul.f32 %v417, 0.35355338
      %v424 = vpack.c.bf16 %v423, %v423
      %v425 = vpack.c.bf16 %v417, %v417
      %427 = vrot.lane.b32.xlu0 %v425, 96
      %v428 = vpop.permute.xlu0 %427
      %vm429 = vcmask 64512
      %v431 = vsel %vm429, %v424, 0
      %v434 = vsel %vm429, %v428, 0
      %436 = vmatprep.subr.bf16.mxu0 0
      %437 = vmatpush1.bf16.xpose.msra.mxu0 %v434
      %438 = vmatprep.subr.bf16.mxu0 0
      %439 = vmatpush1.bf16.xpose.msra.mxu0 0
      %440 = vmatprep.subr.bf16.mxu0 0
      %441 = vmatpush1.bf16.xpose.msra.mxu0 0
      %442 = vmatprep.subr.bf16.mxu0 0
      %443 = vmatpush1.bf16.xpose.msra.mxu0 0
      %444 = vmatprep.subr.bf16.mxu0 0
      %445 = vmatpush1.bf16.xpose.msra.mxu0 0
      %446 = vmatprep.subr.bf16.mxu0 0
      %447 = vmatpush1.bf16.xpose.msra.mxu0 0
      %448 = vmatprep.subr.bf16.mxu0 0
      %449 = vmatpush1.bf16.xpose.msra.mxu0 0
      %450 = vmatprep.subr.bf16.mxu0 0
      %451 = vmatpush1.bf16.xpose.msra.mxu0 0
      %452 = vmatprep.subr.bf16.mxu0 0
      %453 = vmatpush1.bf16.xpose.msra.mxu0 0
      %454 = vmatprep.subr.bf16.mxu0 0
      %455 = vmatpush1.bf16.xpose.msra.mxu0 0
      %456 = vmatprep.subr.bf16.mxu0 0
      %457 = vmatpush1.bf16.xpose.msra.mxu0 0
      %458 = vmatprep.subr.bf16.mxu0 0
      %459 = vmatpush1.bf16.xpose.msra.mxu0 0
      %460 = vmatprep.subr.bf16.mxu0 0
      %461 = vmatpush1.bf16.xpose.msra.mxu0 0
      %462 = vmatprep.subr.bf16.mxu0 0
      %463 = vmatpush1.bf16.xpose.msra.mxu0 0
      %464 = vmatprep.subr.bf16.mxu0 0
      %465 = vmatpush1.bf16.xpose.msra.mxu0 0
      %466 = vmatprep.subr.bf16.mxu0 0
      %467 = vmatpush1.bf16.xpose.msra.mxu0 0
      %468 = vmatprep.mubr.bf16.mxu0 0
      %469 = vmatmul.mubr.bf16.gmra.mrb[0].mxu0 %v431
      %v470 = vpop.f32.mrb[0].mxu0
      %v471 = vadd.f32 0.0, %v470
      %v472 = vpop.f32.mrb[0].mxu0
      %v473 = vpop.f32.mrb[0].mxu0
      %v474 = vpop.f32.mrb[0].mxu0
      %475 = vdwg.mxu0
      %vm476 = vcmp.eq.f32.partialorder %v422, 0.0
      %v477 = vsel %vm476, 1, 0
      %v478 = vlaneseq
      %v479 = vshrl.u32 %v478, 7
      %v480 = vsub.s32 0, %v479
      %v481 = vrot.slane %v477, %v480
      %vm482 = vcmp.eq.s32.totalorder %v481, 1
      %v483 = vsel %vm482, -1e+30, %v471
      %v484 = vsel %vm429, %v483, -inf
      %485 = vmax.xlane.f32.xlu0 %v484
      %v486 = vpop.xlane.xlu0 %485
      %v487 = vsub.f32 %v483, %v486
      %v488 = vmul.f32 %v487, 1.442695
      %v489 = vpow.pop %v488
      %v490 = vsel %vm429, %v489, 0.0
      %491 = vadd.xlane.f32.xlu0 %v490
      %v492 = vpop.xlane.xlu0 %491
      %v493 = vrcp.pop %v492
      %v494 = vmul.f32 %v489, %v493
      %v495 = vpack.c.bf16 %v494, %v494
      %496 = vrot.lane.b32.xlu0 %v425, 64
      %v497 = vpop.permute.xlu0 %496
      %v499 = vsel %vm429, %v495, 0
      %vm501 = vcmask 1043456
      %v503 = vsel %vm501, %v497, 0
      %505 = vmatprep.subr.bf16.mxu0 0
      %506 = vmatpush1.bf16.msra.mxu0 %v503
      %507 = vmatprep.subr.bf16.mxu0 0
      %508 = vmatpush1.bf16.msra.mxu0 0
      %509 = vmatprep.subr.bf16.mxu0 0
      %510 = vmatpush1.bf16.msra.mxu0 0
      %511 = vmatprep.subr.bf16.mxu0 0
      %512 = vmatpush1.bf16.msra.mxu0 0
      %513 = vmatprep.subr.bf16.mxu0 0
      %514 = vmatpush1.bf16.msra.mxu0 0
      %515 = vmatprep.subr.bf16.mxu0 0
      %516 = vmatpush1.bf16.msra.mxu0 0
      %517 = vmatprep.subr.bf16.mxu0 0
      %518 = vmatpush1.bf16.msra.mxu0 0
      %519 = vmatprep.subr.bf16.mxu0 0
      %520 = vmatpush1.bf16.msra.mxu0 0
      %521 = vmatprep.subr.bf16.mxu0 0
      %522 = vmatpush1.bf16.msra.mxu0 0
      %523 = vmatprep.subr.bf16.mxu0 0
      %524 = vmatpush1.bf16.msra.mxu0 0
      %525 = vmatprep.subr.bf16.mxu0 0
      %526 = vmatpush1.bf16.msra.mxu0 0
      %527 = vmatprep.subr.bf16.mxu0 0
      %528 = vmatpush1.bf16.msra.mxu0 0
      %529 = vmatprep.subr.bf16.mxu0 0
      %530 = vmatpush1.bf16.msra.mxu0 0
      %531 = vmatprep.subr.bf16.mxu0 0
      %532 = vmatpush1.bf16.msra.mxu0 0
      %533 = vmatprep.subr.bf16.mxu0 0
      %534 = vmatpush1.bf16.msra.mxu0 0
      %535 = vmatprep.subr.bf16.mxu0 0
      %536 = vmatpush1.bf16.msra.mxu0 0
      %537 = vmatprep.mubr.bf16.mxu0 0
      %538 = vmatmul.mubr.bf16.gmra.mrb[0].mxu0 %v499
      %v539 = vpop.f32.mrb[0].mxu0
      %v540 = vadd.f32 0.0, %v539
      %v541 = vpop.f32.mrb[0].mxu0
      %v542 = vpop.f32.mrb[0].mxu0
      %v543 = vpop.f32.mrb[0].mxu0
      %544 = vdwg.mxu0
      %546 = vrot.lane.b32.xlu0 %v424, 120
      %v547 = vpop.permute.xlu0 %546
      %548 = vrot.lane.b32.xlu0 %v425, 88
      %v549 = vpop.permute.xlu0 %548
      %v551 = vsel %vm429, %v547, 0
      %v554 = vsel %vm429, %v549, 0
      %556 = vmatprep.subr.bf16.mxu0 0
      %557 = vmatpush1.bf16.xpose.msra.mxu0 %v554
      %558 = vmatprep.subr.bf16.mxu0 0
      %559 = vmatpush1.bf16.xpose.msra.mxu0 0
      %560 = vmatprep.subr.bf16.mxu0 0
      %561 = vmatpush1.bf16.xpose.msra.mxu0 0
      %562 = vmatprep.subr.bf16.mxu0 0
      %563 = vmatpush1.bf16.xpose.msra.mxu0 0
      %564 = vmatprep.subr.bf16.mxu0 0
      %565 = vmatpush1.bf16.xpose.msra.mxu0 0
      %566 = vmatprep.subr.bf16.mxu0 0
      %567 = vmatpush1.bf16.xpose.msra.mxu0 0
      %568 = vmatprep.subr.bf16.mxu0 0
      %569 = vmatpush1.bf16.xpose.msra.mxu0 0
      %570 = vmatprep.subr.bf16.mxu0 0
      %571 = vmatpush1.bf16.xpose.msra.mxu0 0
      %572 = vmatprep.subr.bf16.mxu0 0
      %573 = vmatpush1.bf16.xpose.msra.mxu0 0
      %574 = vmatprep.subr.bf16.mxu0 0
      %575 = vmatpush1.bf16.xpose.msra.mxu0 0
      %576 = vmatprep.subr.bf16.mxu0 0
      %577 = vmatpush1.bf16.xpose.msra.mxu0 0
      %578 = vmatprep.subr.bf16.mxu0 0
      %579 = vmatpush1.bf16.xpose.msra.mxu0 0
      %580 = vmatprep.subr.bf16.mxu0 0
      %581 = vmatpush1.bf16.xpose.msra.mxu0 0
      %582 = vmatprep.subr.bf16.mxu0 0
      %583 = vmatpush1.bf16.xpose.msra.mxu0 0
      %584 = vmatprep.subr.bf16.mxu0 0
      %585 = vmatpush1.bf16.xpose.msra.mxu0 0
      %586 = vmatprep.subr.bf16.mxu0 0
      %587 = vmatpush1.bf16.xpose.msra.mxu0 0
      %588 = vmatprep.mubr.bf16.mxu0 0
      %589 = vmatmul.mubr.bf16.gmra.mrb[0].mxu0 %v551
      %v590 = vpop.f32.mrb[0].mxu0
      %v591 = vadd.f32 0.0, %v590
      %v592 = vpop.f32.mrb[0].mxu0
      %v593 = vpop.f32.mrb[0].mxu0
      %v594 = vpop.f32.mrb[0].mxu0
      %595 = vdwg.mxu0
      %v596 = vsel %vm482, -1e+30, %v591
      %v597 = vsel %vm429, %v596, -inf
      %598 = vmax.xlane.f32.xlu0 %v597
      %v599 = vpop.xlane.xlu0 %598
      %v600 = vsub.f32 %v596, %v599
      %v601 = vmul.f32 %v600, 1.442695
      %v602 = vpow.pop %v601
      %v603 = vsel %vm429, %v602, 0.0
      %604 = vadd.xlane.f32.xlu0 %v603
      %v605 = vpop.xlane.xlu0 %604
      %v606 = vrcp.pop %v605
      %v607 = vmul.f32 %v602, %v606
      %v608 = vpack.c.bf16 %v607, %v607
      %609 = vrot.lane.b32.xlu0 %v425, 56
      %v610 = vpop.permute.xlu0 %609
      %v612 = vsel %vm429, %v608, 0
      %v615 = vsel %vm501, %v610, 0
      %617 = vmatprep.subr.bf16.mxu0 0
      %618 = vmatpush1.bf16.msra.mxu0 %v615
      %619 = vmatprep.subr.bf16.mxu0 0
      %620 = vmatpush1.bf16.msra.mxu0 0
      %621 = vmatprep.subr.bf16.mxu0 0
      %622 = vmatpush1.bf16.msra.mxu0 0
      %623 = vmatprep.subr.bf16.mxu0 0
      %624 = vmatpush1.bf16.msra.mxu0 0
      %625 = vmatprep.subr.bf16.mxu0 0
      %626 = vmatpush1.bf16.msra.mxu0 0
      %627 = vmatprep.subr.bf16.mxu0 0
      %628 = vmatpush1.bf16.msra.mxu0 0
      %629 = vmatprep.subr.bf16.mxu0 0
      %630 = vmatpush1.bf16.msra.mxu0 0
      %631 = vmatprep.subr.bf16.mxu0 0
      %632 = vmatpush1.bf16.msra.mxu0 0
      %633 = vmatprep.subr.bf16.mxu0 0
      %634 = vmatpush1.bf16.msra.mxu0 0
      %635 = vmatprep.subr.bf16.mxu0 0
      %636 = vmatpush1.bf16.msra.mxu0 0
      %637 = vmatprep.subr.bf16.mxu0 0
      %638 = vmatpush1.bf16.msra.mxu0 0
      %639 = vmatprep.subr.bf16.mxu0 0
      %640 = vmatpush1.bf16.msra.mxu0 0
      %641 = vmatprep.subr.bf16.mxu0 0
      %642 = vmatpush1.bf16.msra.mxu0 0
      %643 = vmatprep.subr.bf16.mxu0 0
      %644 = vmatpush1.bf16.msra.mxu0 0
      %645 = vmatprep.subr.bf16.mxu0 0
      %646 = vmatpush1.bf16.msra.mxu0 0
      %647 = vmatprep.subr.bf16.mxu0 0
      %648 = vmatpush1.bf16.msra.mxu0 0
      %649 = vmatprep.mubr.bf16.mxu0 0
      %650 = vmatmul.mubr.bf16.gmra.mrb[0].mxu0 %v612
      %v651 = vpop.f32.mrb[0].mxu0
      %v652 = vadd.f32 0.0, %v651
      %v653 = vpop.f32.mrb[0].mxu0
      %v654 = vpop.f32.mrb[0].mxu0
      %v655 = vpop.f32.mrb[0].mxu0
      %656 = vdwg.mxu0
      %657 = vrot.lane.b32.xlu0 %v424, 112
      %v658 = vpop.permute.xlu0 %657
      %659 = vrot.lane.b32.xlu0 %v425, 80
      %v660 = vpop.permute.xlu0 %659
      %v662 = vsel %vm429, %v658, 0
      %v665 = vsel %vm429, %v660, 0
      %667 = vmatprep.subr.bf16.mxu0 0
      %668 = vmatpush1.bf16.xpose.msra.mxu0 %v665
      %669 = vmatprep.subr.bf16.mxu0 0
      %670 = vmatpush1.bf16.xpose.msra.mxu0 0
      %671 = vmatprep.subr.bf16.mxu0 0
      %672 = vmatpush1.bf16.xpose.msra.mxu0 0
      %673 = vmatprep.subr.bf16.mxu0 0
      %674 = vmatpush1.bf16.xpose.msra.mxu0 0
      %675 = vmatprep.subr.bf16.mxu0 0
      %676 = vmatpush1.bf16.xpose.msra.mxu0 0
      %677 = vmatprep.subr.bf16.mxu0 0
      %678 = vmatpush1.bf16.xpose.msra.mxu0 0
      %679 = vmatprep.subr.bf16.mxu0 0
      %680 = vmatpush1.bf16.xpose.msra.mxu0 0
      %681 = vmatprep.subr.bf16.mxu0 0
      %682 = vmatpush1.bf16.xpose.msra.mxu0 0
      %683 = vmatprep.subr.bf16.mxu0 0
      %684 = vmatpush1.bf16.xpose.msra.mxu0 0
      %685 = vmatprep.subr.bf16.mxu0 0
      %686 = vmatpush1.bf16.xpose.msra.mxu0 0
      %687 = vmatprep.subr.bf16.mxu0 0
      %688 = vmatpush1.bf16.xpose.msra.mxu0 0
      %689 = vmatprep.subr.bf16.mxu0 0
      %690 = vmatpush1.bf16.xpose.msra.mxu0 0
      %691 = vmatprep.subr.bf16.mxu0 0
      %692 = vmatpush1.bf16.xpose.msra.mxu0 0
      %693 = vmatprep.subr.bf16.mxu0 0
      %694 = vmatpush1.bf16.xpose.msra.mxu0 0
      %695 = vmatprep.subr.bf16.mxu0 0
      %696 = vmatpush1.bf16.xpose.msra.mxu0 0
      %697 = vmatprep.subr.bf16.mxu0 0
      %698 = vmatpush1.bf16.xpose.msra.mxu0 0
      %699 = vmatprep.mubr.bf16.mxu0 0
      %700 = vmatmul.mubr.bf16.gmra.mrb[0].mxu0 %v662
      %v701 = vpop.f32.mrb[0].mxu0
      %v702 = vadd.f32 0.0, %v701
      %v703 = vpop.f32.mrb[0].mxu0
      %v704 = vpop.f32.mrb[0].mxu0
      %v705 = vpop.f32.mrb[0].mxu0
      %706 = vdwg.mxu0
      %v707 = vsel %vm482, -1e+30, %v702
      %v708 = vsel %vm429, %v707, -inf
      %709 = vmax.xlane.f32.xlu0 %v708
      %v710 = vpop.xlane.xlu0 %709
      %v711 = vsub.f32 %v707, %v710
      %v712 = vmul.f32 %v711, 1.442695
      %v713 = vpow.pop %v712
      %v714 = vsel %vm429, %v713, 0.0
      %715 = vadd.xlane.f32.xlu0 %v714
      %v716 = vpop.xlane.xlu0 %715
      %v717 = vrcp.pop %v716
      %v718 = vmul.f32 %v713, %v717
      %v719 = vpack.c.bf16 %v718, %v718
      %720 = vrot.lane.b32.xlu0 %v425, 48
      %v721 = vpop.permute.xlu0 %720
      %v723 = vsel %vm429, %v719, 0
      %v726 = vsel %vm501, %v721, 0
      %728 = vmatprep.subr.bf16.mxu0 0
      %729 = vmatpush1.bf16.msra.mxu0 %v726
      %730 = vmatprep.subr.bf16.mxu0 0
      %731 = vmatpush1.bf16.msra.mxu0 0
      %732 = vmatprep.subr.bf16.mxu0 0
      %733 = vmatpush1.bf16.msra.mxu0 0
      %734 = vmatprep.subr.bf16.mxu0 0
      %735 = vmatpush1.bf16.msra.mxu0 0
      %736 = vmatprep.subr.bf16.mxu0 0
      %737 = vmatpush1.bf16.msra.mxu0 0
      %738 = vmatprep.subr.bf16.mxu0 0
      %739 = vmatpush1.bf16.msra.mxu0 0
      %740 = vmatprep.subr.bf16.mxu0 0
      %741 = vmatpush1.bf16.msra.mxu0 0
      %742 = vmatprep.subr.bf16.mxu0 0
      %743 = vmatpush1.bf16.msra.mxu0 0
      %744 = vmatprep.subr.bf16.mxu0 0
      %745 = vmatpush1.bf16.msra.mxu0 0
      %746 = vmatprep.subr.bf16.mxu0 0
      %747 = vmatpush1.bf16.msra.mxu0 0
      %748 = vmatprep.subr.bf16.mxu0 0
      %749 = vmatpush1.bf16.msra.mxu0 0
      %750 = vmatprep.subr.bf16.mxu0 0
      %751 = vmatpush1.bf16.msra.mxu0 0
      %752 = vmatprep.subr.bf16.mxu0 0
      %753 = vmatpush1.bf16.msra.mxu0 0
      %754 = vmatprep.subr.bf16.mxu0 0
      %755 = vmatpush1.bf16.msra.mxu0 0
      %756 = vmatprep.subr.bf16.mxu0 0
      %757 = vmatpush1.bf16.msra.mxu0 0
      %758 = vmatprep.subr.bf16.mxu0 0
      %759 = vmatpush1.bf16.msra.mxu0 0
      %760 = vmatprep.mubr.bf16.mxu0 0
      %761 = vmatmul.mubr.bf16.gmra.mrb[0].mxu0 %v723
      %v762 = vpop.f32.mrb[0].mxu0
      %v763 = vadd.f32 0.0, %v762
      %v764 = vpop.f32.mrb[0].mxu0
      %v765 = vpop.f32.mrb[0].mxu0
      %v766 = vpop.f32.mrb[0].mxu0
      %767 = vdwg.mxu0
      %768 = vrot.lane.b32.xlu0 %v424, 104
      %v769 = vpop.permute.xlu0 %768
      %770 = vrot.lane.b32.xlu0 %v425, 72
      %v771 = vpop.permute.xlu0 %770
      %v773 = vsel %vm429, %v769, 0
      %v776 = vsel %vm429, %v771, 0
      %778 = vmatprep.subr.bf16.mxu0 0
      %779 = vmatpush1.bf16.xpose.msra.mxu0 %v776
      %780 = vmatprep.subr.bf16.mxu0 0
      %781 = vmatpush1.bf16.xpose.msra.mxu0 0
      %782 = vmatprep.subr.bf16.mxu0 0
      %783 = vmatpush1.bf16.xpose.msra.mxu0 0
      %784 = vmatprep.subr.bf16.mxu0 0
      %785 = vmatpush1.bf16.xpose.msra.mxu0 0
      %786 = vmatprep.subr.bf16.mxu0 0
      %787 = vmatpush1.bf16.xpose.msra.mxu0 0
      %788 = vmatprep.subr.bf16.mxu0 0
      %789 = vmatpush1.bf16.xpose.msra.mxu0 0
      %790 = vmatprep.subr.bf16.mxu0 0
      %791 = vmatpush1.bf16.xpose.msra.mxu0 0
      %792 = vmatprep.subr.bf16.mxu0 0
      %793 = vmatpush1.bf16.xpose.msra.mxu0 0
      %794 = vmatprep.subr.bf16.mxu0 0
      %795 = vmatpush1.bf16.xpose.msra.mxu0 0
      %796 = vmatprep.subr.bf16.mxu0 0
      %797 = vmatpush1.bf16.xpose.msra.mxu0 0
      %798 = vmatprep.subr.bf16.mxu0 0
      %799 = vmatpush1.bf16.xpose.msra.mxu0 0
      %800 = vmatprep.subr.bf16.mxu0 0
      %801 = vmatpush1.bf16.xpose.msra.mxu0 0
      %802 = vmatprep.subr.bf16.mxu0 0
      %803 = vmatpush1.bf16.xpose.msra.mxu0 0
      %804 = vmatprep.subr.bf16.mxu0 0
      %805 = vmatpush1.bf16.xpose.msra.mxu0 0
      %806 = vmatprep.subr.bf16.mxu0 0
      %807 = vmatpush1.bf16.xpose.msra.mxu0 0
      %808 = vmatprep.subr.bf16.mxu0 0
      %809 = vmatpush1.bf16.xpose.msra.mxu0 0
      %810 = vmatprep.mubr.bf16.mxu0 0
      %811 = vmatmul.mubr.bf16.gmra.mrb[0].mxu0 %v773
      %v812 = vpop.f32.mrb[0].mxu0
      %v813 = vadd.f32 0.0, %v812
      %v814 = vpop.f32.mrb[0].mxu0
      %v815 = vpop.f32.mrb[0].mxu0
      %v816 = vpop.f32.mrb[0].mxu0
      %817 = vdwg.mxu0
      %v818 = vsel %vm482, -1e+30, %v813
      %v819 = vsel %vm429, %v818, -inf
      %820 = vmax.xlane.f32.xlu0 %v819
      %v821 = vpop.xlane.xlu0 %820
      %v822 = vsub.f32 %v818, %v821
      %v823 = vmul.f32 %v822, 1.442695
      %v824 = vpow.pop %v823
      %v825 = vsel %vm429, %v824, 0.0
      %826 = vadd.xlane.f32.xlu0 %v825
      %v827 = vpop.xlane.xlu0 %826
      %v828 = vrcp.pop %v827
      %v829 = vmul.f32 %v824, %v828
      %v830 = vpack.c.bf16 %v829, %v829
      %831 = vrot.lane.b32.xlu0 %v425, 40
      %v832 = vpop.permute.xlu0 %831
      %v834 = vsel %vm429, %v830, 0
      %v837 = vsel %vm501, %v832, 0
      %839 = vmatprep.subr.bf16.mxu0 0
      %840 = vmatpush1.bf16.msra.mxu0 %v837
      %841 = vmatprep.subr.bf16.mxu0 0
      %842 = vmatpush1.bf16.msra.mxu0 0
      %843 = vmatprep.subr.bf16.mxu0 0
      %844 = vmatpush1.bf16.msra.mxu0 0
      %845 = vmatprep.subr.bf16.mxu0 0
      %846 = vmatpush1.bf16.msra.mxu0 0
      %847 = vmatprep.subr.bf16.mxu0 0
      %848 = vmatpush1.bf16.msra.mxu0 0
      %849 = vmatprep.subr.bf16.mxu0 0
      %850 = vmatpush1.bf16.msra.mxu0 0
      %851 = vmatprep.subr.bf16.mxu0 0
      %852 = vmatpush1.bf16.msra.mxu0 0
      %853 = vmatprep.subr.bf16.mxu0 0
      %854 = vmatpush1.bf16.msra.mxu0 0
      %855 = vmatprep.subr.bf16.mxu0 0
      %856 = vmatpush1.bf16.msra.mxu0 0
      %857 = vmatprep.subr.bf16.mxu0 0
      %858 = vmatpush1.bf16.msra.mxu0 0
      %859 = vmatprep.subr.bf16.mxu0 0
      %860 = vmatpush1.bf16.msra.mxu0 0
      %861 = vmatprep.subr.bf16.mxu0 0
      %862 = vmatpush1.bf16.msra.mxu0 0
      %863 = vmatprep.subr.bf16.mxu0 0
      %864 = vmatpush1.bf16.msra.mxu0 0
      %865 = vmatprep.subr.bf16.mxu0 0
      %866 = vmatpush1.bf16.msra.mxu0 0
      %867 = vmatprep.subr.bf16.mxu0 0
      %868 = vmatpush1.bf16.msra.mxu0 0
      %869 = vmatprep.subr.bf16.mxu0 0
      %870 = vmatpush1.bf16.msra.mxu0 0
      %871 = vmatprep.mubr.bf16.mxu0 0
      %872 = vmatmul.mubr.bf16.gmra.mrb[0].mxu0 %v834
      %v873 = vpop.f32.mrb[0].mxu0
      %v874 = vadd.f32 0.0, %v873
      %v875 = vpop.f32.mrb[0].mxu0
      %v876 = vpop.f32.mrb[0].mxu0
      %v877 = vpop.f32.mrb[0].mxu0
      %878 = vdwg.mxu0
      %880 = vrot.lane.b32.xlu0 %v652, 8
      %v881 = vpop.permute.xlu0 %880
      %884 = vrot.lane.b32.xlu0 %v763, 16
      %v885 = vpop.permute.xlu0 %884
      %888 = vrot.lane.b32.xlu0 %v874, 24
      %v889 = vpop.permute.xlu0 %888
      %v891 = vsel %vm429, %v540, %v881
      %vm892 = vcmask 130048
      %v893 = vsel %vm892, %v891, %v885
      %vm894 = vcmask 195584
      %v895 = vsel %vm894, %v893, %v889
      %v896 = vpack.c.bf16 %v895, %v895
      %v897 = vld [vmem:[%s6] sm:$0xf]
      %v898 = vld [vmem:[%s6 + $0x4] sm:$0xf]
      %v899 = vld [vmem:[%s6 + $0x8] sm:$0xf]
      %v900 = vld [vmem:[%s6 + $0xc] sm:$0xf]
      %v901 = vld [vmem:[%s7] sm:$0x1]
      %v903 = vlaneseq
      %v904 = vshrl.u32 %v903, 7
      %v905 = vsub.s32 0, %v904
      %v906 = vrot.slane %v901, %v905
      %v912 = vunpack.c.l.b16 %v897
      %v913 = vunpack.c.l.b16 %v898
      %v914 = vunpack.c.l.b16 %v899
      %v915 = vunpack.c.l.b16 %v900
      %v916 = vpack.c.b16 %v913, %v912
      %v917 = vpack.c.b16 %v915, %v914
      %v921 = vsel %vm319, %v896, 0
      %923 = vmatprep.subr.bf16.mxu0 0
      %924 = vmatpush1.bf16.msra.mxu0 %v916
      %925 = vmatprep.subr.bf16.mxu0 0
      %926 = vmatpush1.bf16.msra.mxu0 %v917
      %927 = vmatprep.subr.bf16.mxu0 0
      %928 = vmatpush1.bf16.msra.mxu0 0
      %929 = vmatprep.subr.bf16.mxu0 0
      %930 = vmatpush1.bf16.msra.mxu0 0
      %931 = vmatprep.subr.bf16.mxu0 0
      %932 = vmatpush1.bf16.msra.mxu0 0
      %933 = vmatprep.subr.bf16.mxu0 0
      %934 = vmatpush1.bf16.msra.mxu0 0
      %935 = vmatprep.subr.bf16.mxu0 0
      %936 = vmatpush1.bf16.msra.mxu0 0
      %937 = vmatprep.subr.bf16.mxu0 0
      %938 = vmatpush1.bf16.msra.mxu0 0
      %939 = vmatprep.subr.bf16.mxu0 0
      %940 = vmatpush1.bf16.msra.mxu0 0
      %941 = vmatprep.subr.bf16.mxu0 0
      %942 = vmatpush1.bf16.msra.mxu0 0
      %943 = vmatprep.subr.bf16.mxu0 0
      %944 = vmatpush1.bf16.msra.mxu0 0
      %945 = vmatprep.subr.bf16.mxu0 0
      %946 = vmatpush1.bf16.msra.mxu0 0
      %947 = vmatprep.subr.bf16.mxu0 0
      %948 = vmatpush1.bf16.msra.mxu0 0
      %949 = vmatprep.subr.bf16.mxu0 0
      %950 = vmatpush1.bf16.msra.mxu0 0
      %951 = vmatprep.subr.bf16.mxu0 0
      %952 = vmatpush1.bf16.msra.mxu0 0
      %953 = vmatprep.subr.bf16.mxu0 0
      %954 = vmatpush1.bf16.msra.mxu0 0
      %955 = vmatprep.mubr.bf16.mxu0 0
      %956 = vmatmul.mubr.bf16.gmra.mrb[0].mxu0 %v921
      %v957 = vpop.f32.mrb[0].mxu0
      %v958 = vadd.f32 %v906, %v957
      %v959 = vpop.f32.mrb[0].mxu0
      %v960 = vpop.f32.mrb[0].mxu0
      %v961 = vpop.f32.mrb[0].mxu0
      %962 = vdwg.mxu0
      %v963 = vadd.f32 %v316, %v958
      %964 = vst.msk [vmem:[%s314] sm:$0xff] %vm319, %v963
      %p965 = scmp.lt.s32.totalorder %s19, 1
      %s966 = scalar_select %p965, %s19, 1
      %s967 = smul.addr %s966, 8
      %s968 = scalar_lea.vmem %s8, %s967
      // Predicated region
      $region53: #{transformer_forward.12} parent=51 // pred_check
        %p969 = pneg %p215
      $region54: #{transformer_forward.12} parent=51 // pred_check_branch
        %971 = sbr.rel (%p969) target = $region56
      $region55: #{transformer_forward.12} parent=51 // pred_region
        _
      $region56: #{transformer_forward.12} parent=51 // pred_fallthru
        _
    $region52: #{transformer_forward.12} parent=5 // pred_fallthru
      _
    %p972 = scmp.le.s32.totalorder 2, %s14
    // Predicated region
    $region57: #{transformer_forward.12} parent=5 // pred_check
      %p973 = pneg %p972
    $region58: #{transformer_forward.12} parent=5 // pred_check_branch
      %975 = sbr.rel (%p973) target = $region60
    $region59: #{transformer_forward.12} parent=5 // pred_region
      %s976 = ssub.s32 %s14, 2
      // Predicated region
      $region61: #{transformer_forward.12} parent=59 // pred_check
        %p977 = pneg %p221
      $region62: #{transformer_forward.12} parent=59 // pred_check_branch
        %979 = sbr.rel (%p977) target = $region64
      $region63: #{transformer_forward.12} parent=59 // pred_region
        %p980 = scmp.lt.s32.totalorder %s20, 1
        %s981 = scalar_select %p980, %s20, 1
        %s982 = smul.addr %s981, 8
        %s983 = scalar_lea.vmem %s8, %s982
      $region64: #{transformer_forward.12} parent=59 // pred_fallthru
        _
    $region60: #{transformer_forward.12} parent=5 // pred_fallthru
      _
  $region6: #{transformer_forward.12} parent=0 // loop_footer
    %s18 = sadd.s32 1, %s14
  $region7: #{transformer_forward.12} parent=0 // loop_footer_branch
    %13 = sbr.rel target = $region3
  $region8: #{transformer_forward.12} parent=0 // loop_exit
    _

// kernel: transformer_forward.23
$region0: #{transformer_forward.23}
  #allocation0 [shape = 'u32[]', space=smem, size = 0x4, offset = 0x4, fixed_abs, tag = 'smem constant byte address 0x4 - core index']
  #allocation1 [shape = 'u32[144,128]{1,0:T(1,128)}', space=vmem, size = 0x12000, scoped, tag = 'internal scratch']
  %s0 = inlined_call_operand.vmem [shape: f32[16,32], index: 0, kind: input, shape index: {}]
  %s1 = inlined_call_operand.vmem [shape: f32[1,32], index: 1, kind: input, shape index: {}]
  %s2 = inlined_call_operand.vmem [shape: f32[1,32], index: 2, kind: input, shape index: {}]
  %s3 = inlined_call_operand.hbm [shape: f32[16,32], index: 3, kind: output, shape index: {}]
  %s4 = sld [smem:[#allocation0]]
  $region22: #{transformer_forward.23} parent=0
    _
  %s6 = ssub.s32 1, %s4
  %s7 = scalar_select 0, %s6, %s4
  $region1: #{transformer_forward.23} parent=0
    #allocation2 [shape = 'u8[8192]{0}', space=vmem, size = 0x2000, scoped, tag = 'output window, operand 0, single buffered']
    #allocation3 [shape = 's32[1]{0}', space=sflag, size = 0x4, scoped, tag = 'scoped memory for transformer_forward.23']
    %8 = vsyncpa [#allocation3], 0
    // Predicated region
    $region2: #{transformer_forward.23} parent=1 // pred_check
      _
    $region3: #{transformer_forward.23} parent=1 // pred_check_branch
      %10 = sbr.rel (0) target = $region5
    $region4: #{transformer_forward.23} parent=1 // pred_region
      _
    $region5: #{transformer_forward.23} parent=1 // pred_fallthru
      _
    // Predicated region
    $region6: #{transformer_forward.23} parent=1 // pred_check
      _
    $region7: #{transformer_forward.23} parent=1 // pred_check_branch
      %12 = sbr.rel (0) target = $region9
    $region8: #{transformer_forward.23} parent=1 // pred_region
      _
    $region9: #{transformer_forward.23} parent=1 // pred_fallthru
      _
    // Predicated region
    $region10: #{transformer_forward.23} parent=1 // pred_check
      _
    $region11: #{transformer_forward.23} parent=1 // pred_check_branch
      %14 = sbr.rel (0) target = $region13
    $region12: #{transformer_forward.23} parent=1 // pred_region
      _
    $region13: #{transformer_forward.23} parent=1 // pred_fallthru
      _
    %v15 = vld [vmem:[%s0] sm:$0xff]
    %v16 = vld [vmem:[%s0 + $0x8] sm:$0xff]
    %v17 = vld [vmem:[%s1] sm:$0x1]
    %v18 = vld [vmem:[%s2] sm:$0x1]
    %vm19 = vcmask 261120
    %v20 = vsel %vm19, %v15, 0.0
    %21 = vadd.xlane.f32.xlu0 %v20
    %v22 = vpop.xlane.xlu0 %21
    %v23 = vsel %vm19, %v16, 0.0
    %24 = vadd.xlane.f32.xlu0 %v23
    %v25 = vpop.xlane.xlu0 %24
    %v26 = vrcp.pop 32.0
    %v27 = vmul.f32 %v22, %v26
    %v28 = vmul.f32 %v25, %v26
    %v29 = vsub.f32 %v15, %v27
    %v30 = vsub.f32 %v16, %v28
    %v31 = vmul.f32 %v29, %v29
    %v32 = vmul.f32 %v30, %v30
    %v33 = vsel %vm19, %v31, 0.0
    %34 = vadd.xlane.f32.xlu0 %v33
    %v35 = vpop.xlane.xlu0 %34
    %v36 = vsel %vm19, %v32, 0.0
    %37 = vadd.xlane.f32.xlu0 %v36
    %v38 = vpop.xlane.xlu0 %37
    %v39 = vmul.f32 %v35, 0.032258064
    %v40 = vmul.f32 %v38, 0.032258064
    %v42 = vlaneseq
    %v43 = vshrl.u32 %v42, 7
    %v44 = vsub.s32 0, %v43
    %v45 = vrot.slane %v17, %v44
    %v47 = vmul.f32 %v45, %v29
    %v48 = vmul.f32 %v45, %v30
    %v49 = vrsqrt.pop %v39
    %v50 = vmul.f32 %v39, %v49
    %vm51 = vcmp.eq.f32.partialorder %v39, inf
    %v52 = vsel %vm51, %v39, %v50
    %vm53 = vcmp.eq.f32.partialorder %v39, 0.0
    %v54 = vand.u32 %v39, 2147483648
    %v55 = vsel %vm53, %v54, %v52
    %v56 = vrsqrt.pop %v40
    %v57 = vmul.f32 %v40, %v56
    %vm58 = vcmp.eq.f32.partialorder %v40, inf
    %v59 = vsel %vm58, %v40, %v57
    %vm60 = vcmp.eq.f32.partialorder %v40, 0.0
    %v61 = vand.u32 %v40, 2147483648
    %v62 = vsel %vm60, %v61, %v59
    %v63 = vadd.f32 %v55, 1e-06
    %v64 = vadd.f32 %v62, 1e-06
    %v65 = vrcp.pop %v63
    %v66 = vmul.f32 %v47, %v65
    %v67 = vrcp.pop %v64
    %v68 = vmul.f32 %v48, %v67
    %v70 = vlaneseq
    %v71 = vshrl.u32 %v70, 7
    %v72 = vsub.s32 0, %v71
    %v73 = vrot.slane %v18, %v72
    %v75 = vadd.f32 %v66, %v73
    %v76 = vadd.f32 %v68, %v73
    %77 = vst.msk [vmem:[#allocation2] sm:$0xff] %vm19, %v75
    %78 = vst.msk [vmem:[#allocation2 + $0x8] sm:$0xff] %vm19, %v76
    // Predicated region
    $region14: #{transformer_forward.23} parent=1 // pred_check
      _
    $region15: #{transformer_forward.23} parent=1 // pred_check_branch
      %80 = sbr.rel (0) target = $region17
    $region16: #{transformer_forward.23} parent=1 // pred_region
      %s82 = ssub.s32 256, 256
      %83 = vsyncadd [#allocation3], %s82
      %s84 = sshll.u32 [#allocation2], 4
      %s85 = int_to_ptr.vmem [resolvable:$true] %s84
      %90 = dma.vmem_to_hbm [thread:$0]  %s85, 256, %s3, [#allocation3], 128, 128, 8
    $region17: #{transformer_forward.23} parent=1 // pred_fallthru
      _
    // Predicated region
    $region18: #{transformer_forward.23} parent=1 // pred_check
      _
    $region19: #{transformer_forward.23} parent=1 // pred_check_branch
      %92 = sbr.rel (0) target = $region21
    $region20: #{transformer_forward.23} parent=1 // pred_region
      %93 = dma.done [#allocation3], 256
    $region21: #{transformer_forward.23} parent=1 // pred_fallthru
      _
    %94 = vsyncpa [#allocation3], 1

// kernel: transformer_forward.18
$region0: #{transformer_forward.18}
  #allocation0 [shape = 'u32[]', space=smem, size = 0x4, offset = 0x4, fixed_abs, tag = 'smem constant byte address 0x4 - core index']
  #allocation1 [shape = 'u32[144,128]{1,0:T(1,128)}', space=vmem, size = 0x12000, scoped, tag = 'internal scratch']
  %s0 = inlined_call_operand.vmem [shape: f32[2,8,32], index: 0, kind: input, shape index: {}]
  %s1 = inlined_call_operand.vmem [shape: f32[2,8,32], index: 1, kind: input, shape index: {}]
  %s2 = inlined_call_operand.vmem [shape: f32[2,1,8], index: 2, kind: input, shape index: {}]
  %s3 = inlined_call_operand.vmem [shape: f32[1,32], index: 3, kind: input, shape index: {}]
  %s4 = inlined_call_operand.vmem [shape: f32[1,32], index: 4, kind: input, shape index: {}]
  %s5 = inlined_call_operand.vmem [shape: bf16[32,32], index: 5, kind: input, shape index: {}]
  %s6 = inlined_call_operand.vmem [shape: f32[1,32], index: 6, kind: input, shape index: {}]
  %s7 = inlined_call_operand.vmem [shape: bf16[32,64], index: 7, kind: input, shape index: {}]
  %s8 = inlined_call_operand.vmem [shape: f32[1,64], index: 8, kind: input, shape index: {}]
  %s9 = inlined_call_operand.vmem [shape: bf16[32,32], index: 9, kind: input, shape index: {}]
  %s10 = inlined_call_operand.vmem [shape: f32[1,32], index: 10, kind: input, shape index: {}]
  %s11 = inlined_call_operand.vmem [shape: f32[2,8,32], index: 11, kind: output, shape index: {}]
  %s12 = sld [smem:[#allocation0]]
  $region77: #{transformer_forward.18} parent=0
    _
  %s14 = ssub.s32 1, %s12
  %s15 = scalar_select 0, %s14, %s12
  loop: start=0, step=1, limit=4
  $region2: #{transformer_forward.18} parent=0 // loop_pre_header
    _
  $region3: #{transformer_forward.18} parent=0 // loop_header
    %s17 = sphi 0, %s21
    %p18 = scmp.ge.s32.totalorder %s17, 4
    %s27 = sphi 0, %s29
    %s30 = sphi 0, %s27
    %s31 = sphi 0, %s30
    %s47 = sphi 0, %s31
    %s53 = sphi 0, %s55
    %s56 = sphi 0, %s53
    %s57 = sphi 0, %s56
    %s73 = sphi 0, %s57
    %s79 = sphi 0, %s81
    %s82 = sphi 0, %s79
    %s83 = sphi 0, %s82
    %s99 = sphi 0, %s83
    %s103 = sphi 0, %s103
    %s105 = sphi 0, %s103
    %s106 = sphi 0, %s105
    %s120 = sphi 0, %s106
    %s124 = sphi 0, %s124
    %s126 = sphi 0, %s124
    %s127 = sphi 0, %s126
    %s141 = sphi 0, %s127
    %s145 = sphi 0, %s145
    %s147 = sphi 0, %s145
    %s148 = sphi 0, %s147
    %s162 = sphi 0, %s148
    %s166 = sphi 0, %s166
    %s168 = sphi 0, %s166
    %s169 = sphi 0, %s168
    %s183 = sphi 0, %s169
    %s187 = sphi 0, %s187
    %s189 = sphi 0, %s187
    %s190 = sphi 0, %s189
    %s204 = sphi 0, %s190
    %s208 = sphi 0, %s208
    %s210 = sphi 0, %s208
    %s211 = sphi 0, %s210
    %s225 = sphi 0, %s211
    %s229 = sphi 0, %s229
    %s231 = sphi 0, %s229
    %s232 = sphi 0, %s231
    %s246 = sphi 0, %s232
    %s250 = sphi 0, %s250
    %s252 = sphi 0, %s250
    %s253 = sphi 0, %s252
    %s267 = sphi 0, %s253
    %s273 = sphi 0, %s275
    %s276 = sphi 0, %s273
    %s277 = sphi 0, %s276
    %s293 = sphi 0, %s277
  $region4: #{transformer_forward.18} parent=0 // loop_header_branch
    %20 = sbr.rel (%p18) target = $region8
  $region5: #{transformer_forward.18} parent=0 // loop_body
    %s22 = ssub.s32 %s17, 1
    %s23 = ssub.s32 %s17, 2
    %s24 = sadd.s32 %s17, 1
    %s25 = ssub.s32 %s17, %s24
    %p26 = scmp.eq.s32.totalorder %s25, 0
    %s28 = sadd.s32 %s27, 1
    %s29 = scalar_select %p26, %s27, %s28
    %p32 = pneg %p26
    %p33 = scmp.eq.s32.totalorder %s17, 1
    %p34 = por %p32, %p33
    %p35 = scmp.ne.s32.totalorder %s27, %s30
    %p36 = scmp.eq.s32.totalorder %s17, 0
    %p37 = por %p35, %p36
    %p38 = scmp.ne.s32.totalorder %s27, %s30
    %p39 = scmp.eq.s32.totalorder %s22, 1
    %p40 = por %p38, %p39
    %p41 = scmp.ne.s32.totalorder %s30, %s31
    %p42 = scmp.eq.s32.totalorder %s22, 0
    %p43 = por %p41, %p42
    %p44 = scmp.ne.s32.totalorder %s30, %s31
    %p45 = scmp.eq.s32.totalorder %s23, 1
    %p46 = por %p44, %p45
    %p48 = scmp.ne.s32.totalorder %s31, %s47
    %p49 = scmp.eq.s32.totalorder %s23, 0
    %p50 = por %p48, %p49
    %s51 = ssub.s32 %s17, %s24
    %p52 = scmp.eq.s32.totalorder %s51, 0
    %s54 = sadd.s32 %s53, 1
    %s55 = scalar_select %p52, %s53, %s54
    %p58 = pneg %p52
    %p59 = scmp.eq.s32.totalorder %s17, 1
    %p60 = por %p58, %p59
    %p61 = scmp.ne.s32.totalorder %s53, %s56
    %p62 = scmp.eq.s32.totalorder %s17, 0
    %p63 = por %p61, %p62
    %p64 = scmp.ne.s32.totalorder %s53, %s56
    %p65 = scmp.eq.s32.totalorder %s22, 1
    %p66 = por %p64, %p65
    %p67 = scmp.ne.s32.totalorder %s56, %s57
    %p68 = scmp.eq.s32.totalorder %s22, 0
    %p69 = por %p67, %p68
    %p70 = scmp.ne.s32.totalorder %s56, %s57
    %p71 = scmp.eq.s32.totalorder %s23, 1
    %p72 = por %p70, %p71
    %p74 = scmp.ne.s32.totalorder %s57, %s73
    %p75 = scmp.eq.s32.totalorder %s23, 0
    %p76 = por %p74, %p75
    %s77 = ssub.s32 %s17, %s24
    %p78 = scmp.eq.s32.totalorder %s77, 0
    %s80 = sadd.s32 %s79, 1
    %s81 = scalar_select %p78, %s79, %s80
    %p84 = pneg %p78
    %p85 = scmp.eq.s32.totalorder %s17, 1
    %p86 = por %p84, %p85
    %p87 = scmp.ne.s32.totalorder %s79, %s82
    %p88 = scmp.eq.s32.totalorder %s17, 0
    %p89 = por %p87, %p88
    %p90 = scmp.ne.s32.totalorder %s79, %s82
    %p91 = scmp.eq.s32.totalorder %s22, 1
    %p92 = por %p90, %p91
    %p93 = scmp.ne.s32.totalorder %s82, %s83
    %p94 = scmp.eq.s32.totalorder %s22, 0
    %p95 = por %p93, %p94
    %p96 = scmp.ne.s32.totalorder %s82, %s83
    %p97 = scmp.eq.s32.totalorder %s23, 1
    %p98 = por %p96, %p97
    %p100 = scmp.ne.s32.totalorder %s83, %s99
    %p101 = scmp.eq.s32.totalorder %s23, 0
    %p102 = por %p100, %p101
    %s104 = sadd.s32 %s103, 1
    %p107 = scmp.eq.s32.totalorder %s17, 1
    %p108 = scmp.ne.s32.totalorder %s103, %s105
    %p109 = scmp.eq.s32.totalorder %s17, 0
    %p110 = por %p108, %p109
    %p111 = scmp.ne.s32.totalorder %s103, %s105
    %p112 = scmp.eq.s32.totalorder %s22, 1
    %p113 = por %p111, %p112
    %p114 = scmp.ne.s32.totalorder %s105, %s106
    %p115 = scmp.eq.s32.totalorder %s22, 0
    %p116 = por %p114, %p115
    %p117 = scmp.ne.s32.totalorder %s105, %s106
    %p118 = scmp.eq.s32.totalorder %s23, 1
    %p119 = por %p117, %p118
    %p121 = scmp.ne.s32.totalorder %s106, %s120
    %p122 = scmp.eq.s32.totalorder %s23, 0
    %p123 = por %p121, %p122
    %s125 = sadd.s32 %s124, 1
    %p128 = scmp.eq.s32.totalorder %s17, 1
    %p129 = scmp.ne.s32.totalorder %s124, %s126
    %p130 = scmp.eq.s32.totalorder %s17, 0
    %p131 = por %p129, %p130
    %p132 = scmp.ne.s32.totalorder %s124, %s126
    %p133 = scmp.eq.s32.totalorder %s22, 1
    %p134 = por %p132, %p133
    %p135 = scmp.ne.s32.totalorder %s126, %s127
    %p136 = scmp.eq.s32.totalorder %s22, 0
    %p137 = por %p135, %p136
    %p138 = scmp.ne.s32.totalorder %s126, %s127
    %p139 = scmp.eq.s32.totalorder %s23, 1
    %p140 = por %p138, %p139
    %p142 = scmp.ne.s32.totalorder %s127, %s141
    %p143 = scmp.eq.s32.totalorder %s23, 0
    %p144 = por %p142, %p143
    %s146 = sadd.s32 %s145, 1
    %p149 = scmp.eq.s32.totalorder %s17, 1
    %p150 = scmp.ne.s32.totalorder %s145, %s147
    %p151 = scmp.eq.s32.totalorder %s17, 0
    %p152 = por %p150, %p151
    %p153 = scmp.ne.s32.totalorder %s145, %s147
    %p154 = scmp.eq.s32.totalorder %s22, 1
    %p155 = por %p153, %p154
    %p156 = scmp.ne.s32.totalorder %s147, %s148
    %p157 = scmp.eq.s32.totalorder %s22, 0
    %p158 = por %p156, %p157
    %p159 = scmp.ne.s32.totalorder %s147, %s148
    %p160 = scmp.eq.s32.totalorder %s23, 1
    %p161 = por %p159, %p160
    %p163 = scmp.ne.s32.totalorder %s148, %s162
    %p164 = scmp.eq.s32.totalorder %s23, 0
    %p165 = por %p163, %p164
    %s167 = sadd.s32 %s166, 1
    %p170 = scmp.eq.s32.totalorder %s17, 1
    %p171 = scmp.ne.s32.totalorder %s166, %s168
    %p172 = scmp.eq.s32.totalorder %s17, 0
    %p173 = por %p171, %p172
    %p174 = scmp.ne.s32.totalorder %s166, %s168
    %p175 = scmp.eq.s32.totalorder %s22, 1
    %p176 = por %p174, %p175
    %p177 = scmp.ne.s32.totalorder %s168, %s169
    %p178 = scmp.eq.s32.totalorder %s22, 0
    %p179 = por %p177, %p178
    %p180 = scmp.ne.s32.totalorder %s168, %s169
    %p181 = scmp.eq.s32.totalorder %s23, 1
    %p182 = por %p180, %p181
    %p184 = scmp.ne.s32.totalorder %s169, %s183
    %p185 = scmp.eq.s32.totalorder %s23, 0
    %p186 = por %p184, %p185
    %s188 = sadd.s32 %s187, 1
    %p191 = scmp.eq.s32.totalorder %s17, 1
    %p192 = scmp.ne.s32.totalorder %s187, %s189
    %p193 = scmp.eq.s32.totalorder %s17, 0
    %p194 = por %p192, %p193
    %p195 = scmp.ne.s32.totalorder %s187, %s189
    %p196 = scmp.eq.s32.totalorder %s22, 1
    %p197 = por %p195, %p196
    %p198 = scmp.ne.s32.totalorder %s189, %s190
    %p199 = scmp.eq.s32.totalorder %s22, 0
    %p200 = por %p198, %p199
    %p201 = scmp.ne.s32.totalorder %s189, %s190
    %p202 = scmp.eq.s32.totalorder %s23, 1
    %p203 = por %p201, %p202
    %p205 = scmp.ne.s32.totalorder %s190, %s204
    %p206 = scmp.eq.s32.totalorder %s23, 0
    %p207 = por %p205, %p206
    %s209 = sadd.s32 %s208, 1
    %p212 = scmp.eq.s32.totalorder %s17, 1
    %p213 = scmp.ne.s32.totalorder %s208, %s210
    %p214 = scmp.eq.s32.totalorder %s17, 0
    %p215 = por %p213, %p214
    %p216 = scmp.ne.s32.totalorder %s208, %s210
    %p217 = scmp.eq.s32.totalorder %s22, 1
    %p218 = por %p216, %p217
    %p219 = scmp.ne.s32.totalorder %s210, %s211
    %p220 = scmp.eq.s32.totalorder %s22, 0
    %p221 = por %p219, %p220
    %p222 = scmp.ne.s32.totalorder %s210, %s211
    %p223 = scmp.eq.s32.totalorder %s23, 1
    %p224 = por %p222, %p223
    %p226 = scmp.ne.s32.totalorder %s211, %s225
    %p227 = scmp.eq.s32.totalorder %s23, 0
    %p228 = por %p226, %p227
    %s230 = sadd.s32 %s229, 1
    %p233 = scmp.eq.s32.totalorder %s17, 1
    %p234 = scmp.ne.s32.totalorder %s229, %s231
    %p235 = scmp.eq.s32.totalorder %s17, 0
    %p236 = por %p234, %p235
    %p237 = scmp.ne.s32.totalorder %s229, %s231
    %p238 = scmp.eq.s32.totalorder %s22, 1
    %p239 = por %p237, %p238
    %p240 = scmp.ne.s32.totalorder %s231, %s232
    %p241 = scmp.eq.s32.totalorder %s22, 0
    %p242 = por %p240, %p241
    %p243 = scmp.ne.s32.totalorder %s231, %s232
    %p244 = scmp.eq.s32.totalorder %s23, 1
    %p245 = por %p243, %p244
    %p247 = scmp.ne.s32.totalorder %s232, %s246
    %p248 = scmp.eq.s32.totalorder %s23, 0
    %p249 = por %p247, %p248
    %s251 = sadd.s32 %s250, 1
    %p254 = scmp.eq.s32.totalorder %s17, 1
    %p255 = scmp.ne.s32.totalorder %s250, %s252
    %p256 = scmp.eq.s32.totalorder %s17, 0
    %p257 = por %p255, %p256
    %p258 = scmp.ne.s32.totalorder %s250, %s252
    %p259 = scmp.eq.s32.totalorder %s22, 1
    %p260 = por %p258, %p259
    %p261 = scmp.ne.s32.totalorder %s252, %s253
    %p262 = scmp.eq.s32.totalorder %s22, 0
    %p263 = por %p261, %p262
    %p264 = scmp.ne.s32.totalorder %s252, %s253
    %p265 = scmp.eq.s32.totalorder %s23, 1
    %p266 = por %p264, %p265
    %p268 = scmp.ne.s32.totalorder %s253, %s267
    %p269 = scmp.eq.s32.totalorder %s23, 0
    %p270 = por %p268, %p269
    %s271 = ssub.s32 %s17, %s24
    %p272 = scmp.eq.s32.totalorder %s271, 0
    %s274 = sadd.s32 %s273, 1
    %s275 = scalar_select %p272, %s273, %s274
    %p278 = pneg %p272
    %p279 = scmp.eq.s32.totalorder %s17, 1
    %p280 = por %p278, %p279
    %p281 = scmp.ne.s32.totalorder %s273, %s276
    %p282 = scmp.eq.s32.totalorder %s17, 0
    %p283 = por %p281, %p282
    %p284 = scmp.ne.s32.totalorder %s273, %s276
    %p285 = scmp.eq.s32.totalorder %s22, 1
    %p286 = por %p284, %p285
    %p287 = scmp.ne.s32.totalorder %s276, %s277
    %p288 = scmp.eq.s32.totalorder %s22, 0
    %p289 = por %p287, %p288
    %p290 = scmp.ne.s32.totalorder %s276, %s277
    %p291 = scmp.eq.s32.totalorder %s23, 1
    %p292 = por %p290, %p291
    %p294 = scmp.ne.s32.totalorder %s277, %s293
    %p295 = scmp.eq.s32.totalorder %s23, 0
    %p296 = por %p294, %p295
    %p297 = scmp.le.s32.totalorder 1, %s17
    %p298 = scmp.lt.s32.totalorder %s17, 3
    %p299 = pnand %p297, %p298
    %p300 = pneg %p299
    // Predicated region
    $region9: #{transformer_forward.18} parent=5 // pred_check
      _
    $region10: #{transformer_forward.18} parent=5 // pred_check_branch
      %302 = sbr.rel (%p299) target = $region12
    $region11: #{transformer_forward.18} parent=5 // pred_region
      %s303 = ssub.s32 %s17, 1
      // Predicated region
      $region13: #{transformer_forward.18} parent=11 // pred_check
        %p304 = pneg %p116
      $region14: #{transformer_forward.18} parent=11 // pred_check_branch
        %306 = sbr.rel (%p304) target = $region16
      $region15: #{transformer_forward.18} parent=11 // pred_region
        _
      $region16: #{transformer_forward.18} parent=11 // pred_fallthru
        _
      // Predicated region
      $region17: #{transformer_forward.18} parent=11 // pred_check
        %p307 = pneg %p137
      $region18: #{transformer_forward.18} parent=11 // pred_check_branch
        %309 = sbr.rel (%p307) target = $region20
      $region19: #{transformer_forward.18} parent=11 // pred_region
        _
      $region20: #{transformer_forward.18} parent=11 // pred_fallthru
        _
      // Predicated region
      $region21: #{transformer_forward.18} parent=11 // pred_check
        %p310 = pneg %p158
      $region22: #{transformer_forward.18} parent=11 // pred_check_branch
        %312 = sbr.rel (%p310) target = $region24
      $region23: #{transformer_forward.18} parent=11 // pred_region
        _
      $region24: #{transformer_forward.18} parent=11 // pred_fallthru
        _
      // Predicated region
      $region25: #{transformer_forward.18} parent=11 // pred_check
        %p313 = pneg %p179
      $region26: #{transformer_forward.18} parent=11 // pred_check_branch
        %315 = sbr.rel (%p313) target = $region28
      $region27: #{transformer_forward.18} parent=11 // pred_region
        _
      $region28: #{transformer_forward.18} parent=11 // pred_fallthru
        _
      // Predicated region
      $region29: #{transformer_forward.18} parent=11 // pred_check
        %p316 = pneg %p200
      $region30: #{transformer_forward.18} parent=11 // pred_check_branch
        %318 = sbr.rel (%p316) target = $region32
      $region31: #{transformer_forward.18} parent=11 // pred_region
        _
      $region32: #{transformer_forward.18} parent=11 // pred_fallthru
        _
      // Predicated region
      $region33: #{transformer_forward.18} parent=11 // pred_check
        %p319 = pneg %p221
      $region34: #{transformer_forward.18} parent=11 // pred_check_branch
        %321 = sbr.rel (%p319) target = $region36
      $region35: #{transformer_forward.18} parent=11 // pred_region
        _
      $region36: #{transformer_forward.18} parent=11 // pred_fallthru
        _
      // Predicated region
      $region37: #{transformer_forward.18} parent=11 // pred_check
        %p322 = pneg %p242
      $region38: #{transformer_forward.18} parent=11 // pred_check_branch
        %324 = sbr.rel (%p322) target = $region40
      $region39: #{transformer_forward.18} parent=11 // pred_region
        _
      $region40: #{transformer_forward.18} parent=11 // pred_fallthru
        _
      // Predicated region
      $region41: #{transformer_forward.18} parent=11 // pred_check
        %p325 = pneg %p263
      $region42: #{transformer_forward.18} parent=11 // pred_check_branch
        %327 = sbr.rel (%p325) target = $region44
      $region43: #{transformer_forward.18} parent=11 // pred_region
        _
      $region44: #{transformer_forward.18} parent=11 // pred_fallthru
        _
    $region12: #{transformer_forward.18} parent=5 // pred_fallthru
      _
    %p328 = scmp.lt.s32.totalorder %s17, 2
    // Predicated region
    $region45: #{transformer_forward.18} parent=5 // pred_check
      %p329 = pneg %p328
    $region46: #{transformer_forward.18} parent=5 // pred_check_branch
      %331 = sbr.rel (%p329) target = $region48
    $region47: #{transformer_forward.18} parent=5 // pred_region
      // Predicated region
      $region49: #{transformer_forward.18} parent=47 // pred_check
        %p332 = pneg %p37
      $region50: #{transformer_forward.18} parent=47 // pred_check_branch
        %334 = sbr.rel (%p332) target = $region52
      $region51: #{transformer_forward.18} parent=47 // pred_region
        %p335 = scmp.lt.s32.totalorder %s17, 1
        %s336 = scalar_select %p335, %s17, 1
        %s337 = smul.addr %s336, 8
        %s338 = scalar_lea.vmem %s0, %s337
      $region52: #{transformer_forward.18} parent=47 // pred_fallthru
        _
      // Predicated region
      $region53: #{transformer_forward.18} parent=47 // pred_check
        %p339 = pneg %p63
      $region54: #{transformer_forward.18} parent=47 // pred_check_branch
        %341 = sbr.rel (%p339) target = $region56
      $region55: #{transformer_forward.18} parent=47 // pred_region
        %p342 = scmp.lt.s32.totalorder %s17, 1
        %s343 = scalar_select %p342, %s17, 1
        %s344 = smul.addr %s343, 8
        %s345 = scalar_lea.vmem %s1, %s344
      $region56: #{transformer_forward.18} parent=47 // pred_fallthru
        _
      // Predicated region
      $region57: #{transformer_forward.18} parent=47 // pred_check
        %p346 = pneg %p89
      $region58: #{transformer_forward.18} parent=47 // pred_check_branch
        %348 = sbr.rel (%p346) target = $region60
      $region59: #{transformer_forward.18} parent=47 // pred_region
        %p349 = scmp.lt.s32.totalorder %s17, 1
        %s350 = scalar_select %p349, %s17, 1
        %s351 = scalar_lea.vmem %s2, %s350
      $region60: #{transformer_forward.18} parent=47 // pred_fallthru
        _
    $region48: #{transformer_forward.18} parent=5 // pred_fallthru
      _
    %p352 = scmp.le.s32.totalorder 1, %s17
    %p353 = scmp.lt.s32.totalorder %s17, 3
    %p354 = pnand %p352, %p353
    %p355 = pneg %p354
    // Predicated region
    $region61: #{transformer_forward.18} parent=5 // pred_check
      _
    $region62: #{transformer_forward.18} parent=5 // pred_check_branch
      %357 = sbr.rel (%p354) target = $region64
    $region63: #{transformer_forward.18} parent=5 // pred_region
      %s358 = ssub.s32 %s17, 1
      %p359 = scmp.lt.s32.totalorder %s22, 1
      %s360 = scalar_select %p359, %s22, 1
      %s361 = smul.addr %s360, 8
      %s362 = scalar_lea.vmem %s0, %s361
      %p363 = pneg %p43
      %p364 = pneg %p40
      %p365 = scmp.lt.s32.totalorder %s22, 1
      %s366 = scalar_select %p365, %s22, 1
      %s367 = smul.addr %s366, 8
      %s368 = scalar_lea.vmem %s1, %s367
      %p369 = pneg %p69
      %p370 = pneg %p66
      %p371 = scmp.lt.s32.totalorder %s22, 1
      %s372 = scalar_select %p371, %s22, 1
      %s373 = scalar_lea.vmem %s2, %s372
      %p374 = pneg %p95
      %p375 = pneg %p92
      %p376 = pneg %p116
      %p377 = pneg %p113
      %p378 = pneg %p137
      %p379 = pneg %p134
      %p380 = pneg %p158
      %p381 = pneg %p155
      %p382 = pneg %p179
      %p383 = pneg %p176
      %p384 = pneg %p200
      %p385 = pneg %p197
      %p386 = pneg %p221
      %p387 = pneg %p218
      %p388 = pneg %p242
      %p389 = pneg %p239
      %p390 = pneg %p263
      %p391 = pneg %p260
      %p392 = pneg %p289
      %p393 = pneg %p286
      %p394 = scmp.lt.s32.totalorder %s22, 1
      %s395 = scalar_select %p394, %s22, 1
      %s396 = smul.addr %s395, 8
      %s397 = scalar_lea.vmem %s11, %s396
      %p398 = scmp.lt.s32.totalorder %s22, 1
      %s399 = scalar_select %p398, %s22, 1
      %s400 = smul.addr %s399, 8
      %s401 = scalar_lea.vmem %s0, %s400
      %p402 = scmp.lt.s32.totalorder %s22, 1
      %s403 = scalar_select %p402, %s22, 1
      %s404 = smul.addr %s403, 8
      %s405 = scalar_lea.vmem %s1, %s404
      %p406 = scmp.lt.s32.totalorder %s22, 1
      %s407 = scalar_select %p406, %s22, 1
      %s408 = scalar_lea.vmem %s2, %s407
      %p409 = scmp.lt.s32.totalorder %s22, 1
      %s410 = scalar_select %p409, %s22, 1
      %s411 = smul.addr %s410, 8
      %s412 = scalar_lea.vmem %s11, %s411
      %v414 = vld [vmem:[%s401] sm:$0xff]
      %v415 = vld [vmem:[%s3] sm:$0x1]
      %v416 = vld [vmem:[%s4] sm:$0x1]
      %vm417 = vcmask 261120
      %v418 = vsel %vm417, %v414, 0.0
      %419 = vadd.xlane.f32.xlu0 %v418
      %v420 = vpop.xlane.xlu0 %419
      %v421 = vrcp.pop 32.0
      %v422 = vmul.f32 %v420, %v421
      %v423 = vsub.f32 %v414, %v422
      %v424 = vmul.f32 %v423, %v423
      %v425 = vsel %vm417, %v424, 0.0
      %426 = vadd.xlane.f32.xlu0 %v425
      %v427 = vpop.xlane.xlu0 %426
      %v428 = vmul.f32 %v427, 0.032258064
      %v430 = vlaneseq
      %v431 = vshrl.u32 %v430, 7
      %v432 = vsub.s32 0, %v431
      %v433 = vrot.slane %v415, %v432
      %v435 = vmul.f32 %v433, %v423
      %v436 = vrsqrt.pop %v428
      %v437 = vmul.f32 %v428, %v436
      %vm438 = vcmp.eq.f32.partialorder %v428, inf
      %v439 = vsel %vm438, %v428, %v437
      %vm440 = vcmp.eq.f32.partialorder %v428, 0.0
      %v441 = vand.u32 %v428, 2147483648
      %v442 = vsel %vm440, %v441, %v439
      %v443 = vadd.f32 %v442, 1e-06
      %v444 = vrcp.pop %v443
      %v445 = vmul.f32 %v435, %v444
      %v447 = vlaneseq
      %v448 = vshrl.u32 %v447, 7
      %v449 = vsub.s32 0, %v448
      %v450 = vrot.slane %v416, %v449
      %v452 = vadd.f32 %v445, %v450
      %v453 = vpack.c.bf16 %v452, %v452
      %v454 = vld [vmem:[%s5] sm:$0xf]
      %v455 = vld [vmem:[%s5 + $0x4] sm:$0xf]
      %v456 = vld [vmem:[%s5 + $0x8] sm:$0xf]
      %v457 = vld [vmem:[%s5 + $0xc] sm:$0xf]
      %v458 = vld [vmem:[%s6] sm:$0x1]
      %v460 = vlaneseq
      %v461 = vshrl.u32 %v460, 7
      %v462 = vsub.s32 0, %v461
      %v463 = vrot.slane %v458, %v462
      %v469 = vunpack.c.l.b16 %v454
      %v470 = vunpack.c.l.b16 %v455
      %v471 = vunpack.c.l.b16 %v456
      %v472 = vunpack.c.l.b16 %v457
      %v473 = vpack.c.b16 %v470, %v469
      %v474 = vpack.c.b16 %v472, %v471
      %v478 = vsel %vm417, %v453, 0
      %480 = vmatprep.subr.bf16.mxu0 0
      %481 = vmatpush1.bf16.msra.mxu0 %v473
      %482 = vmatprep.subr.bf16.mxu0 0
      %483 = vmatpush1.bf16.msra.mxu0 %v474
      %484 = vmatprep.subr.bf16.mxu0 0
      %485 = vmatpush1.bf16.msra.mxu0 0
      %486 = vmatprep.subr.bf16.mxu0 0
      %487 = vmatpush1.bf16.msra.mxu0 0
      %488 = vmatprep.subr.bf16.mxu0 0
      %489 = vmatpush1.bf16.msra.mxu0 0
      %490 = vmatprep.subr.bf16.mxu0 0
      %491 = vmatpush1.bf16.msra.mxu0 0
      %492 = vmatprep.subr.bf16.mxu0 0
      %493 = vmatpush1.bf16.msra.mxu0 0
      %494 = vmatprep.subr.bf16.mxu0 0
      %495 = vmatpush1.bf16.msra.mxu0 0
      %496 = vmatprep.subr.bf16.mxu0 0
      %497 = vmatpush1.bf16.msra.mxu0 0
      %498 = vmatprep.subr.bf16.mxu0 0
      %499 = vmatpush1.bf16.msra.mxu0 0
      %500 = vmatprep.subr.bf16.mxu0 0
      %501 = vmatpush1.bf16.msra.mxu0 0
      %502 = vmatprep.subr.bf16.mxu0 0
      %503 = vmatpush1.bf16.msra.mxu0 0
      %504 = vmatprep.subr.bf16.mxu0 0
      %505 = vmatpush1.bf16.msra.mxu0 0
      %506 = vmatprep.subr.bf16.mxu0 0
      %507 = vmatpush1.bf16.msra.mxu0 0
      %508 = vmatprep.subr.bf16.mxu0 0
      %509 = vmatpush1.bf16.msra.mxu0 0
      %510 = vmatprep.subr.bf16.mxu0 0
      %511 = vmatpush1.bf16.msra.mxu0 0
      %512 = vmatprep.mubr.bf16.mxu0 0
      %513 = vmatmul.mubr.bf16.gmra.mrb[0].mxu0 %v478
      %v514 = vpop.f32.mrb[0].mxu0
      %v515 = vadd.f32 %v463, %v514
      %v516 = vpop.f32.mrb[0].mxu0
      %v517 = vpop.f32.mrb[0].mxu0
      %v518 = vpop.f32.mrb[0].mxu0
      %519 = vdwg.mxu0
      %v520 = vld [vmem:[%s405] sm:$0xff]
      %v521 = vpack.c.bf16 %v520, %v520
      %v522 = vld [vmem:[%s7] sm:$0xf]
      %v523 = vld [vmem:[%s7 + $0x4] sm:$0xf]
      %v524 = vld [vmem:[%s7 + $0x8] sm:$0xf]
      %v525 = vld [vmem:[%s7 + $0xc] sm:$0xf]
      %v526 = vld [vmem:[%s8] sm:$0x1]
      %v528 = vlaneseq
      %v529 = vshrl.u32 %v528, 7
      %v530 = vsub.s32 0, %v529
      %v531 = vrot.slane %v526, %v530
      %v537 = vunpack.c.l.b16 %v522
      %v538 = vunpack.c.l.b16 %v523
      %v539 = vunpack.c.l.b16 %v524
      %v540 = vunpack.c.l.b16 %v525
      %v541 = vpack.c.b16 %v538, %v537
      %v542 = vpack.c.b16 %v540, %v539
      %v546 = vsel %vm417, %v521, 0
      %548 = vmatprep.subr.bf16.mxu0 0
      %549 = vmatpush1.bf16.msra.mxu0 %v541
      %550 = vmatprep.subr.bf16.mxu0 0
      %551 = vmatpush1.bf16.msra.mxu0 %v542
      %552 = vmatprep.subr.bf16.mxu0 0
      %553 = vmatpush1.bf16.msra.mxu0 0
      %554 = vmatprep.subr.bf16.mxu0 0
      %555 = vmatpush1.bf16.msra.mxu0 0
      %556 = vmatprep.subr.bf16.mxu0 0
      %557 = vmatpush1.bf16.msra.mxu0 0
      %558 = vmatprep.subr.bf16.mxu0 0
      %559 = vmatpush1.bf16.msra.mxu0 0
      %560 = vmatprep.subr.bf16.mxu0 0
      %561 = vmatpush1.bf16.msra.mxu0 0
      %562 = vmatprep.subr.bf16.mxu0 0
      %563 = vmatpush1.bf16.msra.mxu0 0
      %564 = vmatprep.subr.bf16.mxu0 0
      %565 = vmatpush1.bf16.msra.mxu0 0
      %566 = vmatprep.subr.bf16.mxu0 0
      %567 = vmatpush1.bf16.msra.mxu0 0
      %568 = vmatprep.subr.bf16.mxu0 0
      %569 = vmatpush1.bf16.msra.mxu0 0
      %570 = vmatprep.subr.bf16.mxu0 0
      %571 = vmatpush1.bf16.msra.mxu0 0
      %572 = vmatprep.subr.bf16.mxu0 0
      %573 = vmatpush1.bf16.msra.mxu0 0
      %574 = vmatprep.subr.bf16.mxu0 0
      %575 = vmatpush1.bf16.msra.mxu0 0
      %576 = vmatprep.subr.bf16.mxu0 0
      %577 = vmatpush1.bf16.msra.mxu0 0
      %578 = vmatprep.subr.bf16.mxu0 0
      %579 = vmatpush1.bf16.msra.mxu0 0
      %580 = vmatprep.mubr.bf16.mxu0 0
      %581 = vmatmul.mubr.bf16.gmra.mrb[0].mxu0 %v546
      %v582 = vpop.f32.mrb[0].mxu0
      %v583 = vadd.f32 %v531, %v582
      %v584 = vpop.f32.mrb[0].mxu0
      %v585 = vpop.f32.mrb[0].mxu0
      %v586 = vpop.f32.mrb[0].mxu0
      %587 = vdwg.mxu0
      %v588 = vld [vmem:[%s408] sm:$0x1]
      %v589 = vmul.f32 %v515, 0.35355338
      %v590 = vpack.c.bf16 %v589, %v589
      %v591 = vpack.c.bf16 %v583, %v583
      %vm592 = vcmask 64512
      %v594 = vsel %vm592, %v590, 0
      %v597 = vsel %vm592, %v591, 0
      %599 = vmatprep.subr.bf16.mxu0 0
      %600 = vmatpush1.bf16.xpose.msra.mxu0 %v597
      %601 = vmatprep.subr.bf16.mxu0 0
      %602 = vmatpush1.bf16.xpose.msra.mxu0 0
      %603 = vmatprep.subr.bf16.mxu0 0
      %604 = vmatpush1.bf16.xpose.msra.mxu0 0
      %605 = vmatprep.subr.bf16.mxu0 0
      %606 = vmatpush1.bf16.xpose.msra.mxu0 0
      %607 = vmatprep.subr.bf16.mxu0 0
      %608 = vmatpush1.bf16.xpose.msra.mxu0 0
      %609 = vmatprep.subr.bf16.mxu0 0
      %610 = vmatpush1.bf16.xpose.msra.mxu0 0
      %611 = vmatprep.subr.bf16.mxu0 0
      %612 = vmatpush1.bf16.xpose.msra.mxu0 0
      %613 = vmatprep.subr.bf16.mxu0 0
      %614 = vmatpush1.bf16.xpose.msra.mxu0 0
      %615 = vmatprep.subr.bf16.mxu0 0
      %616 = vmatpush1.bf16.xpose.msra.mxu0 0
      %617 = vmatprep.subr.bf16.mxu0 0
      %618 = vmatpush1.bf16.xpose.msra.mxu0 0
      %619 = vmatprep.subr.bf16.mxu0 0
      %620 = vmatpush1.bf16.xpose.msra.mxu0 0
      %621 = vmatprep.subr.bf16.mxu0 0
      %622 = vmatpush1.bf16.xpose.msra.mxu0 0
      %623 = vmatprep.subr.bf16.mxu0 0
      %624 = vmatpush1.bf16.xpose.msra.mxu0 0
      %625 = vmatprep.subr.bf16.mxu0 0
      %626 = vmatpush1.bf16.xpose.msra.mxu0 0
      %627 = vmatprep.subr.bf16.mxu0 0
      %628 = vmatpush1.bf16.xpose.msra.mxu0 0
      %629 = vmatprep.subr.bf16.mxu0 0
      %630 = vmatpush1.bf16.xpose.msra.mxu0 0
      %631 = vmatprep.mubr.bf16.mxu0 0
      %632 = vmatmul.mubr.bf16.gmra.mrb[0].mxu0 %v594
      %v633 = vpop.f32.mrb[0].mxu0
      %v634 = vadd.f32 0.0, %v633
      %v635 = vpop.f32.mrb[0].mxu0
      %v636 = vpop.f32.mrb[0].mxu0
      %v637 = vpop.f32.mrb[0].mxu0
      %638 = vdwg.mxu0
      %vm639 = vcmp.eq.f32.partialorder %v588, 0.0
      %v640 = vsel %vm639, 1, 0
      %v641 = vlaneseq
      %v642 = vshrl.u32 %v641, 7
      %v643 = vsub.s32 0, %v642
      %v644 = vrot.slane %v640, %v643
      %vm645 = vcmp.eq.s32.totalorder %v644, 1
      %v646 = vsel %vm645, -1e+30, %v634
      %v647 = vsel %vm592, %v646, -inf
      %648 = vmax.xlane.f32.xlu0 %v647
      %v649 = vpop.xlane.xlu0 %648
      %v650 = vsub.f32 %v646, %v649
      %v651 = vmul.f32 %v650, 1.442695
      %v652 = vpow.pop %v651
      %v653 = vsel %vm592, %v652, 0.0
      %654 = vadd.xlane.f32.xlu0 %v653
      %v655 = vpop.xlane.xlu0 %654
      %v656 = vrcp.pop %v655
      %v657 = vmul.f32 %v652, %v656
      %v658 = vpack.c.bf16 %v657, %v657
      %660 = vrot.lane.b32.xlu0 %v591, 96
      %v661 = vpop.permute.xlu0 %660
      %v663 = vsel %vm592, %v658, 0
      %vm665 = vcmask 1043456
      %v667 = vsel %vm665, %v661, 0
      %669 = vmatprep.subr.bf16.mxu0 0
      %670 = vmatpush1.bf16.msra.mxu0 %v667
      %671 = vmatprep.subr.bf16.mxu0 0
      %672 = vmatpush1.bf16.msra.mxu0 0
      %673 = vmatprep.subr.bf16.mxu0 0
      %674 = vmatpush1.bf16.msra.mxu0 0
      %675 = vmatprep.subr.bf16.mxu0 0
      %676 = vmatpush1.bf16.msra.mxu0 0
      %677 = vmatprep.subr.bf16.mxu0 0
      %678 = vmatpush1.bf16.msra.mxu0 0
      %679 = vmatprep.subr.bf16.mxu0 0
      %680 = vmatpush1.bf16.msra.mxu0 0
      %681 = vmatprep.subr.bf16.mxu0 0
      %682 = vmatpush1.bf16.msra.mxu0 0
      %683 = vmatprep.subr.bf16.mxu0 0
      %684 = vmatpush1.bf16.msra.mxu0 0
      %685 = vmatprep.subr.bf16.mxu0 0
      %686 = vmatpush1.bf16.msra.mxu0 0
      %687 = vmatprep.subr.bf16.mxu0 0
      %688 = vmatpush1.bf16.msra.mxu0 0
      %689 = vmatprep.subr.bf16.mxu0 0
      %690 = vmatpush1.bf16.msra.mxu0 0
      %691 = vmatprep.subr.bf16.mxu0 0
      %692 = vmatpush1.bf16.msra.mxu0 0
      %693 = vmatprep.subr.bf16.mxu0 0
      %694 = vmatpush1.bf16.msra.mxu0 0
      %695 = vmatprep.subr.bf16.mxu0 0
      %696 = vmatpush1.bf16.msra.mxu0 0
      %697 = vmatprep.subr.bf16.mxu0 0
      %698 = vmatpush1.bf16.msra.mxu0 0
      %699 = vmatprep.subr.bf16.mxu0 0
      %700 = vmatpush1.bf16.msra.mxu0 0
      %701 = vmatprep.mubr.bf16.mxu0 0
      %702 = vmatmul.mubr.bf16.gmra.mrb[0].mxu0 %v663
      %v703 = vpop.f32.mrb[0].mxu0
      %v704 = vadd.f32 0.0, %v703
      %v705 = vpop.f32.mrb[0].mxu0
      %v706 = vpop.f32.mrb[0].mxu0
      %v707 = vpop.f32.mrb[0].mxu0
      %708 = vdwg.mxu0
      %710 = vrot.lane.b32.xlu0 %v590, 120
      %v711 = vpop.permute.xlu0 %710
      %712 = vrot.lane.b32.xlu0 %v591, 120
      %v713 = vpop.permute.xlu0 %712
      %v715 = vsel %vm592, %v711, 0
      %v718 = vsel %vm592, %v713, 0
      %720 = vmatprep.subr.bf16.mxu0 0
      %721 = vmatpush1.bf16.xpose.msra.mxu0 %v718
      %722 = vmatprep.subr.bf16.mxu0 0
      %723 = vmatpush1.bf16.xpose.msra.mxu0 0
      %724 = vmatprep.subr.bf16.mxu0 0
      %725 = vmatpush1.bf16.xpose.msra.mxu0 0
      %726 = vmatprep.subr.bf16.mxu0 0
      %727 = vmatpush1.bf16.xpose.msra.mxu0 0
      %728 = vmatprep.subr.bf16.mxu0 0
      %729 = vmatpush1.bf16.xpose.msra.mxu0 0
      %730 = vmatprep.subr.bf16.mxu0 0
      %731 = vmatpush1.bf16.xpose.msra.mxu0 0
      %732 = vmatprep.subr.bf16.mxu0 0
      %733 = vmatpush1.bf16.xpose.msra.mxu0 0
      %734 = vmatprep.subr.bf16.mxu0 0
      %735 = vmatpush1.bf16.xpose.msra.mxu0 0
      %736 = vmatprep.subr.bf16.mxu0 0
      %737 = vmatpush1.bf16.xpose.msra.mxu0 0
      %738 = vmatprep.subr.bf16.mxu0 0
      %739 = vmatpush1.bf16.xpose.msra.mxu0 0
      %740 = vmatprep.subr.bf16.mxu0 0
      %741 = vmatpush1.bf16.xpose.msra.mxu0 0
      %742 = vmatprep.subr.bf16.mxu0 0
      %743 = vmatpush1.bf16.xpose.msra.mxu0 0
      %744 = vmatprep.subr.bf16.mxu0 0
      %745 = vmatpush1.bf16.xpose.msra.mxu0 0
      %746 = vmatprep.subr.bf16.mxu0 0
      %747 = vmatpush1.bf16.xpose.msra.mxu0 0
      %748 = vmatprep.subr.bf16.mxu0 0
      %749 = vmatpush1.bf16.xpose.msra.mxu0 0
      %750 = vmatprep.subr.bf16.mxu0 0
      %751 = vmatpush1.bf16.xpose.msra.mxu0 0
      %752 = vmatprep.mubr.bf16.mxu0 0
      %753 = vmatmul.mubr.bf16.gmra.mrb[0].mxu0 %v715
      %v754 = vpop.f32.mrb[0].mxu0
      %v755 = vadd.f32 0.0, %v754
      %v756 = vpop.f32.mrb[0].mxu0
      %v757 = vpop.f32.mrb[0].mxu0
      %v758 = vpop.f32.mrb[0].mxu0
      %759 = vdwg.mxu0
      %v760 = vsel %vm645, -1e+30, %v755
      %v761 = vsel %vm592, %v760, -inf
      %762 = vmax.xlane.f32.xlu0 %v761
      %v763 = vpop.xlane.xlu0 %762
      %v764 = vsub.f32 %v760, %v763
      %v765 = vmul.f32 %v764, 1.442695
      %v766 = vpow.pop %v765
      %v767 = vsel %vm592, %v766, 0.0
      %768 = vadd.xlane.f32.xlu0 %v767
      %v769 = vpop.xlane.xlu0 %768
      %v770 = vrcp.pop %v769
      %v771 = vmul.f32 %v766, %v770
      %v772 = vpack.c.bf16 %v771, %v771
      %773 = vrot.lane.b32.xlu0 %v591, 88
      %v774 = vpop.permute.xlu0 %773
      %v776 = vsel %vm592, %v772, 0
      %v779 = vsel %vm665, %v774, 0
      %781 = vmatprep.subr.bf16.mxu0 0
      %782 = vmatpush1.bf16.msra.mxu0 %v779
      %783 = vmatprep.subr.bf16.mxu0 0
      %784 = vmatpush1.bf16.msra.mxu0 0
      %785 = vmatprep.subr.bf16.mxu0 0
      %786 = vmatpush1.bf16.msra.mxu0 0
      %787 = vmatprep.subr.bf16.mxu0 0
      %788 = vmatpush1.bf16.msra.mxu0 0
      %789 = vmatprep.subr.bf16.mxu0 0
      %790 = vmatpush1.bf16.msra.mxu0 0
      %791 = vmatprep.subr.bf16.mxu0 0
      %792 = vmatpush1.bf16.msra.mxu0 0
      %793 = vmatprep.subr.bf16.mxu0 0
      %794 = vmatpush1.bf16.msra.mxu0 0
      %795 = vmatprep.subr.bf16.mxu0 0
      %796 = vmatpush1.bf16.msra.mxu0 0
      %797 = vmatprep.subr.bf16.mxu0 0
      %798 = vmatpush1.bf16.msra.mxu0 0
      %799 = vmatprep.subr.bf16.mxu0 0
      %800 = vmatpush1.bf16.msra.mxu0 0
      %801 = vmatprep.subr.bf16.mxu0 0
      %802 = vmatpush1.bf16.msra.mxu0 0
      %803 = vmatprep.subr.bf16.mxu0 0
      %804 = vmatpush1.bf16.msra.mxu0 0
      %805 = vmatprep.subr.bf16.mxu0 0
      %806 = vmatpush1.bf16.msra.mxu0 0
      %807 = vmatprep.subr.bf16.mxu0 0
      %808 = vmatpush1.bf16.msra.mxu0 0
      %809 = vmatprep.subr.bf16.mxu0 0
      %810 = vmatpush1.bf16.msra.mxu0 0
      %811 = vmatprep.subr.bf16.mxu0 0
      %812 = vmatpush1.bf16.msra.mxu0 0
      %813 = vmatprep.mubr.bf16.mxu0 0
      %814 = vmatmul.mubr.bf16.gmra.mrb[0].mxu0 %v776
      %v815 = vpop.f32.mrb[0].mxu0
      %v816 = vadd.f32 0.0, %v815
      %v817 = vpop.f32.mrb[0].mxu0
      %v818 = vpop.f32.mrb[0].mxu0
      %v819 = vpop.f32.mrb[0].mxu0
      %820 = vdwg.mxu0
      %821 = vrot.lane.b32.xlu0 %v590, 112
      %v822 = vpop.permute.xlu0 %821
      %823 = vrot.lane.b32.xlu0 %v591, 112
      %v824 = vpop.permute.xlu0 %823
      %v826 = vsel %vm592, %v822, 0
      %v829 = vsel %vm592, %v824, 0
      %831 = vmatprep.subr.bf16.mxu0 0
      %832 = vmatpush1.bf16.xpose.msra.mxu0 %v829
      %833 = vmatprep.subr.bf16.mxu0 0
      %834 = vmatpush1.bf16.xpose.msra.mxu0 0
      %835 = vmatprep.subr.bf16.mxu0 0
      %836 = vmatpush1.bf16.xpose.msra.mxu0 0
      %837 = vmatprep.subr.bf16.mxu0 0
      %838 = vmatpush1.bf16.xpose.msra.mxu0 0
      %839 = vmatprep.subr.bf16.mxu0 0
      %840 = vmatpush1.bf16.xpose.msra.mxu0 0
      %841 = vmatprep.subr.bf16.mxu0 0
      %842 = vmatpush1.bf16.xpose.msra.mxu0 0
      %843 = vmatprep.subr.bf16.mxu0 0
      %844 = vmatpush1.bf16.xpose.msra.mxu0 0
      %845 = vmatprep.subr.bf16.mxu0 0
      %846 = vmatpush1.bf16.xpose.msra.mxu0 0
      %847 = vmatprep.subr.bf16.mxu0 0
      %848 = vmatpush1.bf16.xpose.msra.mxu0 0
      %849 = vmatprep.subr.bf16.mxu0 0
      %850 = vmatpush1.bf16.xpose.msra.mxu0 0
      %851 = vmatprep.subr.bf16.mxu0 0
      %852 = vmatpush1.bf16.xpose.msra.mxu0 0
      %853 = vmatprep.subr.bf16.mxu0 0
      %854 = vmatpush1.bf16.xpose.msra.mxu0 0
      %855 = vmatprep.subr.bf16.mxu0 0
      %856 = vmatpush1.bf16.xpose.msra.mxu0 0
      %857 = vmatprep.subr.bf16.mxu0 0
      %858 = vmatpush1.bf16.xpose.msra.mxu0 0
      %859 = vmatprep.subr.bf16.mxu0 0
      %860 = vmatpush1.bf16.xpose.msra.mxu0 0
      %861 = vmatprep.subr.bf16.mxu0 0
      %862 = vmatpush1.bf16.xpose.msra.mxu0 0
      %863 = vmatprep.mubr.bf16.mxu0 0
      %864 = vmatmul.mubr.bf16.gmra.mrb[0].mxu0 %v826
      %v865 = vpop.f32.mrb[0].mxu0
      %v866 = vadd.f32 0.0, %v865
      %v867 = vpop.f32.mrb[0].mxu0
      %v868 = vpop.f32.mrb[0].mxu0
      %v869 = vpop.f32.mrb[0].mxu0
      %870 = vdwg.mxu0
      %v871 = vsel %vm645, -1e+30, %v866
      %v872 = vsel %vm592, %v871, -inf
      %873 = vmax.xlane.f32.xlu0 %v872
      %v874 = vpop.xlane.xlu0 %873
      %v875 = vsub.f32 %v871, %v874
      %v876 = vmul.f32 %v875, 1.442695
      %v877 = vpow.pop %v876
      %v878 = vsel %vm592, %v877, 0.0
      %879 = vadd.xlane.f32.xlu0 %v878
      %v880 = vpop.xlane.xlu0 %879
      %v881 = vrcp.pop %v880
      %v882 = vmul.f32 %v877, %v881
      %v883 = vpack.c.bf16 %v882, %v882
      %884 = vrot.lane.b32.xlu0 %v591, 80
      %v885 = vpop.permute.xlu0 %884
      %v887 = vsel %vm592, %v883, 0
      %v890 = vsel %vm665, %v885, 0
      %892 = vmatprep.subr.bf16.mxu0 0
      %893 = vmatpush1.bf16.msra.mxu0 %v890
      %894 = vmatprep.subr.bf16.mxu0 0
      %895 = vmatpush1.bf16.msra.mxu0 0
      %896 = vmatprep.subr.bf16.mxu0 0
      %897 = vmatpush1.bf16.msra.mxu0 0
      %898 = vmatprep.subr.bf16.mxu0 0
      %899 = vmatpush1.bf16.msra.mxu0 0
      %900 = vmatprep.subr.bf16.mxu0 0
      %901 = vmatpush1.bf16.msra.mxu0 0
      %902 = vmatprep.subr.bf16.mxu0 0
      %903 = vmatpush1.bf16.msra.mxu0 0
      %904 = vmatprep.subr.bf16.mxu0 0
      %905 = vmatpush1.bf16.msra.mxu0 0
      %906 = vmatprep.subr.bf16.mxu0 0
      %907 = vmatpush1.bf16.msra.mxu0 0
      %908 = vmatprep.subr.bf16.mxu0 0
      %909 = vmatpush1.bf16.msra.mxu0 0
      %910 = vmatprep.subr.bf16.mxu0 0
      %911 = vmatpush1.bf16.msra.mxu0 0
      %912 = vmatprep.subr.bf16.mxu0 0
      %913 = vmatpush1.bf16.msra.mxu0 0
      %914 = vmatprep.subr.bf16.mxu0 0
      %915 = vmatpush1.bf16.msra.mxu0 0
      %916 = vmatprep.subr.bf16.mxu0 0
      %917 = vmatpush1.bf16.msra.mxu0 0
      %918 = vmatprep.subr.bf16.mxu0 0
      %919 = vmatpush1.bf16.msra.mxu0 0
      %920 = vmatprep.subr.bf16.mxu0 0
      %921 = vmatpush1.bf16.msra.mxu0 0
      %922 = vmatprep.subr.bf16.mxu0 0
      %923 = vmatpush1.bf16.msra.mxu0 0
      %924 = vmatprep.mubr.bf16.mxu0 0
      %925 = vmatmul.mubr.bf16.gmra.mrb[0].mxu0 %v887
      %v926 = vpop.f32.mrb[0].mxu0
      %v927 = vadd.f32 0.0, %v926
      %v928 = vpop.f32.mrb[0].mxu0
      %v929 = vpop.f32.mrb[0].mxu0
      %v930 = vpop.f32.mrb[0].mxu0
      %931 = vdwg.mxu0
      %932 = vrot.lane.b32.xlu0 %v590, 104
      %v933 = vpop.permute.xlu0 %932
      %934 = vrot.lane.b32.xlu0 %v591, 104
      %v935 = vpop.permute.xlu0 %934
      %v937 = vsel %vm592, %v933, 0
      %v940 = vsel %vm592, %v935, 0
      %942 = vmatprep.subr.bf16.mxu0 0
      %943 = vmatpush1.bf16.xpose.msra.mxu0 %v940
      %944 = vmatprep.subr.bf16.mxu0 0
      %945 = vmatpush1.bf16.xpose.msra.mxu0 0
      %946 = vmatprep.subr.bf16.mxu0 0
      %947 = vmatpush1.bf16.xpose.msra.mxu0 0
      %948 = vmatprep.subr.bf16.mxu0 0
      %949 = vmatpush1.bf16.xpose.msra.mxu0 0
      %950 = vmatprep.subr.bf16.mxu0 0
      %951 = vmatpush1.bf16.xpose.msra.mxu0 0
      %952 = vmatprep.subr.bf16.mxu0 0
      %953 = vmatpush1.bf16.xpose.msra.mxu0 0
      %954 = vmatprep.subr.bf16.mxu0 0
      %955 = vmatpush1.bf16.xpose.msra.mxu0 0
      %956 = vmatprep.subr.bf16.mxu0 0
      %957 = vmatpush1.bf16.xpose.msra.mxu0 0
      %958 = vmatprep.subr.bf16.mxu0 0
      %959 = vmatpush1.bf16.xpose.msra.mxu0 0
      %960 = vmatprep.subr.bf16.mxu0 0
      %961 = vmatpush1.bf16.xpose.msra.mxu0 0
      %962 = vmatprep.subr.bf16.mxu0 0
      %963 = vmatpush1.bf16.xpose.msra.mxu0 0
      %964 = vmatprep.subr.bf16.mxu0 0
      %965 = vmatpush1.bf16.xpose.msra.mxu0 0
      %966 = vmatprep.subr.bf16.mxu0 0
      %967 = vmatpush1.bf16.xpose.msra.mxu0 0
      %968 = vmatprep.subr.bf16.mxu0 0
      %969 = vmatpush1.bf16.xpose.msra.mxu0 0
      %970 = vmatprep.subr.bf16.mxu0 0
      %971 = vmatpush1.bf16.xpose.msra.mxu0 0
      %972 = vmatprep.subr.bf16.mxu0 0
      %973 = vmatpush1.bf16.xpose.msra.mxu0 0
      %974 = vmatprep.mubr.bf16.mxu0 0
      %975 = vmatmul.mubr.bf16.gmra.mrb[0].mxu0 %v937
      %v976 = vpop.f32.mrb[0].mxu0
      %v977 = vadd.f32 0.0, %v976
      %v978 = vpop.f32.mrb[0].mxu0
      %v979 = vpop.f32.mrb[0].mxu0
      %v980 = vpop.f32.mrb[0].mxu0
      %981 = vdwg.mxu0
      %v982 = vsel %vm645, -1e+30, %v977
      %v983 = vsel %vm592, %v982, -inf
      %984 = vmax.xlane.f32.xlu0 %v983
      %v985 = vpop.xlane.xlu0 %984
      %v986 = vsub.f32 %v982, %v985
      %v987 = vmul.f32 %v986, 1.442695
      %v988 = vpow.pop %v987
      %v989 = vsel %vm592, %v988, 0.0
      %990 = vadd.xlane.f32.xlu0 %v989
      %v991 = vpop.xlane.xlu0 %990
      %v992 = vrcp.pop %v991
      %v993 = vmul.f32 %v988, %v992
      %v994 = vpack.c.bf16 %v993, %v993
      %995 = vrot.lane.b32.xlu0 %v591, 72
      %v996 = vpop.permute.xlu0 %995
      %v998 = vsel %vm592, %v994, 0
      %v1001 = vsel %vm665, %v996, 0
      %1003 = vmatprep.subr.bf16.mxu0 0
      %1004 = vmatpush1.bf16.msra.mxu0 %v1001
      %1005 = vmatprep.subr.bf16.mxu0 0
      %1006 = vmatpush1.bf16.msra.mxu0 0
      %1007 = vmatprep.subr.bf16.mxu0 0
      %1008 = vmatpush1.bf16.msra.mxu0 0
      %1009 = vmatprep.subr.bf16.mxu0 0
      %1010 = vmatpush1.bf16.msra.mxu0 0
      %1011 = vmatprep.subr.bf16.mxu0 0
      %1012 = vmatpush1.bf16.msra.mxu0 0
      %1013 = vmatprep.subr.bf16.mxu0 0
      %1014 = vmatpush1.bf16.msra.mxu0 0
      %1015 = vmatprep.subr.bf16.mxu0 0
      %1016 = vmatpush1.bf16.msra.mxu0 0
      %1017 = vmatprep.subr.bf16.mxu0 0
      %1018 = vmatpush1.bf16.msra.mxu0 0
      %1019 = vmatprep.subr.bf16.mxu0 0
      %1020 = vmatpush1.bf16.msra.mxu0 0
      %1021 = vmatprep.subr.bf16.mxu0 0
      %1022 = vmatpush1.bf16.msra.mxu0 0
      %1023 = vmatprep.subr.bf16.mxu0 0
      %1024 = vmatpush1.bf16.msra.mxu0 0
      %1025 = vmatprep.subr.bf16.mxu0 0
      %1026 = vmatpush1.bf16.msra.mxu0 0
      %1027 = vmatprep.subr.bf16.mxu0 0
      %1028 = vmatpush1.bf16.msra.mxu0 0
      %1029 = vmatprep.subr.bf16.mxu0 0
      %1030 = vmatpush1.bf16.msra.mxu0 0
      %1031 = vmatprep.subr.bf16.mxu0 0
      %1032 = vmatpush1.bf16.msra.mxu0 0
      %1033 = vmatprep.subr.bf16.mxu0 0
      %1034 = vmatpush1.bf16.msra.mxu0 0
      %1035 = vmatprep.mubr.bf16.mxu0 0
      %1036 = vmatmul.mubr.bf16.gmra.mrb[0].mxu0 %v998
      %v1037 = vpop.f32.mrb[0].mxu0
      %v1038 = vadd.f32 0.0, %v1037
      %v1039 = vpop.f32.mrb[0].mxu0
      %v1040 = vpop.f32.mrb[0].mxu0
      %v1041 = vpop.f32.mrb[0].mxu0
      %1042 = vdwg.mxu0
      %1044 = vrot.lane.b32.xlu0 %v816, 8
      %v1045 = vpop.permute.xlu0 %1044
      %1048 = vrot.lane.b32.xlu0 %v927, 16
      %v1049 = vpop.permute.xlu0 %1048
      %1052 = vrot.lane.b32.xlu0 %v1038, 24
      %v1053 = vpop.permute.xlu0 %1052
      %v1055 = vsel %vm592, %v704, %v1045
      %vm1056 = vcmask 130048
      %v1057 = vsel %vm1056, %v1055, %v1049
      %vm1058 = vcmask 195584
      %v1059 = vsel %vm1058, %v1057, %v1053
      %v1060 = vpack.c.bf16 %v1059, %v1059
      %v1061 = vld [vmem:[%s9] sm:$0xf]
      %v1062 = vld [vmem:[%s9 + $0x4] sm:$0xf]
      %v1063 = vld [vmem:[%s9 + $0x8] sm:$0xf]
      %v1064 = vld [vmem:[%s9 + $0xc] sm:$0xf]
      %v1065 = vld [vmem:[%s10] sm:$0x1]
      %v1067 = vlaneseq
      %v1068 = vshrl.u32 %v1067, 7
      %v1069 = vsub.s32 0, %v1068
      %v1070 = vrot.slane %v1065, %v1069
      %v1076 = vunpack.c.l.b16 %v1061
      %v1077 = vunpack.c.l.b16 %v1062
      %v1078 = vunpack.c.l.b16 %v1063
      %v1079 = vunpack.c.l.b16 %v1064
      %v1080 = vpack.c.b16 %v1077, %v1076
      %v1081 = vpack.c.b16 %v1079, %v1078
      %v1085 = vsel %vm417, %v1060, 0
      %1087 = vmatprep.subr.bf16.mxu0 0
      %1088 = vmatpush1.bf16.msra.mxu0 %v1080
      %1089 = vmatprep.subr.bf16.mxu0 0
      %1090 = vmatpush1.bf16.msra.mxu0 %v1081
      %1091 = vmatprep.subr.bf16.mxu0 0
      %1092 = vmatpush1.bf16.msra.mxu0 0
      %1093 = vmatprep.subr.bf16.mxu0 0
      %1094 = vmatpush1.bf16.msra.mxu0 0
      %1095 = vmatprep.subr.bf16.mxu0 0
      %1096 = vmatpush1.bf16.msra.mxu0 0
      %1097 = vmatprep.subr.bf16.mxu0 0
      %1098 = vmatpush1.bf16.msra.mxu0 0
      %1099 = vmatprep.subr.bf16.mxu0 0
      %1100 = vmatpush1.bf16.msra.mxu0 0
      %1101 = vmatprep.subr.bf16.mxu0 0
      %1102 = vmatpush1.bf16.msra.mxu0 0
      %1103 = vmatprep.subr.bf16.mxu0 0
      %1104 = vmatpush1.bf16.msra.mxu0 0
      %1105 = vmatprep.subr.bf16.mxu0 0
      %1106 = vmatpush1.bf16.msra.mxu0 0
      %1107 = vmatprep.subr.bf16.mxu0 0
      %1108 = vmatpush1.bf16.msra.mxu0 0
      %1109 = vmatprep.subr.bf16.mxu0 0
      %1110 = vmatpush1.bf16.msra.mxu0 0
      %1111 = vmatprep.subr.bf16.mxu0 0
      %1112 = vmatpush1.bf16.msra.mxu0 0
      %1113 = vmatprep.subr.bf16.mxu0 0
      %1114 = vmatpush1.bf16.msra.mxu0 0
      %1115 = vmatprep.subr.bf16.mxu0 0
      %1116 = vmatpush1.bf16.msra.mxu0 0
      %1117 = vmatprep.subr.bf16.mxu0 0
      %1118 = vmatpush1.bf16.msra.mxu0 0
      %1119 = vmatprep.mubr.bf16.mxu0 0
      %1120 = vmatmul.mubr.bf16.gmra.mrb[0].mxu0 %v1085
      %v1121 = vpop.f32.mrb[0].mxu0
      %v1122 = vadd.f32 %v1070, %v1121
      %v1123 = vpop.f32.mrb[0].mxu0
      %v1124 = vpop.f32.mrb[0].mxu0
      %v1125 = vpop.f32.mrb[0].mxu0
      %1126 = vdwg.mxu0
      %v1127 = vadd.f32 %v414, %v1122
      %1128 = vst.msk [vmem:[%s412] sm:$0xff] %vm417, %v1127
      %p1129 = scmp.lt.s32.totalorder %s22, 1
      %s1130 = scalar_select %p1129, %s22, 1
      %s1131 = smul.addr %s1130, 8
      %s1132 = scalar_lea.vmem %s11, %s1131
      // Predicated region
      $region65: #{transformer_forward.18} parent=63 // pred_check
        %p1133 = pneg %p286
      $region66: #{transformer_forward.18} parent=63 // pred_check_branch
        %1135 = sbr.rel (%p1133) target = $region68
      $region67: #{transformer_forward.18} parent=63 // pred_region
        _
      $region68: #{transformer_forward.18} parent=63 // pred_fallthru
        _
    $region64: #{transformer_forward.18} parent=5 // pred_fallthru
      _
    %p1136 = scmp.le.s32.totalorder 2, %s17
    // Predicated region
    $region69: #{transformer_forward.18} parent=5 // pred_check
      %p1137 = pneg %p1136
    $region70: #{transformer_forward.18} parent=5 // pred_check_branch
      %1139 = sbr.rel (%p1137) target = $region72
    $region71: #{transformer_forward.18} parent=5 // pred_region
      %s1140 = ssub.s32 %s17, 2
      // Predicated region
      $region73: #{transformer_forward.18} parent=71 // pred_check
        %p1141 = pneg %p292
      $region74: #{transformer_forward.18} parent=71 // pred_check_branch
        %1143 = sbr.rel (%p1141) target = $region76
      $region75: #{transformer_forward.18} parent=71 // pred_region
        %p1144 = scmp.lt.s32.totalorder %s23, 1
        %s1145 = scalar_select %p1144, %s23, 1
        %s1146 = smul.addr %s1145, 8
        %s1147 = scalar_lea.vmem %s11, %s1146
      $region76: #{transformer_forward.18} parent=71 // pred_fallthru
        _
    $region72: #{transformer_forward.18} parent=5 // pred_fallthru
      _
  $region6: #{transformer_forward.18} parent=0 // loop_footer
    %s21 = sadd.s32 1, %s17
  $region7: #{transformer_forward.18} parent=0 // loop_footer_branch
    %16 = sbr.rel target = $region3
  $region8: #{transformer_forward.18} parent=0 // loop_exit
    _

</llo_original>
